<compile_context>
chip_gen: v5e
topology: v5e:2x2
jax: 0.10.0
libtpu: 0.0.40
codegen_flags: <defaults>
</compile_context>

<pallas_src>
import functools
import math

import jax
import jax.numpy as jnp
import numpy as np
from jax.experimental import pallas as pl
from jax.experimental.pallas import tpu as pltpu


# ----------------------- fused per-image kernel --------------------------
#
# Activation layout inside the kernel: 2-D slabs (H, W*C), channel fastest on
# the lane axis.  Conv = sum over 3 kernel rows of  rows[ki:ki+Ho, :] @ M[ki],
# where M[ki] is a banded (W*Cin, Wo*Cout) matrix built from the conv weights.
# 2x2 max-pool = max of two 0/1 row-selection matmuls (vertical) followed by
# max of two 0/1 column-selection matmuls (horizontal).

def _fused_cnn_kernel(x_ref, m1_ref, b1_ref, e1_ref, p1_ref,
                      m2_ref, b2_ref, e2_ref, p2_ref,
                      m3_ref, b3_ref, wf1_ref, bf1_ref, wf2_ref, bf2_ref,
                      out_ref, *, compute_dtype):
    cd = compute_dtype

    def mm(a, b):
        # MXU matmul; inputs in compute_dtype, accumulation always f32.
        return jnp.dot(a.astype(cd), b.astype(cd),
                       preferred_element_type=jnp.float32)

    x = x_ref[0]                                           # (28, 28)

    # conv1 (1->8, 3x3) + bias + ReLU
    a1 = mm(x[0:26, :], m1_ref[0])
    a1 = a1 + mm(x[1:27, :], m1_ref[1])
    a1 = a1 + mm(x[2:28, :], m1_ref[2])
    a1 = jnp.maximum(a1 + b1_ref[...], 0.0)                # (26, 208) = (26, 26*8)

    # maxpool1 2x2: vertical (row-select matmuls) then horizontal (col-select)
    v1 = jnp.maximum(mm(e1_ref[0], a1), mm(e1_ref[1], a1))   # (13, 208)
    q1 = jnp.maximum(mm(v1, p1_ref[0]), mm(v1, p1_ref[1]))   # (13, 104) = (13, 13*8)

    # conv2 (8->32, 3x3) + bias  (module applies pool BEFORE ReLU here)
    a2 = mm(q1[0:11, :], m2_ref[0])
    a2 = a2 + mm(q1[1:12, :], m2_ref[1])
    a2 = a2 + mm(q1[2:13, :], m2_ref[2])
    a2 = a2 + b2_ref[...]                                    # (11, 352) = (11, 11*32)

    # maxpool2 2x2 (floor 11 -> 5) then ReLU
    v2 = jnp.maximum(mm(e2_ref[0], a2), mm(e2_ref[1], a2))   # (5, 352)
    q2 = jnp.maximum(mm(v2, p2_ref[0]), mm(v2, p2_ref[1]))   # (5, 160) = (5, 5*32)
    q2 = jnp.maximum(q2, 0.0)

    # conv3 (32->128, 3x3) + bias + ReLU
    a3 = mm(q2[0:3, :], m3_ref[0])
    a3 = a3 + mm(q2[1:4, :], m3_ref[1])
    a3 = a3 + mm(q2[2:5, :], m3_ref[2])
    a3 = jnp.maximum(a3 + b3_ref[...], 0.0)                  # (3, 384) = (3, 3*128)

    # fc1 + ReLU.  The NCHW torch.flatten permutation is folded into the
    # column ordering of wf1 (done once at parameter prep), so we consume the
    # NHWC slab row-by-row with no transpose.
    h = mm(a3[0:1, :], wf1_ref[0])
    h = h + mm(a3[1:2, :], wf1_ref[1])
    h = h + mm(a3[2:3, :], wf1_ref[2])
    h = jnp.maximum(h + bf1_ref[...], 0.0)                   # (1, 64)

    # fc2 + log_softmax(dim=1)
    logits = mm(h, wf2_ref[...]) + bf2_ref[...]              # (1, 10)
    m = jnp.max(logits, axis=-1, keepdims=True)
    z = logits - m
    lse = jnp.log(jnp.sum(jnp.exp(z), axis=-1, keepdims=True))
    out_ref[0] = (z - lse).astype(out_ref.dtype)


# ----------------------- weight preprocessing (once) ---------------------

def _conv_band_matrices(w, width_in):
    """w: (Cout, Cin, 3, 3) -> (3, width_in*Cin, (width_in-2)*Cout) banded
    matrices: M[ki][(j+kj)*Cin + ci, j*Cout + co] = w[co, ci, ki, kj]."""
    w = np.asarray(w, np.float32)
    cout, cin, k, _ = w.shape
    wo = width_in - k + 1
    m = np.zeros((k, width_in * cin, wo * cout), np.float32)
    for ki in range(k):
        for kj in range(k):
            wt = w[:, :, ki, kj].T                           # (Cin, Cout)
            for j in range(wo):
                m[ki, (j + kj) * cin:(j + kj + 1) * cin,
                      j * cout:(j + 1) * cout] = wt
    return m


def _pool_row_select(h_in):
    """(2, h_in//2, h_in) 0/1 matrices selecting even / odd rows."""
    ho = h_in // 2
    e = np.zeros((2, ho, h_in), np.float32)
    for d in range(2):
        e[d, np.arange(ho), 2 * np.arange(ho) + d] = 1.0
    return e


def _pool_col_select(w_in, c):
    """(2, w_in*c, (w_in//2)*c) 0/1 matrices selecting even / odd col blocks."""
    wo = w_in // 2
    p = np.zeros((2, w_in * c, wo * c), np.float32)
    cols = np.arange(c)
    for d in range(2):
        for j in range(wo):
            p[d, (2 * j + d) * c + cols, j * c + cols] = 1.0
    return p


def prepare_params(params, compute_dtype=jnp.float32):
    """One-time (outside jit) weight prep: banded conv matrices, tiled biases,
    pooling selection matrices, fc1 column permutation, fc2 transpose.
    Use compute_dtype=jnp.bfloat16 on v6e/v7x to halve weight DMA bytes."""
    g = lambda k: np.asarray(params[k], np.float32)

    m1 = _conv_band_matrices(g("w1"), 28)                    # (3, 28, 208)
    m2 = _conv_band_matrices(g("w2"), 13)                    # (3, 104, 352)
    m3 = _conv_band_matrices(g("w3"), 5)                     # (3, 160, 384)
    b1 = np.tile(g("b1"), 26)[None, :]                       # (1, 208)
    b2 = np.tile(g("b2"), 11)[None, :]                       # (1, 352)
    b3 = np.tile(g("b3"), 3)[None, :]                        # (1, 384)
    e1, p1 = _pool_row_select(26), _pool_col_select(26, 8)   # (2,13,26),(2,208,104)
    e2, p2 = _pool_row_select(11), _pool_col_select(11, 32)  # (2,5,11),(2,352,160)

    # fc1: permute columns so NHWC (h, w*128+c) order matches torch.flatten's
    # NCHW (c*9 + h*3 + w) order.
    wf1 = g("w_fc1").reshape(64, 128, 3, 3)                  # (o, c, h, w)
    wf1 = wf1.transpose(2, 3, 1, 0).reshape(3, 3 * 128, 64)  # (h, w*128+c, o)
    bf1 = g("b_fc1")[None, :]                                # (1, 64)
    wf2 = g("w_fc2").T                                       # (64, 10)
    bf2 = g("b_fc2")[None, :]                                # (1, 10)

    mats = dict(M1=m1, E1=e1, P1=p1, M2=m2, E2=e2, P2=p2,
                M3=m3, WF1=wf1, WF2=wf2)
    vecs = dict(B1=b1, B2=b2, B3=b3, BF1=bf1, BF2=bf2)
    prep = {k: jnp.asarray(v, compute_dtype) for k, v in mats.items()}
    prep.update({k: jnp.asarray(v, jnp.float32) for k, v in vecs.items()})
    return prep


_CONST_ORDER = ("M1", "B1", "E1", "P1", "M2", "B2", "E2", "P2",
                "M3", "B3", "WF1", "BF1", "WF2", "BF2")


def _const_spec(arr):
    n = arr.ndim
    return pl.BlockSpec(arr.shape, lambda b, _n=n: (0,) * _n)


# ------------------------------ forward ----------------------------------

def cnn_forward(x, prep):
    if x.ndim != 4:
        raise ValueError(f"Expected a 4D tensor, got {x.ndim}D")
    if x.shape[1:] != (1, 28, 28):
        raise ValueError(f"Expected input shape (x,1,28,28), got {tuple(x.shape)}")
    B = x.shape[0]
    x2 = x.reshape(B, 28, 28).astype(jnp.float32)            # drop Cin=1 (metadata only)

    consts = [prep[k] for k in _CONST_ORDER]
    in_specs = [pl.BlockSpec((1, 28, 28), lambda b: (b, 0, 0))]
    in_specs += [_const_spec(c) for c in consts]

    out = pl.pallas_call(
        functools.partial(_fused_cnn_kernel, compute_dtype=prep["M1"].dtype),
        out_shape=jax.ShapeDtypeStruct((B, 1, 10), jnp.float32),
        grid_spec=pltpu.PrefetchScalarGridSpec(
            num_scalar_prefetch=0,
            grid=(B,),                                        # one image per step
            in_specs=in_specs,
            out_specs=pl.BlockSpec((1, 1, 10), lambda b: (b, 0, 0)),
        ),
        compiler_params=pltpu.CompilerParams(
            dimension_semantics=("parallel",)),               # v7x: 2 TCs split batch
    )(x2, *consts)
    return out.reshape(B, 10)


# ----------------------- deterministic parameter init --------------------

def init_params(key):
    def conv_init(k, cout, cin, ksz):
        kw, kb = jax.random.split(k)
        bound = 1.0 / math.sqrt(cin * ksz * ksz)
        w = jax.random.uniform(kw, (cout, cin, ksz, ksz), jnp.float32, -bound, bound)
        b = jax.random.uniform(kb, (cout,), jnp.float32, -bound, bound)
        return w, b

    def lin_init(k, out_f, in_f):
        kw, kb = jax.random.split(k)
        bound = 1.0 / math.sqrt(in_f)
        w = jax.random.uniform(kw, (out_f, in_f), jnp.float32, -bound, bound)
        b = jax.random.uniform(kb, (out_f,), jnp.float32, -bound, bound)
        return w, b

    ks = jax.random.split(key, 5)
    w1, b1 = conv_init(ks[0], 8, 1, 3)
    w2, b2 = conv_init(ks[1], 32, 8, 3)
    w3, b3 = conv_init(ks[2], 128, 32, 3)
    w_fc1, b_fc1 = lin_init(ks[3], 64, 3 * 3 * 128)
    w_fc2, b_fc2 = lin_init(ks[4], 10, 64)
    return dict(w1=w1, b1=b1, w2=w2, b2=b2, w3=w3, b3=b3,
                w_fc1=w_fc1, b_fc1=b_fc1, w_fc2=w_fc2, b_fc2=b_fc2)


# --------------------------- pure-JAX reference ---------------------------

def _reference_forward(x, params):
    hp = jax.lax.Precision.HIGHEST

    def conv(inp, w, b):
        y = jax.lax.conv_general_dilated(
            inp, w, window_strides=(1, 1), padding="VALID",
            dimension_numbers=("NCHW", "OIHW", "NCHW"), precision=hp)
        return y + b[None, :, None, None]

    def pool(inp):
        return jax.lax.reduce_window(inp, -jnp.inf, jax.lax.max,
                                     (1, 1, 2, 2), (1, 1, 2, 2), "VALID")

    y = jax.nn.relu(conv(x, params["w1"], params["b1"]))
    y = pool(y)
    y = conv(y, params["w2"], params["b2"])
    y = jax.nn.relu(pool(y))
    y = jax.nn.relu(conv(y, params["w3"], params["b3"]))
    y = y.reshape(y.shape[0], -1)
    y = jax.nn.relu(jnp.dot(y, params["w_fc1"].T, precision=hp) + params["b_fc1"])
    y = jnp.dot(y, params["w_fc2"].T, precision=hp) + params["b_fc2"]
    return jax.nn.log_softmax(y, axis=1)


if __name__ == "__main__":
    key = jax.random.PRNGKey(0)
    kx, kp = jax.random.split(key)
    # Input shape fixed by the module's validation: (B, 1, 28, 28). B=2.
    x = jax.random.normal(kx, (2, 1, 28, 28), dtype=jnp.float32)
    params = init_params(kp)
    prep = prepare_params(params)          # pass compute_dtype=jnp.bfloat16 on v6e/v7x

    out = jax.block_until_ready(jax.jit(cnn_forward)(x, prep))
    assert out.shape == (2, 10)
    assert bool(jnp.all(jnp.isfinite(out)))
    assert bool(jnp.allclose(jnp.sum(jnp.exp(out), axis=1), 1.0, atol=1e-4))

    # Verify against a pure-JAX/XLA reference of the PyTorch module.
    ref = jax.block_until_ready(jax.jit(_reference_forward)(x, params))
    assert bool(jnp.allclose(out, ref, atol=1e-2, rtol=1e-2))
    print("KERNEL_OK")
</pallas_src>

<mosaic_0001>
module attributes {stable_mosaic.version = 11 : i64} {
  func.func @_fused_cnn_kernel(%arg0: i32, %arg1: memref<1x28x28xf32, #tpu.memory_space<vmem>>, %arg2: memref<3x28x208xf32, #tpu.memory_space<vmem>>, %arg3: memref<1x208xf32, #tpu.memory_space<vmem>>, %arg4: memref<2x13x26xf32, #tpu.memory_space<vmem>>, %arg5: memref<2x208x104xf32, #tpu.memory_space<vmem>>, %arg6: memref<3x104x352xf32, #tpu.memory_space<vmem>>, %arg7: memref<1x352xf32, #tpu.memory_space<vmem>>, %arg8: memref<2x5x11xf32, #tpu.memory_space<vmem>>, %arg9: memref<2x352x160xf32, #tpu.memory_space<vmem>>, %arg10: memref<3x160x384xf32, #tpu.memory_space<vmem>>, %arg11: memref<1x384xf32, #tpu.memory_space<vmem>>, %arg12: memref<3x384x64xf32, #tpu.memory_space<vmem>>, %arg13: memref<1x64xf32, #tpu.memory_space<vmem>>, %arg14: memref<64x10xf32, #tpu.memory_space<vmem>>, %arg15: memref<1x10xf32, #tpu.memory_space<vmem>>, %arg16: memref<1x1x10xf32, #tpu.memory_space<vmem>>) attributes {dimension_semantics = [#tpu.dimension_semantics<parallel>], iteration_bounds = array<i64: 2>, scalar_prefetch = 0 : i64, scratch_operands = 0 : i64, tpu.core_type = #tpu.core_type<tc>, window_params = [{transform_indices = @transform_0, window_bounds = array<i64: 1, 28, 28>}, {pipeline_mode = #tpu.pipeline_mode<synchronous>, transform_indices = @transform_1, window_bounds = array<i64: 3, 28, 208>}, {pipeline_mode = #tpu.pipeline_mode<synchronous>, transform_indices = @transform_2, window_bounds = array<i64: 1, 208>}, {pipeline_mode = #tpu.pipeline_mode<synchronous>, transform_indices = @transform_3, window_bounds = array<i64: 2, 13, 26>}, {pipeline_mode = #tpu.pipeline_mode<synchronous>, transform_indices = @transform_4, window_bounds = array<i64: 2, 208, 104>}, {pipeline_mode = #tpu.pipeline_mode<synchronous>, transform_indices = @transform_5, window_bounds = array<i64: 3, 104, 352>}, {pipeline_mode = #tpu.pipeline_mode<synchronous>, transform_indices = @transform_6, window_bounds = array<i64: 1, 352>}, {pipeline_mode = #tpu.pipeline_mode<synchronous>, transform_indices = @transform_7, window_bounds = array<i64: 2, 5, 11>}, {pipeline_mode = #tpu.pipeline_mode<synchronous>, transform_indices = @transform_8, window_bounds = array<i64: 2, 352, 160>}, {pipeline_mode = #tpu.pipeline_mode<synchronous>, transform_indices = @transform_9, window_bounds = array<i64: 3, 160, 384>}, {pipeline_mode = #tpu.pipeline_mode<synchronous>, transform_indices = @transform_10, window_bounds = array<i64: 1, 384>}, {pipeline_mode = #tpu.pipeline_mode<synchronous>, transform_indices = @transform_11, window_bounds = array<i64: 3, 384, 64>}, {pipeline_mode = #tpu.pipeline_mode<synchronous>, transform_indices = @transform_12, window_bounds = array<i64: 1, 64>}, {pipeline_mode = #tpu.pipeline_mode<synchronous>, transform_indices = @transform_13, window_bounds = array<i64: 64, 10>}, {pipeline_mode = #tpu.pipeline_mode<synchronous>, transform_indices = @transform_14, window_bounds = array<i64: 1, 10>}, {transform_indices = @transform_15, window_bounds = array<i64: 1, 1, 10>}]} {
    %c0 = arith.constant 0 : index
    %c0_0 = arith.constant 0 : index
    %c0_1 = arith.constant 0 : index
    %0 = vector.load %arg1[%c0, %c0_0, %c0_1] : memref<1x28x28xf32, #tpu.memory_space<vmem>>, vector<1x28x28xf32>
    %1 = vector.shape_cast %0 : vector<1x28x28xf32> to vector<28x28xf32>
    %2 = vector.extract_strided_slice %1 {offsets = [0, 0], sizes = [26, 28], strides = [1, 1]} : vector<28x28xf32> to vector<26x28xf32>
    %c0_2 = arith.constant 0 : index
    %c0_3 = arith.constant 0 : index
    %c0_4 = arith.constant 0 : index
    %3 = vector.load %arg2[%c0_2, %c0_3, %c0_4] : memref<3x28x208xf32, #tpu.memory_space<vmem>>, vector<1x28x208xf32>
    %4 = vector.shape_cast %3 : vector<1x28x208xf32> to vector<28x208xf32>
    %cst = arith.constant dense<0.000000e+00> : vector<26x208xf32>
    %5 = tpu.matmul %2, %4, %cst {dimension_numbers = #tpu.dot_dimension_numbers<[1], [0], [0], [1], [0, 0, 1, 1], [], []>} : vector<26x28xf32>, vector<28x208xf32>, vector<26x208xf32> -> vector<26x208xf32>
    %6 = vector.extract_strided_slice %1 {offsets = [1, 0], sizes = [26, 28], strides = [1, 1]} : vector<28x28xf32> to vector<26x28xf32>
    %c1 = arith.constant 1 : index
    %c0_5 = arith.constant 0 : index
    %c0_6 = arith.constant 0 : index
    %7 = vector.load %arg2[%c1, %c0_5, %c0_6] : memref<3x28x208xf32, #tpu.memory_space<vmem>>, vector<1x28x208xf32>
    %8 = vector.shape_cast %7 : vector<1x28x208xf32> to vector<28x208xf32>
    %cst_7 = arith.constant dense<0.000000e+00> : vector<26x208xf32>
    %9 = tpu.matmul %6, %8, %cst_7 {dimension_numbers = #tpu.dot_dimension_numbers<[1], [0], [0], [1], [0, 0, 1, 1], [], []>} : vector<26x28xf32>, vector<28x208xf32>, vector<26x208xf32> -> vector<26x208xf32>
    %10 = arith.addf %5, %9 : vector<26x208xf32>
    %11 = vector.extract_strided_slice %1 {offsets = [2, 0], sizes = [26, 28], strides = [1, 1]} : vector<28x28xf32> to vector<26x28xf32>
    %c2 = arith.constant 2 : index
    %c0_8 = arith.constant 0 : index
    %c0_9 = arith.constant 0 : index
    %12 = vector.load %arg2[%c2, %c0_8, %c0_9] : memref<3x28x208xf32, #tpu.memory_space<vmem>>, vector<1x28x208xf32>
    %13 = vector.shape_cast %12 : vector<1x28x208xf32> to vector<28x208xf32>
    %cst_10 = arith.constant dense<0.000000e+00> : vector<26x208xf32>
    %14 = tpu.matmul %11, %13, %cst_10 {dimension_numbers = #tpu.dot_dimension_numbers<[1], [0], [0], [1], [0, 0, 1, 1], [], []>} : vector<26x28xf32>, vector<28x208xf32>, vector<26x208xf32> -> vector<26x208xf32>
    %15 = arith.addf %10, %14 : vector<26x208xf32>
    %c0_11 = arith.constant 0 : index
    %c0_12 = arith.constant 0 : index
    %16 = vector.load %arg3[%c0_11, %c0_12] : memref<1x208xf32, #tpu.memory_space<vmem>>, vector<1x208xf32>
    %17 = vector.broadcast %16 : vector<1x208xf32> to vector<26x208xf32>
    %18 = arith.addf %15, %17 : vector<26x208xf32>
    %cst_13 = arith.constant 0.000000e+00 : f32
    %19 = vector.broadcast %cst_13 : f32 to vector<26x208xf32>
    %20 = arith.maximumf %18, %19 : vector<26x208xf32>
    %c0_14 = arith.constant 0 : index
    %c0_15 = arith.constant 0 : index
    %c0_16 = arith.constant 0 : index
    %21 = vector.load %arg4[%c0_14, %c0_15, %c0_16] : memref<2x13x26xf32, #tpu.memory_space<vmem>>, vector<1x13x26xf32>
    %22 = vector.shape_cast %21 : vector<1x13x26xf32> to vector<13x26xf32>
    %cst_17 = arith.constant dense<0.000000e+00> : vector<13x208xf32>
    %23 = tpu.matmul %22, %20, %cst_17 {dimension_numbers = #tpu.dot_dimension_numbers<[1], [0], [0], [1], [0, 0, 1, 1], [], []>} : vector<13x26xf32>, vector<26x208xf32>, vector<13x208xf32> -> vector<13x208xf32>
    %c1_18 = arith.constant 1 : index
    %c0_19 = arith.constant 0 : index
    %c0_20 = arith.constant 0 : index
    %24 = vector.load %arg4[%c1_18, %c0_19, %c0_20] : memref<2x13x26xf32, #tpu.memory_space<vmem>>, vector<1x13x26xf32>
    %25 = vector.shape_cast %24 : vector<1x13x26xf32> to vector<13x26xf32>
    %cst_21 = arith.constant dense<0.000000e+00> : vector<13x208xf32>
    %26 = tpu.matmul %25, %20, %cst_21 {dimension_numbers = #tpu.dot_dimension_numbers<[1], [0], [0], [1], [0, 0, 1, 1], [], []>} : vector<13x26xf32>, vector<26x208xf32>, vector<13x208xf32> -> vector<13x208xf32>
    %27 = arith.maximumf %23, %26 : vector<13x208xf32>
    %c0_22 = arith.constant 0 : index
    %c0_23 = arith.constant 0 : index
    %c0_24 = arith.constant 0 : index
    %28 = vector.load %arg5[%c0_22, %c0_23, %c0_24] : memref<2x208x104xf32, #tpu.memory_space<vmem>>, vector<1x208x104xf32>
    %29 = vector.shape_cast %28 : vector<1x208x104xf32> to vector<208x104xf32>
    %cst_25 = arith.constant dense<0.000000e+00> : vector<13x104xf32>
    %30 = tpu.matmul %27, %29, %cst_25 {dimension_numbers = #tpu.dot_dimension_numbers<[1], [0], [0], [1], [0, 0, 1, 1], [], []>} : vector<13x208xf32>, vector<208x104xf32>, vector<13x104xf32> -> vector<13x104xf32>
    %c1_26 = arith.constant 1 : index
    %c0_27 = arith.constant 0 : index
    %c0_28 = arith.constant 0 : index
    %31 = vector.load %arg5[%c1_26, %c0_27, %c0_28] : memref<2x208x104xf32, #tpu.memory_space<vmem>>, vector<1x208x104xf32>
    %32 = vector.shape_cast %31 : vector<1x208x104xf32> to vector<208x104xf32>
    %cst_29 = arith.constant dense<0.000000e+00> : vector<13x104xf32>
    %33 = tpu.matmul %27, %32, %cst_29 {dimension_numbers = #tpu.dot_dimension_numbers<[1], [0], [0], [1], [0, 0, 1, 1], [], []>} : vector<13x208xf32>, vector<208x104xf32>, vector<13x104xf32> -> vector<13x104xf32>
    %34 = arith.maximumf %30, %33 : vector<13x104xf32>
    %35 = vector.extract_strided_slice %34 {offsets = [0, 0], sizes = [11, 104], strides = [1, 1]} : vector<13x104xf32> to vector<11x104xf32>
    %c0_30 = arith.constant 0 : index
    %c0_31 = arith.constant 0 : index
    %c0_32 = arith.constant 0 : index
    %36 = vector.load %arg6[%c0_30, %c0_31, %c0_32] : memref<3x104x352xf32, #tpu.memory_space<vmem>>, vector<1x104x352xf32>
    %37 = vector.shape_cast %36 : vector<1x104x352xf32> to vector<104x352xf32>
    %cst_33 = arith.constant dense<0.000000e+00> : vector<11x352xf32>
    %38 = tpu.matmul %35, %37, %cst_33 {dimension_numbers = #tpu.dot_dimension_numbers<[1], [0], [0], [1], [0, 0, 1, 1], [], []>} : vector<11x104xf32>, vector<104x352xf32>, vector<11x352xf32> -> vector<11x352xf32>
    %39 = vector.extract_strided_slice %34 {offsets = [1, 0], sizes = [11, 104], strides = [1, 1]} : vector<13x104xf32> to vector<11x104xf32>
    %c1_34 = arith.constant 1 : index
    %c0_35 = arith.constant 0 : index
    %c0_36 = arith.constant 0 : index
    %40 = vector.load %arg6[%c1_34, %c0_35, %c0_36] : memref<3x104x352xf32, #tpu.memory_space<vmem>>, vector<1x104x352xf32>
    %41 = vector.shape_cast %40 : vector<1x104x352xf32> to vector<104x352xf32>
    %cst_37 = arith.constant dense<0.000000e+00> : vector<11x352xf32>
    %42 = tpu.matmul %39, %41, %cst_37 {dimension_numbers = #tpu.dot_dimension_numbers<[1], [0], [0], [1], [0, 0, 1, 1], [], []>} : vector<11x104xf32>, vector<104x352xf32>, vector<11x352xf32> -> vector<11x352xf32>
    %43 = arith.addf %38, %42 : vector<11x352xf32>
    %44 = vector.extract_strided_slice %34 {offsets = [2, 0], sizes = [11, 104], strides = [1, 1]} : vector<13x104xf32> to vector<11x104xf32>
    %c2_38 = arith.constant 2 : index
    %c0_39 = arith.constant 0 : index
    %c0_40 = arith.constant 0 : index
    %45 = vector.load %arg6[%c2_38, %c0_39, %c0_40] : memref<3x104x352xf32, #tpu.memory_space<vmem>>, vector<1x104x352xf32>
    %46 = vector.shape_cast %45 : vector<1x104x352xf32> to vector<104x352xf32>
    %cst_41 = arith.constant dense<0.000000e+00> : vector<11x352xf32>
    %47 = tpu.matmul %44, %46, %cst_41 {dimension_numbers = #tpu.dot_dimension_numbers<[1], [0], [0], [1], [0, 0, 1, 1], [], []>} : vector<11x104xf32>, vector<104x352xf32>, vector<11x352xf32> -> vector<11x352xf32>
    %48 = arith.addf %43, %47 : vector<11x352xf32>
    %c0_42 = arith.constant 0 : index
    %c0_43 = arith.constant 0 : index
    %49 = vector.load %arg7[%c0_42, %c0_43] : memref<1x352xf32, #tpu.memory_space<vmem>>, vector<1x352xf32>
    %50 = vector.broadcast %49 : vector<1x352xf32> to vector<11x352xf32>
    %51 = arith.addf %48, %50 : vector<11x352xf32>
    %c0_44 = arith.constant 0 : index
    %c0_45 = arith.constant 0 : index
    %c0_46 = arith.constant 0 : index
    %52 = vector.load %arg8[%c0_44, %c0_45, %c0_46] : memref<2x5x11xf32, #tpu.memory_space<vmem>>, vector<1x5x11xf32>
    %53 = vector.shape_cast %52 : vector<1x5x11xf32> to vector<5x11xf32>
    %cst_47 = arith.constant dense<0.000000e+00> : vector<5x352xf32>
    %54 = tpu.matmul %53, %51, %cst_47 {dimension_numbers = #tpu.dot_dimension_numbers<[1], [0], [0], [1], [0, 0, 1, 1], [], []>} : vector<5x11xf32>, vector<11x352xf32>, vector<5x352xf32> -> vector<5x352xf32>
    %c1_48 = arith.constant 1 : index
    %c0_49 = arith.constant 0 : index
    %c0_50 = arith.constant 0 : index
    %55 = vector.load %arg8[%c1_48, %c0_49, %c0_50] : memref<2x5x11xf32, #tpu.memory_space<vmem>>, vector<1x5x11xf32>
    %56 = vector.shape_cast %55 : vector<1x5x11xf32> to vector<5x11xf32>
    %cst_51 = arith.constant dense<0.000000e+00> : vector<5x352xf32>
    %57 = tpu.matmul %56, %51, %cst_51 {dimension_numbers = #tpu.dot_dimension_numbers<[1], [0], [0], [1], [0, 0, 1, 1], [], []>} : vector<5x11xf32>, vector<11x352xf32>, vector<5x352xf32> -> vector<5x352xf32>
    %58 = arith.maximumf %54, %57 : vector<5x352xf32>
    %c0_52 = arith.constant 0 : index
    %c0_53 = arith.constant 0 : index
    %c0_54 = arith.constant 0 : index
    %59 = vector.load %arg9[%c0_52, %c0_53, %c0_54] : memref<2x352x160xf32, #tpu.memory_space<vmem>>, vector<1x352x160xf32>
    %60 = vector.shape_cast %59 : vector<1x352x160xf32> to vector<352x160xf32>
    %cst_55 = arith.constant dense<0.000000e+00> : vector<5x160xf32>
    %61 = tpu.matmul %58, %60, %cst_55 {dimension_numbers = #tpu.dot_dimension_numbers<[1], [0], [0], [1], [0, 0, 1, 1], [], []>} : vector<5x352xf32>, vector<352x160xf32>, vector<5x160xf32> -> vector<5x160xf32>
    %c1_56 = arith.constant 1 : index
    %c0_57 = arith.constant 0 : index
    %c0_58 = arith.constant 0 : index
    %62 = vector.load %arg9[%c1_56, %c0_57, %c0_58] : memref<2x352x160xf32, #tpu.memory_space<vmem>>, vector<1x352x160xf32>
    %63 = vector.shape_cast %62 : vector<1x352x160xf32> to vector<352x160xf32>
    %cst_59 = arith.constant dense<0.000000e+00> : vector<5x160xf32>
    %64 = tpu.matmul %58, %63, %cst_59 {dimension_numbers = #tpu.dot_dimension_numbers<[1], [0], [0], [1], [0, 0, 1, 1], [], []>} : vector<5x352xf32>, vector<352x160xf32>, vector<5x160xf32> -> vector<5x160xf32>
    %65 = arith.maximumf %61, %64 : vector<5x160xf32>
    %cst_60 = arith.constant 0.000000e+00 : f32
    %66 = vector.broadcast %cst_60 : f32 to vector<5x160xf32>
    %67 = arith.maximumf %65, %66 : vector<5x160xf32>
    %68 = vector.extract_strided_slice %67 {offsets = [0, 0], sizes = [3, 160], strides = [1, 1]} : vector<5x160xf32> to vector<3x160xf32>
    %c0_61 = arith.constant 0 : index
    %c0_62 = arith.constant 0 : index
    %c0_63 = arith.constant 0 : index
    %69 = vector.load %arg10[%c0_61, %c0_62, %c0_63] : memref<3x160x384xf32, #tpu.memory_space<vmem>>, vector<1x160x384xf32>
    %70 = vector.shape_cast %69 : vector<1x160x384xf32> to vector<160x384xf32>
    %cst_64 = arith.constant dense<0.000000e+00> : vector<3x384xf32>
    %71 = tpu.matmul %68, %70, %cst_64 {dimension_numbers = #tpu.dot_dimension_numbers<[1], [0], [0], [1], [0, 0, 1, 1], [], []>} : vector<3x160xf32>, vector<160x384xf32>, vector<3x384xf32> -> vector<3x384xf32>
    %72 = vector.extract_strided_slice %67 {offsets = [1, 0], sizes = [3, 160], strides = [1, 1]} : vector<5x160xf32> to vector<3x160xf32>
    %c1_65 = arith.constant 1 : index
    %c0_66 = arith.constant 0 : index
    %c0_67 = arith.constant 0 : index
    %73 = vector.load %arg10[%c1_65, %c0_66, %c0_67] : memref<3x160x384xf32, #tpu.memory_space<vmem>>, vector<1x160x384xf32>
    %74 = vector.shape_cast %73 : vector<1x160x384xf32> to vector<160x384xf32>
    %cst_68 = arith.constant dense<0.000000e+00> : vector<3x384xf32>
    %75 = tpu.matmul %72, %74, %cst_68 {dimension_numbers = #tpu.dot_dimension_numbers<[1], [0], [0], [1], [0, 0, 1, 1], [], []>} : vector<3x160xf32>, vector<160x384xf32>, vector<3x384xf32> -> vector<3x384xf32>
    %76 = arith.addf %71, %75 : vector<3x384xf32>
    %77 = vector.extract_strided_slice %67 {offsets = [2, 0], sizes = [3, 160], strides = [1, 1]} : vector<5x160xf32> to vector<3x160xf32>
    %c2_69 = arith.constant 2 : index
    %c0_70 = arith.constant 0 : index
    %c0_71 = arith.constant 0 : index
    %78 = vector.load %arg10[%c2_69, %c0_70, %c0_71] : memref<3x160x384xf32, #tpu.memory_space<vmem>>, vector<1x160x384xf32>
    %79 = vector.shape_cast %78 : vector<1x160x384xf32> to vector<160x384xf32>
    %cst_72 = arith.constant dense<0.000000e+00> : vector<3x384xf32>
    %80 = tpu.matmul %77, %79, %cst_72 {dimension_numbers = #tpu.dot_dimension_numbers<[1], [0], [0], [1], [0, 0, 1, 1], [], []>} : vector<3x160xf32>, vector<160x384xf32>, vector<3x384xf32> -> vector<3x384xf32>
    %81 = arith.addf %76, %80 : vector<3x384xf32>
    %c0_73 = arith.constant 0 : index
    %c0_74 = arith.constant 0 : index
    %82 = vector.load %arg11[%c0_73, %c0_74] : memref<1x384xf32, #tpu.memory_space<vmem>>, vector<1x384xf32>
    %83 = vector.broadcast %82 : vector<1x384xf32> to vector<3x384xf32>
    %84 = arith.addf %81, %83 : vector<3x384xf32>
    %cst_75 = arith.constant 0.000000e+00 : f32
    %85 = vector.broadcast %cst_75 : f32 to vector<3x384xf32>
    %86 = arith.maximumf %84, %85 : vector<3x384xf32>
    %87 = vector.extract_strided_slice %86 {offsets = [0, 0], sizes = [1, 384], strides = [1, 1]} : vector<3x384xf32> to vector<1x384xf32>
    %c0_76 = arith.constant 0 : index
    %c0_77 = arith.constant 0 : index
    %c0_78 = arith.constant 0 : index
    %88 = vector.load %arg12[%c0_76, %c0_77, %c0_78] : memref<3x384x64xf32, #tpu.memory_space<vmem>>, vector<1x384x64xf32>
    %89 = vector.shape_cast %88 : vector<1x384x64xf32> to vector<384x64xf32>
    %cst_79 = arith.constant dense<0.000000e+00> : vector<1x64xf32>
    %90 = tpu.matmul %87, %89, %cst_79 {dimension_numbers = #tpu.dot_dimension_numbers<[1], [0], [0], [1], [0, 0, 1, 1], [], []>} : vector<1x384xf32>, vector<384x64xf32>, vector<1x64xf32> -> vector<1x64xf32>
    %91 = vector.extract_strided_slice %86 {offsets = [1, 0], sizes = [1, 384], strides = [1, 1]} : vector<3x384xf32> to vector<1x384xf32>
    %c1_80 = arith.constant 1 : index
    %c0_81 = arith.constant 0 : index
    %c0_82 = arith.constant 0 : index
    %92 = vector.load %arg12[%c1_80, %c0_81, %c0_82] : memref<3x384x64xf32, #tpu.memory_space<vmem>>, vector<1x384x64xf32>
    %93 = vector.shape_cast %92 : vector<1x384x64xf32> to vector<384x64xf32>
    %cst_83 = arith.constant dense<0.000000e+00> : vector<1x64xf32>
    %94 = tpu.matmul %91, %93, %cst_83 {dimension_numbers = #tpu.dot_dimension_numbers<[1], [0], [0], [1], [0, 0, 1, 1], [], []>} : vector<1x384xf32>, vector<384x64xf32>, vector<1x64xf32> -> vector<1x64xf32>
    %95 = arith.addf %90, %94 : vector<1x64xf32>
    %96 = vector.extract_strided_slice %86 {offsets = [2, 0], sizes = [1, 384], strides = [1, 1]} : vector<3x384xf32> to vector<1x384xf32>
    %c2_84 = arith.constant 2 : index
    %c0_85 = arith.constant 0 : index
    %c0_86 = arith.constant 0 : index
    %97 = vector.load %arg12[%c2_84, %c0_85, %c0_86] : memref<3x384x64xf32, #tpu.memory_space<vmem>>, vector<1x384x64xf32>
    %98 = vector.shape_cast %97 : vector<1x384x64xf32> to vector<384x64xf32>
    %cst_87 = arith.constant dense<0.000000e+00> : vector<1x64xf32>
    %99 = tpu.matmul %96, %98, %cst_87 {dimension_numbers = #tpu.dot_dimension_numbers<[1], [0], [0], [1], [0, 0, 1, 1], [], []>} : vector<1x384xf32>, vector<384x64xf32>, vector<1x64xf32> -> vector<1x64xf32>
    %100 = arith.addf %95, %99 : vector<1x64xf32>
    %c0_88 = arith.constant 0 : index
    %c0_89 = arith.constant 0 : index
    %101 = vector.load %arg13[%c0_88, %c0_89] : memref<1x64xf32, #tpu.memory_space<vmem>>, vector<1x64xf32>
    %102 = arith.addf %100, %101 : vector<1x64xf32>
    %cst_90 = arith.constant 0.000000e+00 : f32
    %103 = vector.broadcast %cst_90 : f32 to vector<1x64xf32>
    %104 = arith.maximumf %102, %103 : vector<1x64xf32>
    %c0_91 = arith.constant 0 : index
    %c0_92 = arith.constant 0 : index
    %105 = vector.load %arg14[%c0_91, %c0_92] : memref<64x10xf32, #tpu.memory_space<vmem>>, vector<64x10xf32>
    %cst_93 = arith.constant dense<0.000000e+00> : vector<1x10xf32>
    %106 = tpu.matmul %104, %105, %cst_93 {dimension_numbers = #tpu.dot_dimension_numbers<[1], [0], [0], [1], [0, 0, 1, 1], [], []>} : vector<1x64xf32>, vector<64x10xf32>, vector<1x10xf32> -> vector<1x10xf32>
    %c0_94 = arith.constant 0 : index
    %c0_95 = arith.constant 0 : index
    %107 = vector.load %arg15[%c0_94, %c0_95] : memref<1x10xf32, #tpu.memory_space<vmem>>, vector<1x10xf32>
    %108 = arith.addf %106, %107 : vector<1x10xf32>
    %cst_96 = arith.constant dense<0xFF800000> : vector<1xf32>
    %109 = vector.multi_reduction <maximumf>, %108, %cst_96 [1] : vector<1x10xf32> to vector<1xf32>
    %110 = vector.shape_cast %109 : vector<1xf32> to vector<1x1xf32>
    %111 = vector.broadcast %110 : vector<1x1xf32> to vector<1x10xf32>
    %112 = arith.subf %108, %111 : vector<1x10xf32>
    %113 = math.exp %112 : vector<1x10xf32>
    %cst_97 = arith.constant dense<0.000000e+00> : vector<1xf32>
    %114 = vector.multi_reduction <add>, %113, %cst_97 [1] : vector<1x10xf32> to vector<1xf32>
    %115 = vector.shape_cast %114 : vector<1xf32> to vector<1x1xf32>
    %116 = math.log %115 : vector<1x1xf32>
    %117 = vector.broadcast %116 : vector<1x1xf32> to vector<1x10xf32>
    %118 = arith.subf %112, %117 : vector<1x10xf32>
    %c0_98 = arith.constant 0 : index
    %c0_99 = arith.constant 0 : index
    %c0_100 = arith.constant 0 : index
    %119 = vector.load %arg16[%c0_98, %c0_99, %c0_100] : memref<1x1x10xf32, #tpu.memory_space<vmem>>, vector<1x1x10xf32>
    %120 = vector.shape_cast %119 : vector<1x1x10xf32> to vector<1x10xf32>
    %121 = vector.shape_cast %118 : vector<1x10xf32> to vector<1x1x10xf32>
    tpu.vector_store %arg16[%c0_98, %c0_99, %c0_100], %121 {strides = array<i32>} : memref<1x1x10xf32, #tpu.memory_space<vmem>>, vector<1x1x10xf32>,
    return
  }
  func.func @transform_0(%arg0: i32) -> (i32, i32, i32) {
    %c0_i32 = arith.constant 0 : i32
    %c0_i32_0 = arith.constant 0 : i32
    %c0_i32_1 = arith.constant 0 : i32
    return %arg0, %c0_i32, %c0_i32_0 : i32, i32, i32
  }
  func.func @transform_1(%arg0: i32) -> (i32, i32, i32) {
    %c0_i32 = arith.constant 0 : i32
    %c0_i32_0 = arith.constant 0 : i32
    %c0_i32_1 = arith.constant 0 : i32
    %c0_i32_2 = arith.constant 0 : i32
    return %c0_i32, %c0_i32_0, %c0_i32_1 : i32, i32, i32
  }
  func.func @transform_2(%arg0: i32) -> (i32, i32) {
    %c0_i32 = arith.constant 0 : i32
    %c0_i32_0 = arith.constant 0 : i32
    %c0_i32_1 = arith.constant 0 : i32
    return %c0_i32, %c0_i32_0 : i32, i32
  }
  func.func @transform_3(%arg0: i32) -> (i32, i32, i32) {
    %c0_i32 = arith.constant 0 : i32
    %c0_i32_0 = arith.constant 0 : i32
    %c0_i32_1 = arith.constant 0 : i32
    %c0_i32_2 = arith.constant 0 : i32
    return %c0_i32, %c0_i32_0, %c0_i32_1 : i32, i32, i32
  }
  func.func @transform_4(%arg0: i32) -> (i32, i32, i32) {
    %c0_i32 = arith.constant 0 : i32
    %c0_i32_0 = arith.constant 0 : i32
    %c0_i32_1 = arith.constant 0 : i32
    %c0_i32_2 = arith.constant 0 : i32
    return %c0_i32, %c0_i32_0, %c0_i32_1 : i32, i32, i32
  }
  func.func @transform_5(%arg0: i32) -> (i32, i32, i32) {
    %c0_i32 = arith.constant 0 : i32
    %c0_i32_0 = arith.constant 0 : i32
    %c0_i32_1 = arith.constant 0 : i32
    %c0_i32_2 = arith.constant 0 : i32
    return %c0_i32, %c0_i32_0, %c0_i32_1 : i32, i32, i32
  }
  func.func @transform_6(%arg0: i32) -> (i32, i32) {
    %c0_i32 = arith.constant 0 : i32
    %c0_i32_0 = arith.constant 0 : i32
    %c0_i32_1 = arith.constant 0 : i32
    return %c0_i32, %c0_i32_0 : i32, i32
  }
  func.func @transform_7(%arg0: i32) -> (i32, i32, i32) {
    %c0_i32 = arith.constant 0 : i32
    %c0_i32_0 = arith.constant 0 : i32
    %c0_i32_1 = arith.constant 0 : i32
    %c0_i32_2 = arith.constant 0 : i32
    return %c0_i32, %c0_i32_0, %c0_i32_1 : i32, i32, i32
  }
  func.func @transform_8(%arg0: i32) -> (i32, i32, i32) {
    %c0_i32 = arith.constant 0 : i32
    %c0_i32_0 = arith.constant 0 : i32
    %c0_i32_1 = arith.constant 0 : i32
    %c0_i32_2 = arith.constant 0 : i32
    return %c0_i32, %c0_i32_0, %c0_i32_1 : i32, i32, i32
  }
  func.func @transform_9(%arg0: i32) -> (i32, i32, i32) {
    %c0_i32 = arith.constant 0 : i32
    %c0_i32_0 = arith.constant 0 : i32
    %c0_i32_1 = arith.constant 0 : i32
    %c0_i32_2 = arith.constant 0 : i32
    return %c0_i32, %c0_i32_0, %c0_i32_1 : i32, i32, i32
  }
  func.func @transform_10(%arg0: i32) -> (i32, i32) {
    %c0_i32 = arith.constant 0 : i32
    %c0_i32_0 = arith.constant 0 : i32
    %c0_i32_1 = arith.constant 0 : i32
    return %c0_i32, %c0_i32_0 : i32, i32
  }
  func.func @transform_11(%arg0: i32) -> (i32, i32, i32) {
    %c0_i32 = arith.constant 0 : i32
    %c0_i32_0 = arith.constant 0 : i32
    %c0_i32_1 = arith.constant 0 : i32
    %c0_i32_2 = arith.constant 0 : i32
    return %c0_i32, %c0_i32_0, %c0_i32_1 : i32, i32, i32
  }
  func.func @transform_12(%arg0: i32) -> (i32, i32) {
    %c0_i32 = arith.constant 0 : i32
    %c0_i32_0 = arith.constant 0 : i32
    %c0_i32_1 = arith.constant 0 : i32
    return %c0_i32, %c0_i32_0 : i32, i32
  }
  func.func @transform_13(%arg0: i32) -> (i32, i32) {
    %c0_i32 = arith.constant 0 : i32
    %c0_i32_0 = arith.constant 0 : i32
    %c0_i32_1 = arith.constant 0 : i32
    return %c0_i32, %c0_i32_0 : i32, i32
  }
  func.func @transform_14(%arg0: i32) -> (i32, i32) {
    %c0_i32 = arith.constant 0 : i32
    %c0_i32_0 = arith.constant 0 : i32
    %c0_i32_1 = arith.constant 0 : i32
    return %c0_i32, %c0_i32_0 : i32, i32
  }
  func.func @transform_15(%arg0: i32) -> (i32, i32, i32) {
    %c0_i32 = arith.constant 0 : i32
    %c0_i32_0 = arith.constant 0 : i32
    %c0_i32_1 = arith.constant 0 : i32
    return %arg0, %c0_i32, %c0_i32_0 : i32, i32, i32
  }
}

</mosaic_0001>

<llo_original>
// kernel: cnn_forward.1
$region0: #{cnn_forward.1}
  #allocation0 [shape = 'u32[]', space=smem, size = 0x4, offset = 0x4, fixed_abs, tag = 'smem constant byte address 0x4 - core index']
  #allocation1 [shape = 'u32[72,128]{1,0:T(1,128)}', space=vmem, size = 0x9000, scoped, tag = 'internal scratch']
  %s0 = inlined_call_operand.vmem [shape: f32[2,28,28], index: 0, kind: input, shape index: {}]
  %s1 = inlined_call_operand.vmem [shape: f32[3,28,208], index: 1, kind: input, shape index: {}]
  %s2 = inlined_call_operand.vmem [shape: f32[1,208], index: 2, kind: input, shape index: {}]
  %s3 = inlined_call_operand.vmem [shape: f32[2,13,26], index: 3, kind: input, shape index: {}]
  %s4 = inlined_call_operand.vmem [shape: f32[2,208,104], index: 4, kind: input, shape index: {}]
  %s5 = inlined_call_operand.vmem [shape: f32[3,104,352], index: 5, kind: input, shape index: {}]
  %s6 = inlined_call_operand.vmem [shape: f32[1,352], index: 6, kind: input, shape index: {}]
  %s7 = inlined_call_operand.vmem [shape: f32[2,5,11], index: 7, kind: input, shape index: {}]
  %s8 = inlined_call_operand.vmem [shape: f32[2,352,160], index: 8, kind: input, shape index: {}]
  %s9 = inlined_call_operand.vmem [shape: f32[3,160,384], index: 9, kind: input, shape index: {}]
  %s10 = inlined_call_operand.vmem [shape: f32[1,384], index: 10, kind: input, shape index: {}]
  %s11 = inlined_call_operand.vmem [shape: f32[3,384,64], index: 11, kind: input, shape index: {}]
  %s12 = inlined_call_operand.vmem [shape: f32[1,64], index: 12, kind: input, shape index: {}]
  %s13 = inlined_call_operand.vmem [shape: f32[64,10], index: 13, kind: input, shape index: {}]
  %s14 = inlined_call_operand.vmem [shape: f32[1,10], index: 14, kind: input, shape index: {}]
  %s15 = inlined_call_operand.hbm [shape: f32[2,1,10], index: 15, kind: output, shape index: {}]
  %s16 = sld [smem:[#allocation0]]
  $region93: #{cnn_forward.1} parent=0
    _
  %s18 = ssub.s32 1, %s16
  %s19 = scalar_select 0, %s18, %s16
  $region1: #{cnn_forward.1} parent=0
    #allocation2 [shape = 'u8[1024]{0}', space=vmem, size = 0x400, scoped, tag = 'output window, operand 0']
    #allocation3 [shape = 's32[2]{0}', space=sflag, size = 0x8, scoped, tag = 'scoped memory for cnn_forward.1']
    %20 = vsyncpa [#allocation3], 0
    %s21 = scalar_lea.sflag [#allocation3], 1
    %22 = vsyncpa %s21, 0
    loop: start=0, step=1, limit=4
    $region2: #{cnn_forward.1} parent=1 // loop_pre_header
      _
    $region3: #{cnn_forward.1} parent=1 // loop_header
      %s24 = sphi 0, %s28
      %p25 = scmp.ge.s32.totalorder %s24, 4
      %s34 = sphi 0, %s36
      %s37 = sphi 0, %s34
      %s38 = sphi 0, %s37
      %s54 = sphi 0, %s38
      %s58 = sphi 0, %s58
      %s60 = sphi 0, %s58
      %s61 = sphi 0, %s60
      %s75 = sphi 0, %s61
      %s79 = sphi 0, %s79
      %s81 = sphi 0, %s79
      %s82 = sphi 0, %s81
      %s96 = sphi 0, %s82
      %s100 = sphi 0, %s100
      %s102 = sphi 0, %s100
      %s103 = sphi 0, %s102
      %s117 = sphi 0, %s103
      %s121 = sphi 0, %s121
      %s123 = sphi 0, %s121
      %s124 = sphi 0, %s123
      %s138 = sphi 0, %s124
      %s142 = sphi 0, %s142
      %s144 = sphi 0, %s142
      %s145 = sphi 0, %s144
      %s159 = sphi 0, %s145
      %s163 = sphi 0, %s163
      %s165 = sphi 0, %s163
      %s166 = sphi 0, %s165
      %s180 = sphi 0, %s166
      %s184 = sphi 0, %s184
      %s186 = sphi 0, %s184
      %s187 = sphi 0, %s186
      %s201 = sphi 0, %s187
      %s205 = sphi 0, %s205
      %s207 = sphi 0, %s205
      %s208 = sphi 0, %s207
      %s222 = sphi 0, %s208
      %s226 = sphi 0, %s226
      %s228 = sphi 0, %s226
      %s229 = sphi 0, %s228
      %s243 = sphi 0, %s229
      %s247 = sphi 0, %s247
      %s249 = sphi 0, %s247
      %s250 = sphi 0, %s249
      %s264 = sphi 0, %s250
      %s268 = sphi 0, %s268
      %s270 = sphi 0, %s268
      %s271 = sphi 0, %s270
      %s285 = sphi 0, %s271
      %s289 = sphi 0, %s289
      %s291 = sphi 0, %s289
      %s292 = sphi 0, %s291
      %s306 = sphi 0, %s292
      %s310 = sphi 0, %s310
      %s312 = sphi 0, %s310
      %s313 = sphi 0, %s312
      %s327 = sphi 0, %s313
      %s331 = sphi 0, %s331
      %s333 = sphi 0, %s331
      %s334 = sphi 0, %s333
      %s348 = sphi 0, %s334
      %s354 = sphi 0, %s356
      %s357 = sphi 0, %s354
      %s358 = sphi 0, %s357
      %s374 = sphi 0, %s358
    $region4: #{cnn_forward.1} parent=1 // loop_header_branch
      %27 = sbr.rel (%p25) target = $region8
    $region5: #{cnn_forward.1} parent=1 // loop_body
      %s29 = ssub.s32 %s24, 1
      %s30 = ssub.s32 %s24, 2
      %s31 = sadd.s32 %s24, 1
      %s32 = ssub.s32 %s24, %s31
      %p33 = scmp.eq.s32.totalorder %s32, 0
      %s35 = sadd.s32 %s34, 1
      %s36 = scalar_select %p33, %s34, %s35
      %p39 = pneg %p33
      %p40 = scmp.eq.s32.totalorder %s24, 1
      %p41 = por %p39, %p40
      %p42 = scmp.ne.s32.totalorder %s34, %s37
      %p43 = scmp.eq.s32.totalorder %s24, 0
      %p44 = por %p42, %p43
      %p45 = scmp.ne.s32.totalorder %s34, %s37
      %p46 = scmp.eq.s32.totalorder %s29, 1
      %p47 = por %p45, %p46
      %p48 = scmp.ne.s32.totalorder %s37, %s38
      %p49 = scmp.eq.s32.totalorder %s29, 0
      %p50 = por %p48, %p49
      %p51 = scmp.ne.s32.totalorder %s37, %s38
      %p52 = scmp.eq.s32.totalorder %s30, 1
      %p53 = por %p51, %p52
      %p55 = scmp.ne.s32.totalorder %s38, %s54
      %p56 = scmp.eq.s32.totalorder %s30, 0
      %p57 = por %p55, %p56
      %s59 = sadd.s32 %s58, 1
      %p62 = scmp.eq.s32.totalorder %s24, 1
      %p63 = scmp.ne.s32.totalorder %s58, %s60
      %p64 = scmp.eq.s32.totalorder %s24, 0
      %p65 = por %p63, %p64
      %p66 = scmp.ne.s32.totalorder %s58, %s60
      %p67 = scmp.eq.s32.totalorder %s29, 1
      %p68 = por %p66, %p67
      %p69 = scmp.ne.s32.totalorder %s60, %s61
      %p70 = scmp.eq.s32.totalorder %s29, 0
      %p71 = por %p69, %p70
      %p72 = scmp.ne.s32.totalorder %s60, %s61
      %p73 = scmp.eq.s32.totalorder %s30, 1
      %p74 = por %p72, %p73
      %p76 = scmp.ne.s32.totalorder %s61, %s75
      %p77 = scmp.eq.s32.totalorder %s30, 0
      %p78 = por %p76, %p77
      %s80 = sadd.s32 %s79, 1
      %p83 = scmp.eq.s32.totalorder %s24, 1
      %p84 = scmp.ne.s32.totalorder %s79, %s81
      %p85 = scmp.eq.s32.totalorder %s24, 0
      %p86 = por %p84, %p85
      %p87 = scmp.ne.s32.totalorder %s79, %s81
      %p88 = scmp.eq.s32.totalorder %s29, 1
      %p89 = por %p87, %p88
      %p90 = scmp.ne.s32.totalorder %s81, %s82
      %p91 = scmp.eq.s32.totalorder %s29, 0
      %p92 = por %p90, %p91
      %p93 = scmp.ne.s32.totalorder %s81, %s82
      %p94 = scmp.eq.s32.totalorder %s30, 1
      %p95 = por %p93, %p94
      %p97 = scmp.ne.s32.totalorder %s82, %s96
      %p98 = scmp.eq.s32.totalorder %s30, 0
      %p99 = por %p97, %p98
      %s101 = sadd.s32 %s100, 1
      %p104 = scmp.eq.s32.totalorder %s24, 1
      %p105 = scmp.ne.s32.totalorder %s100, %s102
      %p106 = scmp.eq.s32.totalorder %s24, 0
      %p107 = por %p105, %p106
      %p108 = scmp.ne.s32.totalorder %s100, %s102
      %p109 = scmp.eq.s32.totalorder %s29, 1
      %p110 = por %p108, %p109
      %p111 = scmp.ne.s32.totalorder %s102, %s103
      %p112 = scmp.eq.s32.totalorder %s29, 0
      %p113 = por %p111, %p112
      %p114 = scmp.ne.s32.totalorder %s102, %s103
      %p115 = scmp.eq.s32.totalorder %s30, 1
      %p116 = por %p114, %p115
      %p118 = scmp.ne.s32.totalorder %s103, %s117
      %p119 = scmp.eq.s32.totalorder %s30, 0
      %p120 = por %p118, %p119
      %s122 = sadd.s32 %s121, 1
      %p125 = scmp.eq.s32.totalorder %s24, 1
      %p126 = scmp.ne.s32.totalorder %s121, %s123
      %p127 = scmp.eq.s32.totalorder %s24, 0
      %p128 = por %p126, %p127
      %p129 = scmp.ne.s32.totalorder %s121, %s123
      %p130 = scmp.eq.s32.totalorder %s29, 1
      %p131 = por %p129, %p130
      %p132 = scmp.ne.s32.totalorder %s123, %s124
      %p133 = scmp.eq.s32.totalorder %s29, 0
      %p134 = por %p132, %p133
      %p135 = scmp.ne.s32.totalorder %s123, %s124
      %p136 = scmp.eq.s32.totalorder %s30, 1
      %p137 = por %p135, %p136
      %p139 = scmp.ne.s32.totalorder %s124, %s138
      %p140 = scmp.eq.s32.totalorder %s30, 0
      %p141 = por %p139, %p140
      %s143 = sadd.s32 %s142, 1
      %p146 = scmp.eq.s32.totalorder %s24, 1
      %p147 = scmp.ne.s32.totalorder %s142, %s144
      %p148 = scmp.eq.s32.totalorder %s24, 0
      %p149 = por %p147, %p148
      %p150 = scmp.ne.s32.totalorder %s142, %s144
      %p151 = scmp.eq.s32.totalorder %s29, 1
      %p152 = por %p150, %p151
      %p153 = scmp.ne.s32.totalorder %s144, %s145
      %p154 = scmp.eq.s32.totalorder %s29, 0
      %p155 = por %p153, %p154
      %p156 = scmp.ne.s32.totalorder %s144, %s145
      %p157 = scmp.eq.s32.totalorder %s30, 1
      %p158 = por %p156, %p157
      %p160 = scmp.ne.s32.totalorder %s145, %s159
      %p161 = scmp.eq.s32.totalorder %s30, 0
      %p162 = por %p160, %p161
      %s164 = sadd.s32 %s163, 1
      %p167 = scmp.eq.s32.totalorder %s24, 1
      %p168 = scmp.ne.s32.totalorder %s163, %s165
      %p169 = scmp.eq.s32.totalorder %s24, 0
      %p170 = por %p168, %p169
      %p171 = scmp.ne.s32.totalorder %s163, %s165
      %p172 = scmp.eq.s32.totalorder %s29, 1
      %p173 = por %p171, %p172
      %p174 = scmp.ne.s32.totalorder %s165, %s166
      %p175 = scmp.eq.s32.totalorder %s29, 0
      %p176 = por %p174, %p175
      %p177 = scmp.ne.s32.totalorder %s165, %s166
      %p178 = scmp.eq.s32.totalorder %s30, 1
      %p179 = por %p177, %p178
      %p181 = scmp.ne.s32.totalorder %s166, %s180
      %p182 = scmp.eq.s32.totalorder %s30, 0
      %p183 = por %p181, %p182
      %s185 = sadd.s32 %s184, 1
      %p188 = scmp.eq.s32.totalorder %s24, 1
      %p189 = scmp.ne.s32.totalorder %s184, %s186
      %p190 = scmp.eq.s32.totalorder %s24, 0
      %p191 = por %p189, %p190
      %p192 = scmp.ne.s32.totalorder %s184, %s186
      %p193 = scmp.eq.s32.totalorder %s29, 1
      %p194 = por %p192, %p193
      %p195 = scmp.ne.s32.totalorder %s186, %s187
      %p196 = scmp.eq.s32.totalorder %s29, 0
      %p197 = por %p195, %p196
      %p198 = scmp.ne.s32.totalorder %s186, %s187
      %p199 = scmp.eq.s32.totalorder %s30, 1
      %p200 = por %p198, %p199
      %p202 = scmp.ne.s32.totalorder %s187, %s201
      %p203 = scmp.eq.s32.totalorder %s30, 0
      %p204 = por %p202, %p203
      %s206 = sadd.s32 %s205, 1
      %p209 = scmp.eq.s32.totalorder %s24, 1
      %p210 = scmp.ne.s32.totalorder %s205, %s207
      %p211 = scmp.eq.s32.totalorder %s24, 0
      %p212 = por %p210, %p211
      %p213 = scmp.ne.s32.totalorder %s205, %s207
      %p214 = scmp.eq.s32.totalorder %s29, 1
      %p215 = por %p213, %p214
      %p216 = scmp.ne.s32.totalorder %s207, %s208
      %p217 = scmp.eq.s32.totalorder %s29, 0
      %p218 = por %p216, %p217
      %p219 = scmp.ne.s32.totalorder %s207, %s208
      %p220 = scmp.eq.s32.totalorder %s30, 1
      %p221 = por %p219, %p220
      %p223 = scmp.ne.s32.totalorder %s208, %s222
      %p224 = scmp.eq.s32.totalorder %s30, 0
      %p225 = por %p223, %p224
      %s227 = sadd.s32 %s226, 1
      %p230 = scmp.eq.s32.totalorder %s24, 1
      %p231 = scmp.ne.s32.totalorder %s226, %s228
      %p232 = scmp.eq.s32.totalorder %s24, 0
      %p233 = por %p231, %p232
      %p234 = scmp.ne.s32.totalorder %s226, %s228
      %p235 = scmp.eq.s32.totalorder %s29, 1
      %p236 = por %p234, %p235
      %p237 = scmp.ne.s32.totalorder %s228, %s229
      %p238 = scmp.eq.s32.totalorder %s29, 0
      %p239 = por %p237, %p238
      %p240 = scmp.ne.s32.totalorder %s228, %s229
      %p241 = scmp.eq.s32.totalorder %s30, 1
      %p242 = por %p240, %p241
      %p244 = scmp.ne.s32.totalorder %s229, %s243
      %p245 = scmp.eq.s32.totalorder %s30, 0
      %p246 = por %p244, %p245
      %s248 = sadd.s32 %s247, 1
      %p251 = scmp.eq.s32.totalorder %s24, 1
      %p252 = scmp.ne.s32.totalorder %s247, %s249
      %p253 = scmp.eq.s32.totalorder %s24, 0
      %p254 = por %p252, %p253
      %p255 = scmp.ne.s32.totalorder %s247, %s249
      %p256 = scmp.eq.s32.totalorder %s29, 1
      %p257 = por %p255, %p256
      %p258 = scmp.ne.s32.totalorder %s249, %s250
      %p259 = scmp.eq.s32.totalorder %s29, 0
      %p260 = por %p258, %p259
      %p261 = scmp.ne.s32.totalorder %s249, %s250
      %p262 = scmp.eq.s32.totalorder %s30, 1
      %p263 = por %p261, %p262
      %p265 = scmp.ne.s32.totalorder %s250, %s264
      %p266 = scmp.eq.s32.totalorder %s30, 0
      %p267 = por %p265, %p266
      %s269 = sadd.s32 %s268, 1
      %p272 = scmp.eq.s32.totalorder %s24, 1
      %p273 = scmp.ne.s32.totalorder %s268, %s270
      %p274 = scmp.eq.s32.totalorder %s24, 0
      %p275 = por %p273, %p274
      %p276 = scmp.ne.s32.totalorder %s268, %s270
      %p277 = scmp.eq.s32.totalorder %s29, 1
      %p278 = por %p276, %p277
      %p279 = scmp.ne.s32.totalorder %s270, %s271
      %p280 = scmp.eq.s32.totalorder %s29, 0
      %p281 = por %p279, %p280
      %p282 = scmp.ne.s32.totalorder %s270, %s271
      %p283 = scmp.eq.s32.totalorder %s30, 1
      %p284 = por %p282, %p283
      %p286 = scmp.ne.s32.totalorder %s271, %s285
      %p287 = scmp.eq.s32.totalorder %s30, 0
      %p288 = por %p286, %p287
      %s290 = sadd.s32 %s289, 1
      %p293 = scmp.eq.s32.totalorder %s24, 1
      %p294 = scmp.ne.s32.totalorder %s289, %s291
      %p295 = scmp.eq.s32.totalorder %s24, 0
      %p296 = por %p294, %p295
      %p297 = scmp.ne.s32.totalorder %s289, %s291
      %p298 = scmp.eq.s32.totalorder %s29, 1
      %p299 = por %p297, %p298
      %p300 = scmp.ne.s32.totalorder %s291, %s292
      %p301 = scmp.eq.s32.totalorder %s29, 0
      %p302 = por %p300, %p301
      %p303 = scmp.ne.s32.totalorder %s291, %s292
      %p304 = scmp.eq.s32.totalorder %s30, 1
      %p305 = por %p303, %p304
      %p307 = scmp.ne.s32.totalorder %s292, %s306
      %p308 = scmp.eq.s32.totalorder %s30, 0
      %p309 = por %p307, %p308
      %s311 = sadd.s32 %s310, 1
      %p314 = scmp.eq.s32.totalorder %s24, 1
      %p315 = scmp.ne.s32.totalorder %s310, %s312
      %p316 = scmp.eq.s32.totalorder %s24, 0
      %p317 = por %p315, %p316
      %p318 = scmp.ne.s32.totalorder %s310, %s312
      %p319 = scmp.eq.s32.totalorder %s29, 1
      %p320 = por %p318, %p319
      %p321 = scmp.ne.s32.totalorder %s312, %s313
      %p322 = scmp.eq.s32.totalorder %s29, 0
      %p323 = por %p321, %p322
      %p324 = scmp.ne.s32.totalorder %s312, %s313
      %p325 = scmp.eq.s32.totalorder %s30, 1
      %p326 = por %p324, %p325
      %p328 = scmp.ne.s32.totalorder %s313, %s327
      %p329 = scmp.eq.s32.totalorder %s30, 0
      %p330 = por %p328, %p329
      %s332 = sadd.s32 %s331, 1
      %p335 = scmp.eq.s32.totalorder %s24, 1
      %p336 = scmp.ne.s32.totalorder %s331, %s333
      %p337 = scmp.eq.s32.totalorder %s24, 0
      %p338 = por %p336, %p337
      %p339 = scmp.ne.s32.totalorder %s331, %s333
      %p340 = scmp.eq.s32.totalorder %s29, 1
      %p341 = por %p339, %p340
      %p342 = scmp.ne.s32.totalorder %s333, %s334
      %p343 = scmp.eq.s32.totalorder %s29, 0
      %p344 = por %p342, %p343
      %p345 = scmp.ne.s32.totalorder %s333, %s334
      %p346 = scmp.eq.s32.totalorder %s30, 1
      %p347 = por %p345, %p346
      %p349 = scmp.ne.s32.totalorder %s334, %s348
      %p350 = scmp.eq.s32.totalorder %s30, 0
      %p351 = por %p349, %p350
      %s352 = ssub.s32 %s24, %s31
      %p353 = scmp.eq.s32.totalorder %s352, 0
      %s355 = sadd.s32 %s354, 1
      %s356 = scalar_select %p353, %s354, %s355
      %p359 = pneg %p353
      %p360 = scmp.eq.s32.totalorder %s24, 1
      %p361 = por %p359, %p360
      %p362 = scmp.ne.s32.totalorder %s354, %s357
      %p363 = scmp.eq.s32.totalorder %s24, 0
      %p364 = por %p362, %p363
      %p365 = scmp.ne.s32.totalorder %s354, %s357
      %p366 = scmp.eq.s32.totalorder %s29, 1
      %p367 = por %p365, %p366
      %p368 = scmp.ne.s32.totalorder %s357, %s358
      %p369 = scmp.eq.s32.totalorder %s29, 0
      %p370 = por %p368, %p369
      %p371 = scmp.ne.s32.totalorder %s357, %s358
      %p372 = scmp.eq.s32.totalorder %s30, 1
      %p373 = por %p371, %p372
      %p375 = scmp.ne.s32.totalorder %s358, %s374
      %p376 = scmp.eq.s32.totalorder %s30, 0
      %p377 = por %p375, %p376
      %p378 = scmp.le.s32.totalorder 1, %s24
      %p379 = scmp.lt.s32.totalorder %s24, 3
      %p380 = pnand %p378, %p379
      %p381 = pneg %p380
      // Predicated region
      $region9: #{cnn_forward.1} parent=5 // pred_check
        _
      $region10: #{cnn_forward.1} parent=5 // pred_check_branch
        %383 = sbr.rel (%p380) target = $region12
      $region11: #{cnn_forward.1} parent=5 // pred_region
        %s384 = ssub.s32 %s24, 1
        // Predicated region
        $region13: #{cnn_forward.1} parent=11 // pred_check
          %p385 = pneg %p71
        $region14: #{cnn_forward.1} parent=11 // pred_check_branch
          %387 = sbr.rel (%p385) target = $region16
        $region15: #{cnn_forward.1} parent=11 // pred_region
          _
        $region16: #{cnn_forward.1} parent=11 // pred_fallthru
          _
        // Predicated region
        $region17: #{cnn_forward.1} parent=11 // pred_check
          %p388 = pneg %p92
        $region18: #{cnn_forward.1} parent=11 // pred_check_branch
          %390 = sbr.rel (%p388) target = $region20
        $region19: #{cnn_forward.1} parent=11 // pred_region
          _
        $region20: #{cnn_forward.1} parent=11 // pred_fallthru
          _
        // Predicated region
        $region21: #{cnn_forward.1} parent=11 // pred_check
          %p391 = pneg %p113
        $region22: #{cnn_forward.1} parent=11 // pred_check_branch
          %393 = sbr.rel (%p391) target = $region24
        $region23: #{cnn_forward.1} parent=11 // pred_region
          _
        $region24: #{cnn_forward.1} parent=11 // pred_fallthru
          _
        // Predicated region
        $region25: #{cnn_forward.1} parent=11 // pred_check
          %p394 = pneg %p134
        $region26: #{cnn_forward.1} parent=11 // pred_check_branch
          %396 = sbr.rel (%p394) target = $region28
        $region27: #{cnn_forward.1} parent=11 // pred_region
          _
        $region28: #{cnn_forward.1} parent=11 // pred_fallthru
          _
        // Predicated region
        $region29: #{cnn_forward.1} parent=11 // pred_check
          %p397 = pneg %p155
        $region30: #{cnn_forward.1} parent=11 // pred_check_branch
          %399 = sbr.rel (%p397) target = $region32
        $region31: #{cnn_forward.1} parent=11 // pred_region
          _
        $region32: #{cnn_forward.1} parent=11 // pred_fallthru
          _
        // Predicated region
        $region33: #{cnn_forward.1} parent=11 // pred_check
          %p400 = pneg %p176
        $region34: #{cnn_forward.1} parent=11 // pred_check_branch
          %402 = sbr.rel (%p400) target = $region36
        $region35: #{cnn_forward.1} parent=11 // pred_region
          _
        $region36: #{cnn_forward.1} parent=11 // pred_fallthru
          _
        // Predicated region
        $region37: #{cnn_forward.1} parent=11 // pred_check
          %p403 = pneg %p197
        $region38: #{cnn_forward.1} parent=11 // pred_check_branch
          %405 = sbr.rel (%p403) target = $region40
        $region39: #{cnn_forward.1} parent=11 // pred_region
          _
        $region40: #{cnn_forward.1} parent=11 // pred_fallthru
          _
        // Predicated region
        $region41: #{cnn_forward.1} parent=11 // pred_check
          %p406 = pneg %p218
        $region42: #{cnn_forward.1} parent=11 // pred_check_branch
          %408 = sbr.rel (%p406) target = $region44
        $region43: #{cnn_forward.1} parent=11 // pred_region
          _
        $region44: #{cnn_forward.1} parent=11 // pred_fallthru
          _
        // Predicated region
        $region45: #{cnn_forward.1} parent=11 // pred_check
          %p409 = pneg %p239
        $region46: #{cnn_forward.1} parent=11 // pred_check_branch
          %411 = sbr.rel (%p409) target = $region48
        $region47: #{cnn_forward.1} parent=11 // pred_region
          _
        $region48: #{cnn_forward.1} parent=11 // pred_fallthru
          _
        // Predicated region
        $region49: #{cnn_forward.1} parent=11 // pred_check
          %p412 = pneg %p260
        $region50: #{cnn_forward.1} parent=11 // pred_check_branch
          %414 = sbr.rel (%p412) target = $region52
        $region51: #{cnn_forward.1} parent=11 // pred_region
          _
        $region52: #{cnn_forward.1} parent=11 // pred_fallthru
          _
        // Predicated region
        $region53: #{cnn_forward.1} parent=11 // pred_check
          %p415 = pneg %p281
        $region54: #{cnn_forward.1} parent=11 // pred_check_branch
          %417 = sbr.rel (%p415) target = $region56
        $region55: #{cnn_forward.1} parent=11 // pred_region
          _
        $region56: #{cnn_forward.1} parent=11 // pred_fallthru
          _
        // Predicated region
        $region57: #{cnn_forward.1} parent=11 // pred_check
          %p418 = pneg %p302
        $region58: #{cnn_forward.1} parent=11 // pred_check_branch
          %420 = sbr.rel (%p418) target = $region60
        $region59: #{cnn_forward.1} parent=11 // pred_region
          _
        $region60: #{cnn_forward.1} parent=11 // pred_fallthru
          _
        // Predicated region
        $region61: #{cnn_forward.1} parent=11 // pred_check
          %p421 = pneg %p323
        $region62: #{cnn_forward.1} parent=11 // pred_check_branch
          %423 = sbr.rel (%p421) target = $region64
        $region63: #{cnn_forward.1} parent=11 // pred_region
          _
        $region64: #{cnn_forward.1} parent=11 // pred_fallthru
          _
        // Predicated region
        $region65: #{cnn_forward.1} parent=11 // pred_check
          %p424 = pneg %p344
        $region66: #{cnn_forward.1} parent=11 // pred_check_branch
          %426 = sbr.rel (%p424) target = $region68
        $region67: #{cnn_forward.1} parent=11 // pred_region
          _
        $region68: #{cnn_forward.1} parent=11 // pred_fallthru
          _
      $region12: #{cnn_forward.1} parent=5 // pred_fallthru
        _
      %p427 = scmp.lt.s32.totalorder %s24, 2
      // Predicated region
      $region69: #{cnn_forward.1} parent=5 // pred_check
        %p428 = pneg %p427
      $region70: #{cnn_forward.1} parent=5 // pred_check_branch
        %430 = sbr.rel (%p428) target = $region72
      $region71: #{cnn_forward.1} parent=5 // pred_region
        // Predicated region
        $region73: #{cnn_forward.1} parent=71 // pred_check
          %p431 = pneg %p44
        $region74: #{cnn_forward.1} parent=71 // pred_check_branch
          %433 = sbr.rel (%p431) target = $region76
        $region75: #{cnn_forward.1} parent=71 // pred_region
          %p434 = scmp.lt.s32.totalorder %s24, 1
          %s435 = scalar_select %p434, %s24, 1
          %s436 = smul.addr %s435, 4
          %s437 = smul.addr %s436, 8
          %s438 = scalar_lea.vmem %s0, %s437
        $region76: #{cnn_forward.1} parent=71 // pred_fallthru
          _
      $region72: #{cnn_forward.1} parent=5 // pred_fallthru
        _
      %p439 = scmp.le.s32.totalorder 1, %s24
      %p440 = scmp.lt.s32.totalorder %s24, 3
      %p441 = pnand %p439, %p440
      %p442 = pneg %p441
      // Predicated region
      $region77: #{cnn_forward.1} parent=5 // pred_check
        _
      $region78: #{cnn_forward.1} parent=5 // pred_check_branch
        %444 = sbr.rel (%p441) target = $region80
      $region79: #{cnn_forward.1} parent=5 // pred_region
        %s445 = ssub.s32 %s24, 1
        %p446 = scmp.lt.s32.totalorder %s29, 1
        %s447 = scalar_select %p446, %s29, 1
        %s448 = smul.addr %s447, 4
        %s449 = smul.addr %s448, 8
        %s450 = scalar_lea.vmem %s0, %s449
        %p451 = pneg %p50
        %p452 = pneg %p47
        %p453 = pneg %p71
        %p454 = pneg %p68
        %p455 = pneg %p92
        %p456 = pneg %p89
        %p457 = pneg %p113
        %p458 = pneg %p110
        %p459 = pneg %p134
        %p460 = pneg %p131
        %p461 = pneg %p155
        %p462 = pneg %p152
        %p463 = pneg %p176
        %p464 = pneg %p173
        %p465 = pneg %p197
        %p466 = pneg %p194
        %p467 = pneg %p218
        %p468 = pneg %p215
        %p469 = pneg %p239
        %p470 = pneg %p236
        %p471 = pneg %p260
        %p472 = pneg %p257
        %p473 = pneg %p281
        %p474 = pneg %p278
        %p475 = pneg %p302
        %p476 = pneg %p299
        %p477 = pneg %p323
        %p478 = pneg %p320
        %p479 = pneg %p344
        %p480 = pneg %p341
        %p481 = pneg %p370
        %p482 = pneg %p367
        %s483 = sand.u32 %s357, 1
        %s484 = scalar_lea.sflag [#allocation3], %s483
        %s485 = sand.u32 %s357, 1
        %s486 = scalar_lea.vmem [#allocation2], %s485
        %p487 = scmp.lt.s32.totalorder %s29, 1
        %s488 = scalar_select %p487, %s29, 1
        %s489 = smul.addr %s488, 4
        %s490 = smul.addr %s489, 8
        %s491 = scalar_lea.vmem %s0, %s490
        %v492 = vld [vmem:[%s491] sm:$0xff]
        %v493 = vld [vmem:[%s491 + $0x8] sm:$0xff]
        %v494 = vld [vmem:[%s491 + $0x10] sm:$0xff]
        %v495 = vld [vmem:[%s491 + $0x18] sm:$0xf]
        %v496 = vld [vmem:[%s1] sm:$0xff]
        %v497 = vld [vmem:[%s1 + $0x8] sm:$0xff]
        %v498 = vld [vmem:[%s1 + $0x10] sm:$0xff]
        %v499 = vld [vmem:[%s1 + $0x18] sm:$0xff]
        %v500 = vld [vmem:[%s1 + $0x20] sm:$0xff]
        %v501 = vld [vmem:[%s1 + $0x28] sm:$0xff]
        %v502 = vld [vmem:[%s1 + $0x30] sm:$0xf]
        %v503 = vld [vmem:[%s1 + $0x38] sm:$0xf]
        %s504 = scalar_lea.vmem %s1, 64
        %v505 = vld [vmem:[%s504] sm:$0xff]
        %v506 = vld [vmem:[%s504 + $0x8] sm:$0xff]
        %v507 = vld [vmem:[%s504 + $0x10] sm:$0xff]
        %v508 = vld [vmem:[%s504 + $0x18] sm:$0xff]
        %v509 = vld [vmem:[%s504 + $0x20] sm:$0xff]
        %v510 = vld [vmem:[%s504 + $0x28] sm:$0xff]
        %v511 = vld [vmem:[%s504 + $0x30] sm:$0xf]
        %v512 = vld [vmem:[%s504 + $0x38] sm:$0xf]
        %vm517 = vcmask 1046528
        %v518 = vrot.slane %v492, 1
        %v519 = vrot.slane %v493, 1
        %v520 = vsel %vm517, %v518, %v519
        %v521 = vrot.slane %v494, 1
        %v522 = vsel %vm517, %v519, %v521
        %v523 = vrot.slane %v495, 1
        %v524 = vsel %vm517, %v521, %v523
        %vm525 = vcmask 228352
        %v526 = vsel %vm525, %v520, 0
        %v528 = vsel %vm525, %v522, 0
        %v530 = vsel %vm525, %v524, 0
        %v532 = vsel %vm525, %v523, 0
        %vm534 = vcmask 1043456
        %v536 = vsel %vm534, %v511, 0
        %v539 = vsel %vm534, %v512, 0
        %541 = vmatpush.msra.mxu0 0.0
        %542 = vmatpush.msra.mxu0 0.0
        %543 = vmatpush.msra.mxu0 0.0
        %544 = vmatpush.msra.mxu0 0.0
        %545 = vmatpush.msra.mxu0 0.0
        %546 = vmatpush.msra.mxu0 0.0
        %547 = vmatpush.msra.mxu0 0.0
        %548 = vmatpush.msra.mxu0 0.0
        %549 = vmatpush.msra.mxu0 0.0
        %550 = vmatpush.msra.mxu0 0.0
        %551 = vmatpush.msra.mxu0 0.0
        %552 = vmatpush.msra.mxu0 0.0
        %553 = vmatpush.msra.mxu0 %v536
        %554 = vmatpush.msra.mxu0 %v509
        %555 = vmatpush.msra.mxu0 %v507
        %556 = vmatpush.msra.mxu0 %v505
        %557 = vmatmul.f32.gmra.mxu0 %v526
        %v558 = vpop.f32.mrf.mxu0
        %v559 = vadd.f32 0.0, %v558
        %560 = vmatmul.f32.gmra.mxu0 %v528
        %v561 = vpop.f32.mrf.mxu0
        %v562 = vadd.f32 0.0, %v561
        %563 = vmatmul.f32.gmra.mxu0 %v530
        %v564 = vpop.f32.mrf.mxu0
        %v565 = vadd.f32 0.0, %v564
        %566 = vmatmul.f32.gmra.mxu0 %v532
        %v567 = vpop.f32.mrf.mxu0
        %v568 = vadd.f32 0.0, %v567
        %569 = vdwg.mxu0
        %570 = vmatpush.msra.mxu0 0.0
        %571 = vmatpush.msra.mxu0 0.0
        %572 = vmatpush.msra.mxu0 0.0
        %573 = vmatpush.msra.mxu0 0.0
        %574 = vmatpush.msra.mxu0 0.0
        %575 = vmatpush.msra.mxu0 0.0
        %576 = vmatpush.msra.mxu0 0.0
        %577 = vmatpush.msra.mxu0 0.0
        %578 = vmatpush.msra.mxu0 0.0
        %579 = vmatpush.msra.mxu0 0.0
        %580 = vmatpush.msra.mxu0 0.0
        %581 = vmatpush.msra.mxu0 0.0
        %582 = vmatpush.msra.mxu0 %v539
        %583 = vmatpush.msra.mxu0 %v510
        %584 = vmatpush.msra.mxu0 %v508
        %585 = vmatpush.msra.mxu0 %v506
        %586 = vmatmul.f32.gmra.mxu0 %v526
        %v587 = vpop.f32.mrf.mxu0
        %v588 = vadd.f32 0.0, %v587
        %589 = vmatmul.f32.gmra.mxu0 %v528
        %v590 = vpop.f32.mrf.mxu0
        %v591 = vadd.f32 0.0, %v590
        %592 = vmatmul.f32.gmra.mxu0 %v530
        %v593 = vpop.f32.mrf.mxu0
        %v594 = vadd.f32 0.0, %v593
        %595 = vmatmul.f32.gmra.mxu0 %v532
        %v596 = vpop.f32.mrf.mxu0
        %v597 = vadd.f32 0.0, %v596
        %598 = vdwg.mxu0
        %v599 = vsel %vm525, %v492, 0
        %v601 = vsel %vm525, %v493, 0
        %v603 = vsel %vm525, %v494, 0
        %v605 = vsel %vm525, %v495, 0
        %v608 = vsel %vm534, %v502, 0
        %v611 = vsel %vm534, %v503, 0
        %613 = vmatpush.msra.mxu0 0.0
        %614 = vmatpush.msra.mxu0 0.0
        %615 = vmatpush.msra.mxu0 0.0
        %616 = vmatpush.msra.mxu0 0.0
        %617 = vmatpush.msra.mxu0 0.0
        %618 = vmatpush.msra.mxu0 0.0
        %619 = vmatpush.msra.mxu0 0.0
        %620 = vmatpush.msra.mxu0 0.0
        %621 = vmatpush.msra.mxu0 0.0
        %622 = vmatpush.msra.mxu0 0.0
        %623 = vmatpush.msra.mxu0 0.0
        %624 = vmatpush.msra.mxu0 0.0
        %625 = vmatpush.msra.mxu0 %v608
        %626 = vmatpush.msra.mxu0 %v500
        %627 = vmatpush.msra.mxu0 %v498
        %628 = vmatpush.msra.mxu0 %v496
        %629 = vmatmul.f32.gmra.mxu0 %v599
        %v630 = vpop.f32.mrf.mxu0
        %v631 = vadd.f32 %v559, %v630
        %632 = vmatmul.f32.gmra.mxu0 %v601
        %v633 = vpop.f32.mrf.mxu0
        %v634 = vadd.f32 %v562, %v633
        %635 = vmatmul.f32.gmra.mxu0 %v603
        %v636 = vpop.f32.mrf.mxu0
        %v637 = vadd.f32 %v565, %v636
        %638 = vmatmul.f32.gmra.mxu0 %v605
        %v639 = vpop.f32.mrf.mxu0
        %v640 = vadd.f32 %v568, %v639
        %641 = vdwg.mxu0
        %642 = vmatpush.msra.mxu0 0.0
        %643 = vmatpush.msra.mxu0 0.0
        %644 = vmatpush.msra.mxu0 0.0
        %645 = vmatpush.msra.mxu0 0.0
        %646 = vmatpush.msra.mxu0 0.0
        %647 = vmatpush.msra.mxu0 0.0
        %648 = vmatpush.msra.mxu0 0.0
        %649 = vmatpush.msra.mxu0 0.0
        %650 = vmatpush.msra.mxu0 0.0
        %651 = vmatpush.msra.mxu0 0.0
        %652 = vmatpush.msra.mxu0 0.0
        %653 = vmatpush.msra.mxu0 0.0
        %654 = vmatpush.msra.mxu0 %v611
        %655 = vmatpush.msra.mxu0 %v501
        %656 = vmatpush.msra.mxu0 %v499
        %657 = vmatpush.msra.mxu0 %v497
        %658 = vmatmul.f32.gmra.mxu0 %v599
        %v659 = vpop.f32.mrf.mxu0
        %v660 = vadd.f32 %v588, %v659
        %661 = vmatmul.f32.gmra.mxu0 %v601
        %v662 = vpop.f32.mrf.mxu0
        %v663 = vadd.f32 %v591, %v662
        %664 = vmatmul.f32.gmra.mxu0 %v603
        %v665 = vpop.f32.mrf.mxu0
        %v666 = vadd.f32 %v594, %v665
        %667 = vmatmul.f32.gmra.mxu0 %v605
        %v668 = vpop.f32.mrf.mxu0
        %v669 = vadd.f32 %v597, %v668
        %670 = vdwg.mxu0
        %s671 = scalar_lea.vmem %s1, 128
        %v672 = vld [vmem:[%s671] sm:$0xff]
        %v673 = vld [vmem:[%s671 + $0x8] sm:$0xff]
        %v674 = vld [vmem:[%s671 + $0x10] sm:$0xff]
        %v675 = vld [vmem:[%s671 + $0x18] sm:$0xff]
        %v676 = vld [vmem:[%s671 + $0x20] sm:$0xff]
        %v677 = vld [vmem:[%s671 + $0x28] sm:$0xff]
        %v678 = vld [vmem:[%s671 + $0x30] sm:$0xf]
        %v679 = vld [vmem:[%s671 + $0x38] sm:$0xf]
        %vm680 = vcmask 1045504
        %v681 = vrot.slane %v492, 2
        %v682 = vrot.slane %v493, 2
        %v683 = vsel %vm680, %v681, %v682
        %v684 = vrot.slane %v494, 2
        %v685 = vsel %vm680, %v682, %v684
        %v686 = vrot.slane %v495, 2
        %v687 = vsel %vm680, %v684, %v686
        %v688 = vsel %vm525, %v683, 0
        %v690 = vsel %vm525, %v685, 0
        %v692 = vsel %vm525, %v687, 0
        %v694 = vsel %vm525, %v686, 0
        %v697 = vsel %vm534, %v678, 0
        %v700 = vsel %vm534, %v679, 0
        %702 = vmatpush.msra.mxu0 0.0
        %703 = vmatpush.msra.mxu0 0.0
        %704 = vmatpush.msra.mxu0 0.0
        %705 = vmatpush.msra.mxu0 0.0
        %706 = vmatpush.msra.mxu0 0.0
        %707 = vmatpush.msra.mxu0 0.0
        %708 = vmatpush.msra.mxu0 0.0
        %709 = vmatpush.msra.mxu0 0.0
        %710 = vmatpush.msra.mxu0 0.0
        %711 = vmatpush.msra.mxu0 0.0
        %712 = vmatpush.msra.mxu0 0.0
        %713 = vmatpush.msra.mxu0 0.0
        %714 = vmatpush.msra.mxu0 %v697
        %715 = vmatpush.msra.mxu0 %v676
        %716 = vmatpush.msra.mxu0 %v674
        %717 = vmatpush.msra.mxu0 %v672
        %718 = vmatmul.f32.gmra.mxu0 %v688
        %v719 = vpop.f32.mrf.mxu0
        %v720 = vadd.f32 0.0, %v719
        %721 = vmatmul.f32.gmra.mxu0 %v690
        %v722 = vpop.f32.mrf.mxu0
        %v723 = vadd.f32 0.0, %v722
        %724 = vmatmul.f32.gmra.mxu0 %v692
        %v725 = vpop.f32.mrf.mxu0
        %v726 = vadd.f32 0.0, %v725
        %727 = vmatmul.f32.gmra.mxu0 %v694
        %v728 = vpop.f32.mrf.mxu0
        %v729 = vadd.f32 0.0, %v728
        %730 = vdwg.mxu0
        %731 = vmatpush.msra.mxu0 0.0
        %732 = vmatpush.msra.mxu0 0.0
        %733 = vmatpush.msra.mxu0 0.0
        %734 = vmatpush.msra.mxu0 0.0
        %735 = vmatpush.msra.mxu0 0.0
        %736 = vmatpush.msra.mxu0 0.0
        %737 = vmatpush.msra.mxu0 0.0
        %738 = vmatpush.msra.mxu0 0.0
        %739 = vmatpush.msra.mxu0 0.0
        %740 = vmatpush.msra.mxu0 0.0
        %741 = vmatpush.msra.mxu0 0.0
        %742 = vmatpush.msra.mxu0 0.0
        %743 = vmatpush.msra.mxu0 %v700
        %744 = vmatpush.msra.mxu0 %v677
        %745 = vmatpush.msra.mxu0 %v675
        %746 = vmatpush.msra.mxu0 %v673
        %747 = vmatmul.f32.gmra.mxu0 %v688
        %v748 = vpop.f32.mrf.mxu0
        %v749 = vadd.f32 0.0, %v748
        %750 = vmatmul.f32.gmra.mxu0 %v690
        %v751 = vpop.f32.mrf.mxu0
        %v752 = vadd.f32 0.0, %v751
        %753 = vmatmul.f32.gmra.mxu0 %v692
        %v754 = vpop.f32.mrf.mxu0
        %v755 = vadd.f32 0.0, %v754
        %756 = vmatmul.f32.gmra.mxu0 %v694
        %v757 = vpop.f32.mrf.mxu0
        %v758 = vadd.f32 0.0, %v757
        %759 = vdwg.mxu0
        %v760 = vadd.f32 %v631, %v720
        %v761 = vadd.f32 %v660, %v749
        %v762 = vadd.f32 %v634, %v723
        %v763 = vadd.f32 %v663, %v752
        %v764 = vadd.f32 %v637, %v726
        %v765 = vadd.f32 %v666, %v755
        %v766 = vadd.f32 %v640, %v729
        %v767 = vadd.f32 %v669, %v758
        %v768 = vld [vmem:[%s2] sm:$0x3]
        %v770 = vperm.slane %v768, 0
        %v771 = vperm.slane %v768, 1
        %v774 = vadd.f32 %v760, %v770
        %v775 = vadd.f32 %v761, %v771
        %v776 = vadd.f32 %v762, %v770
        %v777 = vadd.f32 %v763, %v771
        %v778 = vadd.f32 %v764, %v770
        %v779 = vadd.f32 %v765, %v771
        %v780 = vadd.f32 %v766, %v770
        %v781 = vadd.f32 %v767, %v771
        %v782 = vmax.f32 %v774, 0.0
        %v783 = vmax.f32 %v775, 0.0
        %v784 = vmax.f32 %v776, 0.0
        %v785 = vmax.f32 %v777, 0.0
        %v786 = vmax.f32 %v778, 0.0
        %v787 = vmax.f32 %v779, 0.0
        %v788 = vmax.f32 %v780, 0.0
        %v789 = vmax.f32 %v781, 0.0
        %v790 = vld [vmem:[%s3] sm:$0xff]
        %v791 = vld [vmem:[%s3 + $0x8] sm:$0x1f]
        %vm792 = vcmask 211968
        %v794 = vsel %vm792, %v790, 0
        %v797 = vsel %vm792, %v791, 0
        %vm799 = vcmask 1041408
        %v801 = vsel %vm799, %v788, 0
        %v804 = vsel %vm799, %v789, 0
        %806 = vmatpush.msra.mxu0 0.0
        %807 = vmatpush.msra.mxu0 0.0
        %808 = vmatpush.msra.mxu0 0.0
        %809 = vmatpush.msra.mxu0 0.0
        %810 = vmatpush.msra.mxu0 0.0
        %811 = vmatpush.msra.mxu0 0.0
        %812 = vmatpush.msra.mxu0 0.0
        %813 = vmatpush.msra.mxu0 0.0
        %814 = vmatpush.msra.mxu0 0.0
        %815 = vmatpush.msra.mxu0 0.0
        %816 = vmatpush.msra.mxu0 0.0
        %817 = vmatpush.msra.mxu0 0.0
        %818 = vmatpush.msra.mxu0 %v801
        %819 = vmatpush.msra.mxu0 %v786
        %820 = vmatpush.msra.mxu0 %v784
        %821 = vmatpush.msra.mxu0 %v782
        %822 = vmatmul.f32.gmra.mxu0 %v794
        %v823 = vpop.f32.mrf.mxu0
        %v824 = vadd.f32 0.0, %v823
        %825 = vmatmul.f32.gmra.mxu0 %v797
        %v826 = vpop.f32.mrf.mxu0
        %v827 = vadd.f32 0.0, %v826
        %828 = vdwg.mxu0
        %829 = vmatpush.msra.mxu0 0.0
        %830 = vmatpush.msra.mxu0 0.0
        %831 = vmatpush.msra.mxu0 0.0
        %832 = vmatpush.msra.mxu0 0.0
        %833 = vmatpush.msra.mxu0 0.0
        %834 = vmatpush.msra.mxu0 0.0
        %835 = vmatpush.msra.mxu0 0.0
        %836 = vmatpush.msra.mxu0 0.0
        %837 = vmatpush.msra.mxu0 0.0
        %838 = vmatpush.msra.mxu0 0.0
        %839 = vmatpush.msra.mxu0 0.0
        %840 = vmatpush.msra.mxu0 0.0
        %841 = vmatpush.msra.mxu0 %v804
        %842 = vmatpush.msra.mxu0 %v787
        %843 = vmatpush.msra.mxu0 %v785
        %844 = vmatpush.msra.mxu0 %v783
        %845 = vmatmul.f32.gmra.mxu0 %v794
        %v846 = vpop.f32.mrf.mxu0
        %v847 = vadd.f32 0.0, %v846
        %848 = vmatmul.f32.gmra.mxu0 %v797
        %v849 = vpop.f32.mrf.mxu0
        %v850 = vadd.f32 0.0, %v849
        %851 = vdwg.mxu0
        %s852 = scalar_lea.vmem %s3, 16
        %v853 = vld [vmem:[%s852] sm:$0xff]
        %v854 = vld [vmem:[%s852 + $0x8] sm:$0x1f]
        %v856 = vsel %vm792, %v853, 0
        %v859 = vsel %vm792, %v854, 0
        %861 = vmatpush.msra.mxu0 0.0
        %862 = vmatpush.msra.mxu0 0.0
        %863 = vmatpush.msra.mxu0 0.0
        %864 = vmatpush.msra.mxu0 0.0
        %865 = vmatpush.msra.mxu0 0.0
        %866 = vmatpush.msra.mxu0 0.0
        %867 = vmatpush.msra.mxu0 0.0
        %868 = vmatpush.msra.mxu0 0.0
        %869 = vmatpush.msra.mxu0 0.0
        %870 = vmatpush.msra.mxu0 0.0
        %871 = vmatpush.msra.mxu0 0.0
        %872 = vmatpush.msra.mxu0 0.0
        %873 = vmatpush.msra.mxu0 %v801
        %874 = vmatpush.msra.mxu0 %v786
        %875 = vmatpush.msra.mxu0 %v784
        %876 = vmatpush.msra.mxu0 %v782
        %877 = vmatmul.f32.gmra.mxu0 %v856
        %v878 = vpop.f32.mrf.mxu0
        %v879 = vadd.f32 0.0, %v878
        %880 = vmatmul.f32.gmra.mxu0 %v859
        %v881 = vpop.f32.mrf.mxu0
        %v882 = vadd.f32 0.0, %v881
        %883 = vdwg.mxu0
        %884 = vmatpush.msra.mxu0 0.0
        %885 = vmatpush.msra.mxu0 0.0
        %886 = vmatpush.msra.mxu0 0.0
        %887 = vmatpush.msra.mxu0 0.0
        %888 = vmatpush.msra.mxu0 0.0
        %889 = vmatpush.msra.mxu0 0.0
        %890 = vmatpush.msra.mxu0 0.0
        %891 = vmatpush.msra.mxu0 0.0
        %892 = vmatpush.msra.mxu0 0.0
        %893 = vmatpush.msra.mxu0 0.0
        %894 = vmatpush.msra.mxu0 0.0
        %895 = vmatpush.msra.mxu0 0.0
        %896 = vmatpush.msra.mxu0 %v804
        %897 = vmatpush.msra.mxu0 %v787
        %898 = vmatpush.msra.mxu0 %v785
        %899 = vmatpush.msra.mxu0 %v783
        %900 = vmatmul.f32.gmra.mxu0 %v856
        %v901 = vpop.f32.mrf.mxu0
        %v902 = vadd.f32 0.0, %v901
        %903 = vmatmul.f32.gmra.mxu0 %v859
        %v904 = vpop.f32.mrf.mxu0
        %v905 = vadd.f32 0.0, %v904
        %906 = vdwg.mxu0
        %v907 = vmax.f32 %v824, %v879
        %v908 = vmax.f32 %v847, %v902
        %v909 = vmax.f32 %v827, %v882
        %v910 = vmax.f32 %v850, %v905
        %v911 = vld [vmem:[%s4] sm:$0xff]
        %v912 = vld [vmem:[%s4 + $0x8] sm:$0xff]
        %v913 = vld [vmem:[%s4 + $0x10] sm:$0xff]
        %v914 = vld [vmem:[%s4 + $0x18] sm:$0xff]
        %v915 = vld [vmem:[%s4 + $0x20] sm:$0xff]
        %v916 = vld [vmem:[%s4 + $0x28] sm:$0xff]
        %v917 = vld [vmem:[%s4 + $0x30] sm:$0xff]
        %v918 = vld [vmem:[%s4 + $0x38] sm:$0xff]
        %v919 = vld [vmem:[%s4 + $0x40] sm:$0xff]
        %v920 = vld [vmem:[%s4 + $0x48] sm:$0xff]
        %v921 = vld [vmem:[%s4 + $0x50] sm:$0xff]
        %v922 = vld [vmem:[%s4 + $0x58] sm:$0xff]
        %v923 = vld [vmem:[%s4 + $0x60] sm:$0xff]
        %v924 = vld [vmem:[%s4 + $0x68] sm:$0xff]
        %v925 = vld [vmem:[%s4 + $0x70] sm:$0xff]
        %v926 = vld [vmem:[%s4 + $0x78] sm:$0xff]
        %v927 = vld [vmem:[%s4 + $0x80] sm:$0xff]
        %v928 = vld [vmem:[%s4 + $0x88] sm:$0xff]
        %v929 = vld [vmem:[%s4 + $0x90] sm:$0xff]
        %v930 = vld [vmem:[%s4 + $0x98] sm:$0xff]
        %v931 = vld [vmem:[%s4 + $0xa0] sm:$0xff]
        %v932 = vld [vmem:[%s4 + $0xa8] sm:$0xff]
        %v933 = vld [vmem:[%s4 + $0xb0] sm:$0xff]
        %v934 = vld [vmem:[%s4 + $0xb8] sm:$0xff]
        %v935 = vld [vmem:[%s4 + $0xc0] sm:$0xff]
        %v936 = vld [vmem:[%s4 + $0xc8] sm:$0xff]
        %vm937 = vcmask 654336
        %v939 = vsel %vm937, %v908, 0
        %v942 = vsel %vm937, %v910, 0
        %944 = vmatpush.msra.mxu0 %v926
        %945 = vmatpush.msra.mxu0 %v925
        %946 = vmatpush.msra.mxu0 %v924
        %947 = vmatpush.msra.mxu0 %v923
        %948 = vmatpush.msra.mxu0 %v922
        %949 = vmatpush.msra.mxu0 %v921
        %950 = vmatpush.msra.mxu0 %v920
        %951 = vmatpush.msra.mxu0 %v919
        %952 = vmatpush.msra.mxu0 %v918
        %953 = vmatpush.msra.mxu0 %v917
        %954 = vmatpush.msra.mxu0 %v916
        %955 = vmatpush.msra.mxu0 %v915
        %956 = vmatpush.msra.mxu0 %v914
        %957 = vmatpush.msra.mxu0 %v913
        %958 = vmatpush.msra.mxu0 %v912
        %959 = vmatpush.msra.mxu0 %v911
        %960 = vmatmul.f32.gmra.mxu0 %v907
        %v961 = vpop.f32.mrf.mxu0
        %v962 = vadd.f32 0.0, %v961
        %963 = vmatmul.f32.gmra.mxu0 %v909
        %v964 = vpop.f32.mrf.mxu0
        %v965 = vadd.f32 0.0, %v964
        %966 = vdwg.mxu0
        %967 = vmatpush.msra.mxu0 0.0
        %968 = vmatpush.msra.mxu0 0.0
        %969 = vmatpush.msra.mxu0 0.0
        %970 = vmatpush.msra.mxu0 0.0
        %971 = vmatpush.msra.mxu0 0.0
        %972 = vmatpush.msra.mxu0 0.0
        %973 = vmatpush.msra.mxu0 %v936
        %974 = vmatpush.msra.mxu0 %v935
        %975 = vmatpush.msra.mxu0 %v934
        %976 = vmatpush.msra.mxu0 %v933
        %977 = vmatpush.msra.mxu0 %v932
        %978 = vmatpush.msra.mxu0 %v931
        %979 = vmatpush.msra.mxu0 %v930
        %980 = vmatpush.msra.mxu0 %v929
        %981 = vmatpush.msra.mxu0 %v928
        %982 = vmatpush.msra.mxu0 %v927
        %983 = vmatmul.f32.gmra.mxu0 %v939
        %v984 = vpop.f32.mrf.mxu0
        %v985 = vadd.f32 %v962, %v984
        %986 = vmatmul.f32.gmra.mxu0 %v942
        %v987 = vpop.f32.mrf.mxu0
        %v988 = vadd.f32 %v965, %v987
        %989 = vdwg.mxu0
        %s990 = scalar_lea.vmem %s4, 208
        %v991 = vld [vmem:[%s990] sm:$0xff]
        %v992 = vld [vmem:[%s990 + $0x8] sm:$0xff]
        %v993 = vld [vmem:[%s990 + $0x10] sm:$0xff]
        %v994 = vld [vmem:[%s990 + $0x18] sm:$0xff]
        %v995 = vld [vmem:[%s990 + $0x20] sm:$0xff]
        %v996 = vld [vmem:[%s990 + $0x28] sm:$0xff]
        %v997 = vld [vmem:[%s990 + $0x30] sm:$0xff]
        %v998 = vld [vmem:[%s990 + $0x38] sm:$0xff]
        %v999 = vld [vmem:[%s990 + $0x40] sm:$0xff]
        %v1000 = vld [vmem:[%s990 + $0x48] sm:$0xff]
        %v1001 = vld [vmem:[%s990 + $0x50] sm:$0xff]
        %v1002 = vld [vmem:[%s990 + $0x58] sm:$0xff]
        %v1003 = vld [vmem:[%s990 + $0x60] sm:$0xff]
        %v1004 = vld [vmem:[%s990 + $0x68] sm:$0xff]
        %v1005 = vld [vmem:[%s990 + $0x70] sm:$0xff]
        %v1006 = vld [vmem:[%s990 + $0x78] sm:$0xff]
        %v1007 = vld [vmem:[%s990 + $0x80] sm:$0xff]
        %v1008 = vld [vmem:[%s990 + $0x88] sm:$0xff]
        %v1009 = vld [vmem:[%s990 + $0x90] sm:$0xff]
        %v1010 = vld [vmem:[%s990 + $0x98] sm:$0xff]
        %v1011 = vld [vmem:[%s990 + $0xa0] sm:$0xff]
        %v1012 = vld [vmem:[%s990 + $0xa8] sm:$0xff]
        %v1013 = vld [vmem:[%s990 + $0xb0] sm:$0xff]
        %v1014 = vld [vmem:[%s990 + $0xb8] sm:$0xff]
        %v1015 = vld [vmem:[%s990 + $0xc0] sm:$0xff]
        %v1016 = vld [vmem:[%s990 + $0xc8] sm:$0xff]
        %1017 = vmatpush.msra.mxu0 %v1006
        %1018 = vmatpush.msra.mxu0 %v1005
        %1019 = vmatpush.msra.mxu0 %v1004
        %1020 = vmatpush.msra.mxu0 %v1003
        %1021 = vmatpush.msra.mxu0 %v1002
        %1022 = vmatpush.msra.mxu0 %v1001
        %1023 = vmatpush.msra.mxu0 %v1000
        %1024 = vmatpush.msra.mxu0 %v999
        %1025 = vmatpush.msra.mxu0 %v998
        %1026 = vmatpush.msra.mxu0 %v997
        %1027 = vmatpush.msra.mxu0 %v996
        %1028 = vmatpush.msra.mxu0 %v995
        %1029 = vmatpush.msra.mxu0 %v994
        %1030 = vmatpush.msra.mxu0 %v993
        %1031 = vmatpush.msra.mxu0 %v992
        %1032 = vmatpush.msra.mxu0 %v991
        %1033 = vmatmul.f32.gmra.mxu0 %v907
        %v1034 = vpop.f32.mrf.mxu0
        %v1035 = vadd.f32 0.0, %v1034
        %1036 = vmatmul.f32.gmra.mxu0 %v909
        %v1037 = vpop.f32.mrf.mxu0
        %v1038 = vadd.f32 0.0, %v1037
        %1039 = vdwg.mxu0
        %1040 = vmatpush.msra.mxu0 0.0
        %1041 = vmatpush.msra.mxu0 0.0
        %1042 = vmatpush.msra.mxu0 0.0
        %1043 = vmatpush.msra.mxu0 0.0
        %1044 = vmatpush.msra.mxu0 0.0
        %1045 = vmatpush.msra.mxu0 0.0
        %1046 = vmatpush.msra.mxu0 %v1016
        %1047 = vmatpush.msra.mxu0 %v1015
        %1048 = vmatpush.msra.mxu0 %v1014
        %1049 = vmatpush.msra.mxu0 %v1013
        %1050 = vmatpush.msra.mxu0 %v1012
        %1051 = vmatpush.msra.mxu0 %v1011
        %1052 = vmatpush.msra.mxu0 %v1010
        %1053 = vmatpush.msra.mxu0 %v1009
        %1054 = vmatpush.msra.mxu0 %v1008
        %1055 = vmatpush.msra.mxu0 %v1007
        %1056 = vmatmul.f32.gmra.mxu0 %v939
        %v1057 = vpop.f32.mrf.mxu0
        %v1058 = vadd.f32 %v1035, %v1057
        %1059 = vmatmul.f32.gmra.mxu0 %v942
        %v1060 = vpop.f32.mrf.mxu0
        %v1061 = vadd.f32 %v1038, %v1060
        %1062 = vdwg.mxu0
        %v1063 = vmax.f32 %v985, %v1058
        %v1064 = vmax.f32 %v988, %v1061
        %v1065 = vld [vmem:[%s5] sm:$0xff]
        %v1066 = vld [vmem:[%s5 + $0x8] sm:$0xff]
        %v1067 = vld [vmem:[%s5 + $0x10] sm:$0xff]
        %v1068 = vld [vmem:[%s5 + $0x18] sm:$0xff]
        %v1069 = vld [vmem:[%s5 + $0x20] sm:$0xff]
        %v1070 = vld [vmem:[%s5 + $0x28] sm:$0xff]
        %v1071 = vld [vmem:[%s5 + $0x30] sm:$0xff]
        %v1072 = vld [vmem:[%s5 + $0x38] sm:$0xff]
        %v1073 = vld [vmem:[%s5 + $0x40] sm:$0xff]
        %v1074 = vld [vmem:[%s5 + $0x48] sm:$0xff]
        %v1075 = vld [vmem:[%s5 + $0x50] sm:$0xff]
        %v1076 = vld [vmem:[%s5 + $0x58] sm:$0xff]
        %v1077 = vld [vmem:[%s5 + $0x60] sm:$0xff]
        %v1078 = vld [vmem:[%s5 + $0x68] sm:$0xff]
        %v1079 = vld [vmem:[%s5 + $0x70] sm:$0xff]
        %v1080 = vld [vmem:[%s5 + $0x78] sm:$0xff]
        %v1081 = vld [vmem:[%s5 + $0x80] sm:$0xff]
        %v1082 = vld [vmem:[%s5 + $0x88] sm:$0xff]
        %v1083 = vld [vmem:[%s5 + $0x90] sm:$0xff]
        %v1084 = vld [vmem:[%s5 + $0x98] sm:$0xff]
        %v1085 = vld [vmem:[%s5 + $0xa0] sm:$0xff]
        %v1086 = vld [vmem:[%s5 + $0xa8] sm:$0xff]
        %v1087 = vld [vmem:[%s5 + $0xb0] sm:$0xff]
        %v1088 = vld [vmem:[%s5 + $0xb8] sm:$0xff]
        %v1089 = vld [vmem:[%s5 + $0xc0] sm:$0xff]
        %v1090 = vld [vmem:[%s5 + $0xc8] sm:$0xff]
        %v1091 = vld [vmem:[%s5 + $0xd0] sm:$0xff]
        %v1092 = vld [vmem:[%s5 + $0xd8] sm:$0xff]
        %v1093 = vld [vmem:[%s5 + $0xe0] sm:$0xff]
        %v1094 = vld [vmem:[%s5 + $0xe8] sm:$0xff]
        %v1095 = vld [vmem:[%s5 + $0xf0] sm:$0xff]
        %v1096 = vld [vmem:[%s5 + $0xf8] sm:$0xff]
        %v1097 = vld [vmem:[%s5 + $0x100] sm:$0xff]
        %v1098 = vld [vmem:[%s5 + $0x108] sm:$0xff]
        %v1099 = vld [vmem:[%s5 + $0x110] sm:$0xff]
        %v1100 = vld [vmem:[%s5 + $0x118] sm:$0xff]
        %v1101 = vld [vmem:[%s5 + $0x120] sm:$0xff]
        %v1102 = vld [vmem:[%s5 + $0x128] sm:$0xff]
        %v1103 = vld [vmem:[%s5 + $0x130] sm:$0xff]
        %s1104 = scalar_lea.vmem %s5, 312
        %v1105 = vld [vmem:[%s1104] sm:$0xff]
        %v1106 = vld [vmem:[%s1104 + $0x8] sm:$0xff]
        %v1107 = vld [vmem:[%s1104 + $0x10] sm:$0xff]
        %v1108 = vld [vmem:[%s1104 + $0x18] sm:$0xff]
        %v1109 = vld [vmem:[%s1104 + $0x20] sm:$0xff]
        %v1110 = vld [vmem:[%s1104 + $0x28] sm:$0xff]
        %v1111 = vld [vmem:[%s1104 + $0x30] sm:$0xff]
        %v1112 = vld [vmem:[%s1104 + $0x38] sm:$0xff]
        %v1113 = vld [vmem:[%s1104 + $0x40] sm:$0xff]
        %v1114 = vld [vmem:[%s1104 + $0x48] sm:$0xff]
        %v1115 = vld [vmem:[%s1104 + $0x50] sm:$0xff]
        %v1116 = vld [vmem:[%s1104 + $0x58] sm:$0xff]
        %v1117 = vld [vmem:[%s1104 + $0x60] sm:$0xff]
        %v1118 = vld [vmem:[%s1104 + $0x68] sm:$0xff]
        %v1119 = vld [vmem:[%s1104 + $0x70] sm:$0xff]
        %v1120 = vld [vmem:[%s1104 + $0x78] sm:$0xff]
        %v1121 = vld [vmem:[%s1104 + $0x80] sm:$0xff]
        %v1122 = vld [vmem:[%s1104 + $0x88] sm:$0xff]
        %v1123 = vld [vmem:[%s1104 + $0x90] sm:$0xff]
        %v1124 = vld [vmem:[%s1104 + $0x98] sm:$0xff]
        %v1125 = vld [vmem:[%s1104 + $0xa0] sm:$0xff]
        %v1126 = vld [vmem:[%s1104 + $0xa8] sm:$0xff]
        %v1127 = vld [vmem:[%s1104 + $0xb0] sm:$0xff]
        %v1128 = vld [vmem:[%s1104 + $0xb8] sm:$0xff]
        %v1129 = vld [vmem:[%s1104 + $0xc0] sm:$0xff]
        %v1130 = vld [vmem:[%s1104 + $0xc8] sm:$0xff]
        %v1131 = vld [vmem:[%s1104 + $0xd0] sm:$0xff]
        %v1132 = vld [vmem:[%s1104 + $0xd8] sm:$0xff]
        %v1133 = vld [vmem:[%s1104 + $0xe0] sm:$0xff]
        %v1134 = vld [vmem:[%s1104 + $0xe8] sm:$0xff]
        %v1135 = vld [vmem:[%s1104 + $0xf0] sm:$0xff]
        %v1136 = vld [vmem:[%s1104 + $0xf8] sm:$0xff]
        %v1137 = vld [vmem:[%s1104 + $0x100] sm:$0xff]
        %v1138 = vld [vmem:[%s1104 + $0x108] sm:$0xff]
        %v1139 = vld [vmem:[%s1104 + $0x110] sm:$0xff]
        %v1140 = vld [vmem:[%s1104 + $0x118] sm:$0xff]
        %v1141 = vld [vmem:[%s1104 + $0x120] sm:$0xff]
        %v1142 = vld [vmem:[%s1104 + $0x128] sm:$0xff]
        %v1143 = vld [vmem:[%s1104 + $0x130] sm:$0xff]
        %v1146 = vrot.slane %v1063, 1
        %v1147 = vrot.slane %v1064, 1
        %v1148 = vsel %vm517, %v1146, %v1147
        %vm1149 = vcmask 850944
        %v1150 = vsel %vm1149, %v1148, 0
        %v1152 = vsel %vm1149, %v1147, 0
        %1154 = vmatpush.msra.mxu0 0.0
        %1155 = vmatpush.msra.mxu0 0.0
        %1156 = vmatpush.msra.mxu0 0.0
        %1157 = vmatpush.msra.mxu0 %v1141
        %1158 = vmatpush.msra.mxu0 %v1138
        %1159 = vmatpush.msra.mxu0 %v1135
        %1160 = vmatpush.msra.mxu0 %v1132
        %1161 = vmatpush.msra.mxu0 %v1129
        %1162 = vmatpush.msra.mxu0 %v1126
        %1163 = vmatpush.msra.mxu0 %v1123
        %1164 = vmatpush.msra.mxu0 %v1120
        %1165 = vmatpush.msra.mxu0 %v1117
        %1166 = vmatpush.msra.mxu0 %v1114
        %1167 = vmatpush.msra.mxu0 %v1111
        %1168 = vmatpush.msra.mxu0 %v1108
        %1169 = vmatpush.msra.mxu0 %v1105
        %1170 = vmatmul.f32.gmra.mxu0 %v1150
        %v1171 = vpop.f32.mrf.mxu0
        %v1172 = vadd.f32 0.0, %v1171
        %1173 = vmatmul.f32.gmra.mxu0 %v1152
        %v1174 = vpop.f32.mrf.mxu0
        %v1175 = vadd.f32 0.0, %v1174
        %1176 = vdwg.mxu0
        %1177 = vmatpush.msra.mxu0 0.0
        %1178 = vmatpush.msra.mxu0 0.0
        %1179 = vmatpush.msra.mxu0 0.0
        %1180 = vmatpush.msra.mxu0 %v1142
        %1181 = vmatpush.msra.mxu0 %v1139
        %1182 = vmatpush.msra.mxu0 %v1136
        %1183 = vmatpush.msra.mxu0 %v1133
        %1184 = vmatpush.msra.mxu0 %v1130
        %1185 = vmatpush.msra.mxu0 %v1127
        %1186 = vmatpush.msra.mxu0 %v1124
        %1187 = vmatpush.msra.mxu0 %v1121
        %1188 = vmatpush.msra.mxu0 %v1118
        %1189 = vmatpush.msra.mxu0 %v1115
        %1190 = vmatpush.msra.mxu0 %v1112
        %1191 = vmatpush.msra.mxu0 %v1109
        %1192 = vmatpush.msra.mxu0 %v1106
        %1193 = vmatmul.f32.gmra.mxu0 %v1150
        %v1194 = vpop.f32.mrf.mxu0
        %v1195 = vadd.f32 0.0, %v1194
        %1196 = vmatmul.f32.gmra.mxu0 %v1152
        %v1197 = vpop.f32.mrf.mxu0
        %v1198 = vadd.f32 0.0, %v1197
        %1199 = vdwg.mxu0
        %1200 = vmatpush.msra.mxu0 0.0
        %1201 = vmatpush.msra.mxu0 0.0
        %1202 = vmatpush.msra.mxu0 0.0
        %1203 = vmatpush.msra.mxu0 %v1143
        %1204 = vmatpush.msra.mxu0 %v1140
        %1205 = vmatpush.msra.mxu0 %v1137
        %1206 = vmatpush.msra.mxu0 %v1134
        %1207 = vmatpush.msra.mxu0 %v1131
        %1208 = vmatpush.msra.mxu0 %v1128
        %1209 = vmatpush.msra.mxu0 %v1125
        %1210 = vmatpush.msra.mxu0 %v1122
        %1211 = vmatpush.msra.mxu0 %v1119
        %1212 = vmatpush.msra.mxu0 %v1116
        %1213 = vmatpush.msra.mxu0 %v1113
        %1214 = vmatpush.msra.mxu0 %v1110
        %1215 = vmatpush.msra.mxu0 %v1107
        %1216 = vmatmul.f32.gmra.mxu0 %v1150
        %v1217 = vpop.f32.mrf.mxu0
        %v1218 = vadd.f32 0.0, %v1217
        %1219 = vmatmul.f32.gmra.mxu0 %v1152
        %v1220 = vpop.f32.mrf.mxu0
        %v1221 = vadd.f32 0.0, %v1220
        %1222 = vdwg.mxu0
        %v1223 = vsel %vm1149, %v1063, 0
        %v1225 = vsel %vm1149, %v1064, 0
        %1227 = vmatpush.msra.mxu0 0.0
        %1228 = vmatpush.msra.mxu0 0.0
        %1229 = vmatpush.msra.mxu0 0.0
        %1230 = vmatpush.msra.mxu0 %v1101
        %1231 = vmatpush.msra.mxu0 %v1098
        %1232 = vmatpush.msra.mxu0 %v1095
        %1233 = vmatpush.msra.mxu0 %v1092
        %1234 = vmatpush.msra.mxu0 %v1089
        %1235 = vmatpush.msra.mxu0 %v1086
        %1236 = vmatpush.msra.mxu0 %v1083
        %1237 = vmatpush.msra.mxu0 %v1080
        %1238 = vmatpush.msra.mxu0 %v1077
        %1239 = vmatpush.msra.mxu0 %v1074
        %1240 = vmatpush.msra.mxu0 %v1071
        %1241 = vmatpush.msra.mxu0 %v1068
        %1242 = vmatpush.msra.mxu0 %v1065
        %1243 = vmatmul.f32.gmra.mxu0 %v1223
        %v1244 = vpop.f32.mrf.mxu0
        %v1245 = vadd.f32 %v1172, %v1244
        %1246 = vmatmul.f32.gmra.mxu0 %v1225
        %v1247 = vpop.f32.mrf.mxu0
        %v1248 = vadd.f32 %v1175, %v1247
        %1249 = vdwg.mxu0
        %1250 = vmatpush.msra.mxu0 0.0
        %1251 = vmatpush.msra.mxu0 0.0
        %1252 = vmatpush.msra.mxu0 0.0
        %1253 = vmatpush.msra.mxu0 %v1102
        %1254 = vmatpush.msra.mxu0 %v1099
        %1255 = vmatpush.msra.mxu0 %v1096
        %1256 = vmatpush.msra.mxu0 %v1093
        %1257 = vmatpush.msra.mxu0 %v1090
        %1258 = vmatpush.msra.mxu0 %v1087
        %1259 = vmatpush.msra.mxu0 %v1084
        %1260 = vmatpush.msra.mxu0 %v1081
        %1261 = vmatpush.msra.mxu0 %v1078
        %1262 = vmatpush.msra.mxu0 %v1075
        %1263 = vmatpush.msra.mxu0 %v1072
        %1264 = vmatpush.msra.mxu0 %v1069
        %1265 = vmatpush.msra.mxu0 %v1066
        %1266 = vmatmul.f32.gmra.mxu0 %v1223
        %v1267 = vpop.f32.mrf.mxu0
        %v1268 = vadd.f32 %v1195, %v1267
        %1269 = vmatmul.f32.gmra.mxu0 %v1225
        %v1270 = vpop.f32.mrf.mxu0
        %v1271 = vadd.f32 %v1198, %v1270
        %1272 = vdwg.mxu0
        %1273 = vmatpush.msra.mxu0 0.0
        %1274 = vmatpush.msra.mxu0 0.0
        %1275 = vmatpush.msra.mxu0 0.0
        %1276 = vmatpush.msra.mxu0 %v1103
        %1277 = vmatpush.msra.mxu0 %v1100
        %1278 = vmatpush.msra.mxu0 %v1097
        %1279 = vmatpush.msra.mxu0 %v1094
        %1280 = vmatpush.msra.mxu0 %v1091
        %1281 = vmatpush.msra.mxu0 %v1088
        %1282 = vmatpush.msra.mxu0 %v1085
        %1283 = vmatpush.msra.mxu0 %v1082
        %1284 = vmatpush.msra.mxu0 %v1079
        %1285 = vmatpush.msra.mxu0 %v1076
        %1286 = vmatpush.msra.mxu0 %v1073
        %1287 = vmatpush.msra.mxu0 %v1070
        %1288 = vmatpush.msra.mxu0 %v1067
        %1289 = vmatmul.f32.gmra.mxu0 %v1223
        %v1290 = vpop.f32.mrf.mxu0
        %v1291 = vadd.f32 %v1218, %v1290
        %1292 = vmatmul.f32.gmra.mxu0 %v1225
        %v1293 = vpop.f32.mrf.mxu0
        %v1294 = vadd.f32 %v1221, %v1293
        %1295 = vdwg.mxu0
        %s1296 = scalar_lea.vmem %s5, 624
        %v1297 = vld [vmem:[%s1296] sm:$0xff]
        %v1298 = vld [vmem:[%s1296 + $0x8] sm:$0xff]
        %v1299 = vld [vmem:[%s1296 + $0x10] sm:$0xff]
        %v1300 = vld [vmem:[%s1296 + $0x18] sm:$0xff]
        %v1301 = vld [vmem:[%s1296 + $0x20] sm:$0xff]
        %v1302 = vld [vmem:[%s1296 + $0x28] sm:$0xff]
        %v1303 = vld [vmem:[%s1296 + $0x30] sm:$0xff]
        %v1304 = vld [vmem:[%s1296 + $0x38] sm:$0xff]
        %v1305 = vld [vmem:[%s1296 + $0x40] sm:$0xff]
        %v1306 = vld [vmem:[%s1296 + $0x48] sm:$0xff]
        %v1307 = vld [vmem:[%s1296 + $0x50] sm:$0xff]
        %v1308 = vld [vmem:[%s1296 + $0x58] sm:$0xff]
        %v1309 = vld [vmem:[%s1296 + $0x60] sm:$0xff]
        %v1310 = vld [vmem:[%s1296 + $0x68] sm:$0xff]
        %v1311 = vld [vmem:[%s1296 + $0x70] sm:$0xff]
        %v1312 = vld [vmem:[%s1296 + $0x78] sm:$0xff]
        %v1313 = vld [vmem:[%s1296 + $0x80] sm:$0xff]
        %v1314 = vld [vmem:[%s1296 + $0x88] sm:$0xff]
        %v1315 = vld [vmem:[%s1296 + $0x90] sm:$0xff]
        %v1316 = vld [vmem:[%s1296 + $0x98] sm:$0xff]
        %v1317 = vld [vmem:[%s1296 + $0xa0] sm:$0xff]
        %v1318 = vld [vmem:[%s1296 + $0xa8] sm:$0xff]
        %v1319 = vld [vmem:[%s1296 + $0xb0] sm:$0xff]
        %v1320 = vld [vmem:[%s1296 + $0xb8] sm:$0xff]
        %v1321 = vld [vmem:[%s1296 + $0xc0] sm:$0xff]
        %v1322 = vld [vmem:[%s1296 + $0xc8] sm:$0xff]
        %v1323 = vld [vmem:[%s1296 + $0xd0] sm:$0xff]
        %v1324 = vld [vmem:[%s1296 + $0xd8] sm:$0xff]
        %v1325 = vld [vmem:[%s1296 + $0xe0] sm:$0xff]
        %v1326 = vld [vmem:[%s1296 + $0xe8] sm:$0xff]
        %v1327 = vld [vmem:[%s1296 + $0xf0] sm:$0xff]
        %v1328 = vld [vmem:[%s1296 + $0xf8] sm:$0xff]
        %v1329 = vld [vmem:[%s1296 + $0x100] sm:$0xff]
        %v1330 = vld [vmem:[%s1296 + $0x108] sm:$0xff]
        %v1331 = vld [vmem:[%s1296 + $0x110] sm:$0xff]
        %v1332 = vld [vmem:[%s1296 + $0x118] sm:$0xff]
        %v1333 = vld [vmem:[%s1296 + $0x120] sm:$0xff]
        %v1334 = vld [vmem:[%s1296 + $0x128] sm:$0xff]
        %v1335 = vld [vmem:[%s1296 + $0x130] sm:$0xff]
        %v1336 = vrot.slane %v1063, 2
        %v1337 = vrot.slane %v1064, 2
        %v1338 = vsel %vm680, %v1336, %v1337
        %v1339 = vsel %vm1149, %v1338, 0
        %v1341 = vsel %vm1149, %v1337, 0
        %1343 = vmatpush.msra.mxu0 0.0
        %1344 = vmatpush.msra.mxu0 0.0
        %1345 = vmatpush.msra.mxu0 0.0
        %1346 = vmatpush.msra.mxu0 %v1333
        %1347 = vmatpush.msra.mxu0 %v1330
        %1348 = vmatpush.msra.mxu0 %v1327
        %1349 = vmatpush.msra.mxu0 %v1324
        %1350 = vmatpush.msra.mxu0 %v1321
        %1351 = vmatpush.msra.mxu0 %v1318
        %1352 = vmatpush.msra.mxu0 %v1315
        %1353 = vmatpush.msra.mxu0 %v1312
        %1354 = vmatpush.msra.mxu0 %v1309
        %1355 = vmatpush.msra.mxu0 %v1306
        %1356 = vmatpush.msra.mxu0 %v1303
        %1357 = vmatpush.msra.mxu0 %v1300
        %1358 = vmatpush.msra.mxu0 %v1297
        %1359 = vmatmul.f32.gmra.mxu0 %v1339
        %v1360 = vpop.f32.mrf.mxu0
        %v1361 = vadd.f32 0.0, %v1360
        %1362 = vmatmul.f32.gmra.mxu0 %v1341
        %v1363 = vpop.f32.mrf.mxu0
        %v1364 = vadd.f32 0.0, %v1363
        %1365 = vdwg.mxu0
        %1366 = vmatpush.msra.mxu0 0.0
        %1367 = vmatpush.msra.mxu0 0.0
        %1368 = vmatpush.msra.mxu0 0.0
        %1369 = vmatpush.msra.mxu0 %v1334
        %1370 = vmatpush.msra.mxu0 %v1331
        %1371 = vmatpush.msra.mxu0 %v1328
        %1372 = vmatpush.msra.mxu0 %v1325
        %1373 = vmatpush.msra.mxu0 %v1322
        %1374 = vmatpush.msra.mxu0 %v1319
        %1375 = vmatpush.msra.mxu0 %v1316
        %1376 = vmatpush.msra.mxu0 %v1313
        %1377 = vmatpush.msra.mxu0 %v1310
        %1378 = vmatpush.msra.mxu0 %v1307
        %1379 = vmatpush.msra.mxu0 %v1304
        %1380 = vmatpush.msra.mxu0 %v1301
        %1381 = vmatpush.msra.mxu0 %v1298
        %1382 = vmatmul.f32.gmra.mxu0 %v1339
        %v1383 = vpop.f32.mrf.mxu0
        %v1384 = vadd.f32 0.0, %v1383
        %1385 = vmatmul.f32.gmra.mxu0 %v1341
        %v1386 = vpop.f32.mrf.mxu0
        %v1387 = vadd.f32 0.0, %v1386
        %1388 = vdwg.mxu0
        %1389 = vmatpush.msra.mxu0 0.0
        %1390 = vmatpush.msra.mxu0 0.0
        %1391 = vmatpush.msra.mxu0 0.0
        %1392 = vmatpush.msra.mxu0 %v1335
        %1393 = vmatpush.msra.mxu0 %v1332
        %1394 = vmatpush.msra.mxu0 %v1329
        %1395 = vmatpush.msra.mxu0 %v1326
        %1396 = vmatpush.msra.mxu0 %v1323
        %1397 = vmatpush.msra.mxu0 %v1320
        %1398 = vmatpush.msra.mxu0 %v1317
        %1399 = vmatpush.msra.mxu0 %v1314
        %1400 = vmatpush.msra.mxu0 %v1311
        %1401 = vmatpush.msra.mxu0 %v1308
        %1402 = vmatpush.msra.mxu0 %v1305
        %1403 = vmatpush.msra.mxu0 %v1302
        %1404 = vmatpush.msra.mxu0 %v1299
        %1405 = vmatmul.f32.gmra.mxu0 %v1339
        %v1406 = vpop.f32.mrf.mxu0
        %v1407 = vadd.f32 0.0, %v1406
        %1408 = vmatmul.f32.gmra.mxu0 %v1341
        %v1409 = vpop.f32.mrf.mxu0
        %v1410 = vadd.f32 0.0, %v1409
        %1411 = vdwg.mxu0
        %v1412 = vadd.f32 %v1245, %v1361
        %v1413 = vadd.f32 %v1268, %v1384
        %v1414 = vadd.f32 %v1291, %v1407
        %v1415 = vadd.f32 %v1248, %v1364
        %v1416 = vadd.f32 %v1271, %v1387
        %v1417 = vadd.f32 %v1294, %v1410
        %v1418 = vld [vmem:[%s6] sm:$0x7]
        %v1420 = vperm.slane %v1418, 0
        %v1421 = vperm.slane %v1418, 1
        %v1422 = vperm.slane %v1418, 2
        %v1426 = vadd.f32 %v1412, %v1420
        %v1427 = vadd.f32 %v1413, %v1421
        %v1428 = vadd.f32 %v1414, %v1422
        %v1429 = vadd.f32 %v1415, %v1420
        %v1430 = vadd.f32 %v1416, %v1421
        %v1431 = vadd.f32 %v1417, %v1422
        %v1432 = vld [vmem:[%s7] sm:$0x1f]
        %vm1433 = vcmask 89088
        %v1435 = vsel %vm1433, %v1432, 0
        %vm1437 = vcmask 1042432
        %v1439 = vsel %vm1437, %v1429, 0
        %v1442 = vsel %vm1437, %v1430, 0
        %v1445 = vsel %vm1437, %v1431, 0
        %1447 = vmatpush.msra.mxu0 0.0
        %1448 = vmatpush.msra.mxu0 0.0
        %1449 = vmatpush.msra.mxu0 0.0
        %1450 = vmatpush.msra.mxu0 0.0
        %1451 = vmatpush.msra.mxu0 0.0
        %1452 = vmatpush.msra.mxu0 0.0
        %1453 = vmatpush.msra.mxu0 0.0
        %1454 = vmatpush.msra.mxu0 0.0
        %1455 = vmatpush.msra.mxu0 0.0
        %1456 = vmatpush.msra.mxu0 0.0
        %1457 = vmatpush.msra.mxu0 0.0
        %1458 = vmatpush.msra.mxu0 0.0
        %1459 = vmatpush.msra.mxu0 0.0
        %1460 = vmatpush.msra.mxu0 0.0
        %1461 = vmatpush.msra.mxu0 %v1439
        %1462 = vmatpush.msra.mxu0 %v1426
        %1463 = vmatmul.f32.gmra.mxu0 %v1435
        %v1464 = vpop.f32.mrf.mxu0
        %v1465 = vadd.f32 0.0, %v1464
        %1466 = vdwg.mxu0
        %1467 = vmatpush.msra.mxu0 0.0
        %1468 = vmatpush.msra.mxu0 0.0
        %1469 = vmatpush.msra.mxu0 0.0
        %1470 = vmatpush.msra.mxu0 0.0
        %1471 = vmatpush.msra.mxu0 0.0
        %1472 = vmatpush.msra.mxu0 0.0
        %1473 = vmatpush.msra.mxu0 0.0
        %1474 = vmatpush.msra.mxu0 0.0
        %1475 = vmatpush.msra.mxu0 0.0
        %1476 = vmatpush.msra.mxu0 0.0
        %1477 = vmatpush.msra.mxu0 0.0
        %1478 = vmatpush.msra.mxu0 0.0
        %1479 = vmatpush.msra.mxu0 0.0
        %1480 = vmatpush.msra.mxu0 0.0
        %1481 = vmatpush.msra.mxu0 %v1442
        %1482 = vmatpush.msra.mxu0 %v1427
        %1483 = vmatmul.f32.gmra.mxu0 %v1435
        %v1484 = vpop.f32.mrf.mxu0
        %v1485 = vadd.f32 0.0, %v1484
        %1486 = vdwg.mxu0
        %1487 = vmatpush.msra.mxu0 0.0
        %1488 = vmatpush.msra.mxu0 0.0
        %1489 = vmatpush.msra.mxu0 0.0
        %1490 = vmatpush.msra.mxu0 0.0
        %1491 = vmatpush.msra.mxu0 0.0
        %1492 = vmatpush.msra.mxu0 0.0
        %1493 = vmatpush.msra.mxu0 0.0
        %1494 = vmatpush.msra.mxu0 0.0
        %1495 = vmatpush.msra.mxu0 0.0
        %1496 = vmatpush.msra.mxu0 0.0
        %1497 = vmatpush.msra.mxu0 0.0
        %1498 = vmatpush.msra.mxu0 0.0
        %1499 = vmatpush.msra.mxu0 0.0
        %1500 = vmatpush.msra.mxu0 0.0
        %1501 = vmatpush.msra.mxu0 %v1445
        %1502 = vmatpush.msra.mxu0 %v1428
        %1503 = vmatmul.f32.gmra.mxu0 %v1435
        %v1504 = vpop.f32.mrf.mxu0
        %v1505 = vadd.f32 0.0, %v1504
        %1506 = vdwg.mxu0
        %s1507 = scalar_lea.vmem %s7, 8
        %v1508 = vld [vmem:[%s1507] sm:$0x1f]
        %v1510 = vsel %vm1433, %v1508, 0
        %1512 = vmatpush.msra.mxu0 0.0
        %1513 = vmatpush.msra.mxu0 0.0
        %1514 = vmatpush.msra.mxu0 0.0
        %1515 = vmatpush.msra.mxu0 0.0
        %1516 = vmatpush.msra.mxu0 0.0
        %1517 = vmatpush.msra.mxu0 0.0
        %1518 = vmatpush.msra.mxu0 0.0
        %1519 = vmatpush.msra.mxu0 0.0
        %1520 = vmatpush.msra.mxu0 0.0
        %1521 = vmatpush.msra.mxu0 0.0
        %1522 = vmatpush.msra.mxu0 0.0
        %1523 = vmatpush.msra.mxu0 0.0
        %1524 = vmatpush.msra.mxu0 0.0
        %1525 = vmatpush.msra.mxu0 0.0
        %1526 = vmatpush.msra.mxu0 %v1439
        %1527 = vmatpush.msra.mxu0 %v1426
        %1528 = vmatmul.f32.gmra.mxu0 %v1510
        %v1529 = vpop.f32.mrf.mxu0
        %v1530 = vadd.f32 0.0, %v1529
        %1531 = vdwg.mxu0
        %1532 = vmatpush.msra.mxu0 0.0
        %1533 = vmatpush.msra.mxu0 0.0
        %1534 = vmatpush.msra.mxu0 0.0
        %1535 = vmatpush.msra.mxu0 0.0
        %1536 = vmatpush.msra.mxu0 0.0
        %1537 = vmatpush.msra.mxu0 0.0
        %1538 = vmatpush.msra.mxu0 0.0
        %1539 = vmatpush.msra.mxu0 0.0
        %1540 = vmatpush.msra.mxu0 0.0
        %1541 = vmatpush.msra.mxu0 0.0
        %1542 = vmatpush.msra.mxu0 0.0
        %1543 = vmatpush.msra.mxu0 0.0
        %1544 = vmatpush.msra.mxu0 0.0
        %1545 = vmatpush.msra.mxu0 0.0
        %1546 = vmatpush.msra.mxu0 %v1442
        %1547 = vmatpush.msra.mxu0 %v1427
        %1548 = vmatmul.f32.gmra.mxu0 %v1510
        %v1549 = vpop.f32.mrf.mxu0
        %v1550 = vadd.f32 0.0, %v1549
        %1551 = vdwg.mxu0
        %1552 = vmatpush.msra.mxu0 0.0
        %1553 = vmatpush.msra.mxu0 0.0
        %1554 = vmatpush.msra.mxu0 0.0
        %1555 = vmatpush.msra.mxu0 0.0
        %1556 = vmatpush.msra.mxu0 0.0
        %1557 = vmatpush.msra.mxu0 0.0
        %1558 = vmatpush.msra.mxu0 0.0
        %1559 = vmatpush.msra.mxu0 0.0
        %1560 = vmatpush.msra.mxu0 0.0
        %1561 = vmatpush.msra.mxu0 0.0
        %1562 = vmatpush.msra.mxu0 0.0
        %1563 = vmatpush.msra.mxu0 0.0
        %1564 = vmatpush.msra.mxu0 0.0
        %1565 = vmatpush.msra.mxu0 0.0
        %1566 = vmatpush.msra.mxu0 %v1445
        %1567 = vmatpush.msra.mxu0 %v1428
        %1568 = vmatmul.f32.gmra.mxu0 %v1510
        %v1569 = vpop.f32.mrf.mxu0
        %v1570 = vadd.f32 0.0, %v1569
        %1571 = vdwg.mxu0
        %v1572 = vmax.f32 %v1465, %v1530
        %v1573 = vmax.f32 %v1485, %v1550
        %v1574 = vmax.f32 %v1505, %v1570
        %v1575 = vld [vmem:[%s8] sm:$0xff]
        %v1576 = vld [vmem:[%s8 + $0x8] sm:$0xff]
        %v1577 = vld [vmem:[%s8 + $0x10] sm:$0xff]
        %v1578 = vld [vmem:[%s8 + $0x18] sm:$0xff]
        %v1579 = vld [vmem:[%s8 + $0x20] sm:$0xff]
        %v1580 = vld [vmem:[%s8 + $0x28] sm:$0xff]
        %v1581 = vld [vmem:[%s8 + $0x30] sm:$0xff]
        %v1582 = vld [vmem:[%s8 + $0x38] sm:$0xff]
        %v1583 = vld [vmem:[%s8 + $0x40] sm:$0xff]
        %v1584 = vld [vmem:[%s8 + $0x48] sm:$0xff]
        %v1585 = vld [vmem:[%s8 + $0x50] sm:$0xff]
        %v1586 = vld [vmem:[%s8 + $0x58] sm:$0xff]
        %v1587 = vld [vmem:[%s8 + $0x60] sm:$0xff]
        %v1588 = vld [vmem:[%s8 + $0x68] sm:$0xff]
        %v1589 = vld [vmem:[%s8 + $0x70] sm:$0xff]
        %v1590 = vld [vmem:[%s8 + $0x78] sm:$0xff]
        %v1591 = vld [vmem:[%s8 + $0x80] sm:$0xff]
        %v1592 = vld [vmem:[%s8 + $0x88] sm:$0xff]
        %v1593 = vld [vmem:[%s8 + $0x90] sm:$0xff]
        %v1594 = vld [vmem:[%s8 + $0x98] sm:$0xff]
        %v1595 = vld [vmem:[%s8 + $0xa0] sm:$0xff]
        %v1596 = vld [vmem:[%s8 + $0xa8] sm:$0xff]
        %v1597 = vld [vmem:[%s8 + $0xb0] sm:$0xff]
        %v1598 = vld [vmem:[%s8 + $0xb8] sm:$0xff]
        %v1599 = vld [vmem:[%s8 + $0xc0] sm:$0xff]
        %v1600 = vld [vmem:[%s8 + $0xc8] sm:$0xff]
        %v1601 = vld [vmem:[%s8 + $0xd0] sm:$0xff]
        %v1602 = vld [vmem:[%s8 + $0xd8] sm:$0xff]
        %v1603 = vld [vmem:[%s8 + $0xe0] sm:$0xff]
        %v1604 = vld [vmem:[%s8 + $0xe8] sm:$0xff]
        %v1605 = vld [vmem:[%s8 + $0xf0] sm:$0xff]
        %v1606 = vld [vmem:[%s8 + $0xf8] sm:$0xff]
        %v1607 = vld [vmem:[%s8 + $0x100] sm:$0xff]
        %v1608 = vld [vmem:[%s8 + $0x108] sm:$0xff]
        %v1609 = vld [vmem:[%s8 + $0x110] sm:$0xff]
        %v1610 = vld [vmem:[%s8 + $0x118] sm:$0xff]
        %v1611 = vld [vmem:[%s8 + $0x120] sm:$0xff]
        %v1612 = vld [vmem:[%s8 + $0x128] sm:$0xff]
        %v1613 = vld [vmem:[%s8 + $0x130] sm:$0xff]
        %v1614 = vld [vmem:[%s8 + $0x138] sm:$0xff]
        %v1615 = vld [vmem:[%s8 + $0x140] sm:$0xff]
        %v1616 = vld [vmem:[%s8 + $0x148] sm:$0xff]
        %v1617 = vld [vmem:[%s8 + $0x150] sm:$0xff]
        %v1618 = vld [vmem:[%s8 + $0x158] sm:$0xff]
        %v1619 = vld [vmem:[%s8 + $0x160] sm:$0xff]
        %v1620 = vld [vmem:[%s8 + $0x168] sm:$0xff]
        %v1621 = vld [vmem:[%s8 + $0x170] sm:$0xff]
        %v1622 = vld [vmem:[%s8 + $0x178] sm:$0xff]
        %v1623 = vld [vmem:[%s8 + $0x180] sm:$0xff]
        %v1624 = vld [vmem:[%s8 + $0x188] sm:$0xff]
        %v1625 = vld [vmem:[%s8 + $0x190] sm:$0xff]
        %v1626 = vld [vmem:[%s8 + $0x198] sm:$0xff]
        %v1627 = vld [vmem:[%s8 + $0x1a0] sm:$0xff]
        %v1628 = vld [vmem:[%s8 + $0x1a8] sm:$0xff]
        %v1629 = vld [vmem:[%s8 + $0x1b0] sm:$0xff]
        %v1630 = vld [vmem:[%s8 + $0x1b8] sm:$0xff]
        %v1631 = vld [vmem:[%s8 + $0x1c0] sm:$0xff]
        %v1632 = vld [vmem:[%s8 + $0x1c8] sm:$0xff]
        %v1633 = vld [vmem:[%s8 + $0x1d0] sm:$0xff]
        %v1634 = vld [vmem:[%s8 + $0x1d8] sm:$0xff]
        %v1635 = vld [vmem:[%s8 + $0x1e0] sm:$0xff]
        %v1636 = vld [vmem:[%s8 + $0x1e8] sm:$0xff]
        %v1637 = vld [vmem:[%s8 + $0x1f0] sm:$0xff]
        %v1638 = vld [vmem:[%s8 + $0x1f8] sm:$0xff]
        %v1639 = vld [vmem:[%s8 + $0x200] sm:$0xff]
        %v1640 = vld [vmem:[%s8 + $0x208] sm:$0xff]
        %v1641 = vld [vmem:[%s8 + $0x210] sm:$0xff]
        %v1642 = vld [vmem:[%s8 + $0x218] sm:$0xff]
        %v1643 = vld [vmem:[%s8 + $0x220] sm:$0xff]
        %v1644 = vld [vmem:[%s8 + $0x228] sm:$0xff]
        %v1645 = vld [vmem:[%s8 + $0x230] sm:$0xff]
        %v1646 = vld [vmem:[%s8 + $0x238] sm:$0xff]
        %v1647 = vld [vmem:[%s8 + $0x240] sm:$0xff]
        %v1648 = vld [vmem:[%s8 + $0x248] sm:$0xff]
        %v1649 = vld [vmem:[%s8 + $0x250] sm:$0xff]
        %v1650 = vld [vmem:[%s8 + $0x258] sm:$0xff]
        %v1651 = vld [vmem:[%s8 + $0x260] sm:$0xff]
        %v1652 = vld [vmem:[%s8 + $0x268] sm:$0xff]
        %v1653 = vld [vmem:[%s8 + $0x270] sm:$0xff]
        %v1654 = vld [vmem:[%s8 + $0x278] sm:$0xff]
        %v1655 = vld [vmem:[%s8 + $0x280] sm:$0xff]
        %v1656 = vld [vmem:[%s8 + $0x288] sm:$0xff]
        %v1657 = vld [vmem:[%s8 + $0x290] sm:$0xff]
        %v1658 = vld [vmem:[%s8 + $0x298] sm:$0xff]
        %v1659 = vld [vmem:[%s8 + $0x2a0] sm:$0xff]
        %v1660 = vld [vmem:[%s8 + $0x2a8] sm:$0xff]
        %v1661 = vld [vmem:[%s8 + $0x2b0] sm:$0xff]
        %v1662 = vld [vmem:[%s8 + $0x2b8] sm:$0xff]
        %vm1663 = vcmask 785408
        %v1665 = vsel %vm1663, %v1574, 0
        %1667 = vmatpush.msra.mxu0 %v1605
        %1668 = vmatpush.msra.mxu0 %v1603
        %1669 = vmatpush.msra.mxu0 %v1601
        %1670 = vmatpush.msra.mxu0 %v1599
        %1671 = vmatpush.msra.mxu0 %v1597
        %1672 = vmatpush.msra.mxu0 %v1595
        %1673 = vmatpush.msra.mxu0 %v1593
        %1674 = vmatpush.msra.mxu0 %v1591
        %1675 = vmatpush.msra.mxu0 %v1589
        %1676 = vmatpush.msra.mxu0 %v1587
        %1677 = vmatpush.msra.mxu0 %v1585
        %1678 = vmatpush.msra.mxu0 %v1583
        %1679 = vmatpush.msra.mxu0 %v1581
        %1680 = vmatpush.msra.mxu0 %v1579
        %1681 = vmatpush.msra.mxu0 %v1577
        %1682 = vmatpush.msra.mxu0 %v1575
        %1683 = vmatmul.f32.gmra.mxu0 %v1572
        %v1684 = vpop.f32.mrf.mxu0
        %v1685 = vadd.f32 0.0, %v1684
        %1686 = vdwg.mxu0
        %1687 = vmatpush.msra.mxu0 %v1637
        %1688 = vmatpush.msra.mxu0 %v1635
        %1689 = vmatpush.msra.mxu0 %v1633
        %1690 = vmatpush.msra.mxu0 %v1631
        %1691 = vmatpush.msra.mxu0 %v1629
        %1692 = vmatpush.msra.mxu0 %v1627
        %1693 = vmatpush.msra.mxu0 %v1625
        %1694 = vmatpush.msra.mxu0 %v1623
        %1695 = vmatpush.msra.mxu0 %v1621
        %1696 = vmatpush.msra.mxu0 %v1619
        %1697 = vmatpush.msra.mxu0 %v1617
        %1698 = vmatpush.msra.mxu0 %v1615
        %1699 = vmatpush.msra.mxu0 %v1613
        %1700 = vmatpush.msra.mxu0 %v1611
        %1701 = vmatpush.msra.mxu0 %v1609
        %1702 = vmatpush.msra.mxu0 %v1607
        %1703 = vmatmul.f32.gmra.mxu0 %v1573
        %v1704 = vpop.f32.mrf.mxu0
        %v1705 = vadd.f32 %v1685, %v1704
        %1706 = vdwg.mxu0
        %1707 = vmatpush.msra.mxu0 0.0
        %1708 = vmatpush.msra.mxu0 0.0
        %1709 = vmatpush.msra.mxu0 0.0
        %1710 = vmatpush.msra.mxu0 0.0
        %1711 = vmatpush.msra.mxu0 %v1661
        %1712 = vmatpush.msra.mxu0 %v1659
        %1713 = vmatpush.msra.mxu0 %v1657
        %1714 = vmatpush.msra.mxu0 %v1655
        %1715 = vmatpush.msra.mxu0 %v1653
        %1716 = vmatpush.msra.mxu0 %v1651
        %1717 = vmatpush.msra.mxu0 %v1649
        %1718 = vmatpush.msra.mxu0 %v1647
        %1719 = vmatpush.msra.mxu0 %v1645
        %1720 = vmatpush.msra.mxu0 %v1643
        %1721 = vmatpush.msra.mxu0 %v1641
        %1722 = vmatpush.msra.mxu0 %v1639
        %1723 = vmatmul.f32.gmra.mxu0 %v1665
        %v1724 = vpop.f32.mrf.mxu0
        %v1725 = vadd.f32 %v1705, %v1724
        %1726 = vdwg.mxu0
        %1727 = vmatpush.msra.mxu0 %v1606
        %1728 = vmatpush.msra.mxu0 %v1604
        %1729 = vmatpush.msra.mxu0 %v1602
        %1730 = vmatpush.msra.mxu0 %v1600
        %1731 = vmatpush.msra.mxu0 %v1598
        %1732 = vmatpush.msra.mxu0 %v1596
        %1733 = vmatpush.msra.mxu0 %v1594
        %1734 = vmatpush.msra.mxu0 %v1592
        %1735 = vmatpush.msra.mxu0 %v1590
        %1736 = vmatpush.msra.mxu0 %v1588
        %1737 = vmatpush.msra.mxu0 %v1586
        %1738 = vmatpush.msra.mxu0 %v1584
        %1739 = vmatpush.msra.mxu0 %v1582
        %1740 = vmatpush.msra.mxu0 %v1580
        %1741 = vmatpush.msra.mxu0 %v1578
        %1742 = vmatpush.msra.mxu0 %v1576
        %1743 = vmatmul.f32.gmra.mxu0 %v1572
        %v1744 = vpop.f32.mrf.mxu0
        %v1745 = vadd.f32 0.0, %v1744
        %1746 = vdwg.mxu0
        %1747 = vmatpush.msra.mxu0 %v1638
        %1748 = vmatpush.msra.mxu0 %v1636
        %1749 = vmatpush.msra.mxu0 %v1634
        %1750 = vmatpush.msra.mxu0 %v1632
        %1751 = vmatpush.msra.mxu0 %v1630
        %1752 = vmatpush.msra.mxu0 %v1628
        %1753 = vmatpush.msra.mxu0 %v1626
        %1754 = vmatpush.msra.mxu0 %v1624
        %1755 = vmatpush.msra.mxu0 %v1622
        %1756 = vmatpush.msra.mxu0 %v1620
        %1757 = vmatpush.msra.mxu0 %v1618
        %1758 = vmatpush.msra.mxu0 %v1616
        %1759 = vmatpush.msra.mxu0 %v1614
        %1760 = vmatpush.msra.mxu0 %v1612
        %1761 = vmatpush.msra.mxu0 %v1610
        %1762 = vmatpush.msra.mxu0 %v1608
        %1763 = vmatmul.f32.gmra.mxu0 %v1573
        %v1764 = vpop.f32.mrf.mxu0
        %v1765 = vadd.f32 %v1745, %v1764
        %1766 = vdwg.mxu0
        %1767 = vmatpush.msra.mxu0 0.0
        %1768 = vmatpush.msra.mxu0 0.0
        %1769 = vmatpush.msra.mxu0 0.0
        %1770 = vmatpush.msra.mxu0 0.0
        %1771 = vmatpush.msra.mxu0 %v1662
        %1772 = vmatpush.msra.mxu0 %v1660
        %1773 = vmatpush.msra.mxu0 %v1658
        %1774 = vmatpush.msra.mxu0 %v1656
        %1775 = vmatpush.msra.mxu0 %v1654
        %1776 = vmatpush.msra.mxu0 %v1652
        %1777 = vmatpush.msra.mxu0 %v1650
        %1778 = vmatpush.msra.mxu0 %v1648
        %1779 = vmatpush.msra.mxu0 %v1646
        %1780 = vmatpush.msra.mxu0 %v1644
        %1781 = vmatpush.msra.mxu0 %v1642
        %1782 = vmatpush.msra.mxu0 %v1640
        %1783 = vmatmul.f32.gmra.mxu0 %v1665
        %v1784 = vpop.f32.mrf.mxu0
        %v1785 = vadd.f32 %v1765, %v1784
        %1786 = vdwg.mxu0
        %s1787 = scalar_lea.vmem %s8, 704
        %v1788 = vld [vmem:[%s1787] sm:$0xff]
        %v1789 = vld [vmem:[%s1787 + $0x8] sm:$0xff]
        %v1790 = vld [vmem:[%s1787 + $0x10] sm:$0xff]
        %v1791 = vld [vmem:[%s1787 + $0x18] sm:$0xff]
        %v1792 = vld [vmem:[%s1787 + $0x20] sm:$0xff]
        %v1793 = vld [vmem:[%s1787 + $0x28] sm:$0xff]
        %v1794 = vld [vmem:[%s1787 + $0x30] sm:$0xff]
        %v1795 = vld [vmem:[%s1787 + $0x38] sm:$0xff]
        %v1796 = vld [vmem:[%s1787 + $0x40] sm:$0xff]
        %v1797 = vld [vmem:[%s1787 + $0x48] sm:$0xff]
        %v1798 = vld [vmem:[%s1787 + $0x50] sm:$0xff]
        %v1799 = vld [vmem:[%s1787 + $0x58] sm:$0xff]
        %v1800 = vld [vmem:[%s1787 + $0x60] sm:$0xff]
        %v1801 = vld [vmem:[%s1787 + $0x68] sm:$0xff]
        %v1802 = vld [vmem:[%s1787 + $0x70] sm:$0xff]
        %v1803 = vld [vmem:[%s1787 + $0x78] sm:$0xff]
        %v1804 = vld [vmem:[%s1787 + $0x80] sm:$0xff]
        %v1805 = vld [vmem:[%s1787 + $0x88] sm:$0xff]
        %v1806 = vld [vmem:[%s1787 + $0x90] sm:$0xff]
        %v1807 = vld [vmem:[%s1787 + $0x98] sm:$0xff]
        %v1808 = vld [vmem:[%s1787 + $0xa0] sm:$0xff]
        %v1809 = vld [vmem:[%s1787 + $0xa8] sm:$0xff]
        %v1810 = vld [vmem:[%s1787 + $0xb0] sm:$0xff]
        %v1811 = vld [vmem:[%s1787 + $0xb8] sm:$0xff]
        %v1812 = vld [vmem:[%s1787 + $0xc0] sm:$0xff]
        %v1813 = vld [vmem:[%s1787 + $0xc8] sm:$0xff]
        %v1814 = vld [vmem:[%s1787 + $0xd0] sm:$0xff]
        %v1815 = vld [vmem:[%s1787 + $0xd8] sm:$0xff]
        %v1816 = vld [vmem:[%s1787 + $0xe0] sm:$0xff]
        %v1817 = vld [vmem:[%s1787 + $0xe8] sm:$0xff]
        %v1818 = vld [vmem:[%s1787 + $0xf0] sm:$0xff]
        %v1819 = vld [vmem:[%s1787 + $0xf8] sm:$0xff]
        %v1820 = vld [vmem:[%s1787 + $0x100] sm:$0xff]
        %v1821 = vld [vmem:[%s1787 + $0x108] sm:$0xff]
        %v1822 = vld [vmem:[%s1787 + $0x110] sm:$0xff]
        %v1823 = vld [vmem:[%s1787 + $0x118] sm:$0xff]
        %v1824 = vld [vmem:[%s1787 + $0x120] sm:$0xff]
        %v1825 = vld [vmem:[%s1787 + $0x128] sm:$0xff]
        %v1826 = vld [vmem:[%s1787 + $0x130] sm:$0xff]
        %v1827 = vld [vmem:[%s1787 + $0x138] sm:$0xff]
        %v1828 = vld [vmem:[%s1787 + $0x140] sm:$0xff]
        %v1829 = vld [vmem:[%s1787 + $0x148] sm:$0xff]
        %v1830 = vld [vmem:[%s1787 + $0x150] sm:$0xff]
        %v1831 = vld [vmem:[%s1787 + $0x158] sm:$0xff]
        %v1832 = vld [vmem:[%s1787 + $0x160] sm:$0xff]
        %v1833 = vld [vmem:[%s1787 + $0x168] sm:$0xff]
        %v1834 = vld [vmem:[%s1787 + $0x170] sm:$0xff]
        %v1835 = vld [vmem:[%s1787 + $0x178] sm:$0xff]
        %v1836 = vld [vmem:[%s1787 + $0x180] sm:$0xff]
        %v1837 = vld [vmem:[%s1787 + $0x188] sm:$0xff]
        %v1838 = vld [vmem:[%s1787 + $0x190] sm:$0xff]
        %v1839 = vld [vmem:[%s1787 + $0x198] sm:$0xff]
        %v1840 = vld [vmem:[%s1787 + $0x1a0] sm:$0xff]
        %v1841 = vld [vmem:[%s1787 + $0x1a8] sm:$0xff]
        %v1842 = vld [vmem:[%s1787 + $0x1b0] sm:$0xff]
        %v1843 = vld [vmem:[%s1787 + $0x1b8] sm:$0xff]
        %v1844 = vld [vmem:[%s1787 + $0x1c0] sm:$0xff]
        %v1845 = vld [vmem:[%s1787 + $0x1c8] sm:$0xff]
        %v1846 = vld [vmem:[%s1787 + $0x1d0] sm:$0xff]
        %v1847 = vld [vmem:[%s1787 + $0x1d8] sm:$0xff]
        %v1848 = vld [vmem:[%s1787 + $0x1e0] sm:$0xff]
        %v1849 = vld [vmem:[%s1787 + $0x1e8] sm:$0xff]
        %v1850 = vld [vmem:[%s1787 + $0x1f0] sm:$0xff]
        %v1851 = vld [vmem:[%s1787 + $0x1f8] sm:$0xff]
        %v1852 = vld [vmem:[%s1787 + $0x200] sm:$0xff]
        %v1853 = vld [vmem:[%s1787 + $0x208] sm:$0xff]
        %v1854 = vld [vmem:[%s1787 + $0x210] sm:$0xff]
        %v1855 = vld [vmem:[%s1787 + $0x218] sm:$0xff]
        %v1856 = vld [vmem:[%s1787 + $0x220] sm:$0xff]
        %v1857 = vld [vmem:[%s1787 + $0x228] sm:$0xff]
        %v1858 = vld [vmem:[%s1787 + $0x230] sm:$0xff]
        %v1859 = vld [vmem:[%s1787 + $0x238] sm:$0xff]
        %v1860 = vld [vmem:[%s1787 + $0x240] sm:$0xff]
        %v1861 = vld [vmem:[%s1787 + $0x248] sm:$0xff]
        %v1862 = vld [vmem:[%s1787 + $0x250] sm:$0xff]
        %v1863 = vld [vmem:[%s1787 + $0x258] sm:$0xff]
        %v1864 = vld [vmem:[%s1787 + $0x260] sm:$0xff]
        %v1865 = vld [vmem:[%s1787 + $0x268] sm:$0xff]
        %v1866 = vld [vmem:[%s1787 + $0x270] sm:$0xff]
        %v1867 = vld [vmem:[%s1787 + $0x278] sm:$0xff]
        %v1868 = vld [vmem:[%s1787 + $0x280] sm:$0xff]
        %v1869 = vld [vmem:[%s1787 + $0x288] sm:$0xff]
        %v1870 = vld [vmem:[%s1787 + $0x290] sm:$0xff]
        %v1871 = vld [vmem:[%s1787 + $0x298] sm:$0xff]
        %v1872 = vld [vmem:[%s1787 + $0x2a0] sm:$0xff]
        %v1873 = vld [vmem:[%s1787 + $0x2a8] sm:$0xff]
        %v1874 = vld [vmem:[%s1787 + $0x2b0] sm:$0xff]
        %v1875 = vld [vmem:[%s1787 + $0x2b8] sm:$0xff]
        %1876 = vmatpush.msra.mxu0 %v1818
        %1877 = vmatpush.msra.mxu0 %v1816
        %1878 = vmatpush.msra.mxu0 %v1814
        %1879 = vmatpush.msra.mxu0 %v1812
        %1880 = vmatpush.msra.mxu0 %v1810
        %1881 = vmatpush.msra.mxu0 %v1808
        %1882 = vmatpush.msra.mxu0 %v1806
        %1883 = vmatpush.msra.mxu0 %v1804
        %1884 = vmatpush.msra.mxu0 %v1802
        %1885 = vmatpush.msra.mxu0 %v1800
        %1886 = vmatpush.msra.mxu0 %v1798
        %1887 = vmatpush.msra.mxu0 %v1796
        %1888 = vmatpush.msra.mxu0 %v1794
        %1889 = vmatpush.msra.mxu0 %v1792
        %1890 = vmatpush.msra.mxu0 %v1790
        %1891 = vmatpush.msra.mxu0 %v1788
        %1892 = vmatmul.f32.gmra.mxu0 %v1572
        %v1893 = vpop.f32.mrf.mxu0
        %v1894 = vadd.f32 0.0, %v1893
        %1895 = vdwg.mxu0
        %1896 = vmatpush.msra.mxu0 %v1850
        %1897 = vmatpush.msra.mxu0 %v1848
        %1898 = vmatpush.msra.mxu0 %v1846
        %1899 = vmatpush.msra.mxu0 %v1844
        %1900 = vmatpush.msra.mxu0 %v1842
        %1901 = vmatpush.msra.mxu0 %v1840
        %1902 = vmatpush.msra.mxu0 %v1838
        %1903 = vmatpush.msra.mxu0 %v1836
        %1904 = vmatpush.msra.mxu0 %v1834
        %1905 = vmatpush.msra.mxu0 %v1832
        %1906 = vmatpush.msra.mxu0 %v1830
        %1907 = vmatpush.msra.mxu0 %v1828
        %1908 = vmatpush.msra.mxu0 %v1826
        %1909 = vmatpush.msra.mxu0 %v1824
        %1910 = vmatpush.msra.mxu0 %v1822
        %1911 = vmatpush.msra.mxu0 %v1820
        %1912 = vmatmul.f32.gmra.mxu0 %v1573
        %v1913 = vpop.f32.mrf.mxu0
        %v1914 = vadd.f32 %v1894, %v1913
        %1915 = vdwg.mxu0
        %1916 = vmatpush.msra.mxu0 0.0
        %1917 = vmatpush.msra.mxu0 0.0
        %1918 = vmatpush.msra.mxu0 0.0
        %1919 = vmatpush.msra.mxu0 0.0
        %1920 = vmatpush.msra.mxu0 %v1874
        %1921 = vmatpush.msra.mxu0 %v1872
        %1922 = vmatpush.msra.mxu0 %v1870
        %1923 = vmatpush.msra.mxu0 %v1868
        %1924 = vmatpush.msra.mxu0 %v1866
        %1925 = vmatpush.msra.mxu0 %v1864
        %1926 = vmatpush.msra.mxu0 %v1862
        %1927 = vmatpush.msra.mxu0 %v1860
        %1928 = vmatpush.msra.mxu0 %v1858
        %1929 = vmatpush.msra.mxu0 %v1856
        %1930 = vmatpush.msra.mxu0 %v1854
        %1931 = vmatpush.msra.mxu0 %v1852
        %1932 = vmatmul.f32.gmra.mxu0 %v1665
        %v1933 = vpop.f32.mrf.mxu0
        %v1934 = vadd.f32 %v1914, %v1933
        %1935 = vdwg.mxu0
        %1936 = vmatpush.msra.mxu0 %v1819
        %1937 = vmatpush.msra.mxu0 %v1817
        %1938 = vmatpush.msra.mxu0 %v1815
        %1939 = vmatpush.msra.mxu0 %v1813
        %1940 = vmatpush.msra.mxu0 %v1811
        %1941 = vmatpush.msra.mxu0 %v1809
        %1942 = vmatpush.msra.mxu0 %v1807
        %1943 = vmatpush.msra.mxu0 %v1805
        %1944 = vmatpush.msra.mxu0 %v1803
        %1945 = vmatpush.msra.mxu0 %v1801
        %1946 = vmatpush.msra.mxu0 %v1799
        %1947 = vmatpush.msra.mxu0 %v1797
        %1948 = vmatpush.msra.mxu0 %v1795
        %1949 = vmatpush.msra.mxu0 %v1793
        %1950 = vmatpush.msra.mxu0 %v1791
        %1951 = vmatpush.msra.mxu0 %v1789
        %1952 = vmatmul.f32.gmra.mxu0 %v1572
        %v1953 = vpop.f32.mrf.mxu0
        %v1954 = vadd.f32 0.0, %v1953
        %1955 = vdwg.mxu0
        %1956 = vmatpush.msra.mxu0 %v1851
        %1957 = vmatpush.msra.mxu0 %v1849
        %1958 = vmatpush.msra.mxu0 %v1847
        %1959 = vmatpush.msra.mxu0 %v1845
        %1960 = vmatpush.msra.mxu0 %v1843
        %1961 = vmatpush.msra.mxu0 %v1841
        %1962 = vmatpush.msra.mxu0 %v1839
        %1963 = vmatpush.msra.mxu0 %v1837
        %1964 = vmatpush.msra.mxu0 %v1835
        %1965 = vmatpush.msra.mxu0 %v1833
        %1966 = vmatpush.msra.mxu0 %v1831
        %1967 = vmatpush.msra.mxu0 %v1829
        %1968 = vmatpush.msra.mxu0 %v1827
        %1969 = vmatpush.msra.mxu0 %v1825
        %1970 = vmatpush.msra.mxu0 %v1823
        %1971 = vmatpush.msra.mxu0 %v1821
        %1972 = vmatmul.f32.gmra.mxu0 %v1573
        %v1973 = vpop.f32.mrf.mxu0
        %v1974 = vadd.f32 %v1954, %v1973
        %1975 = vdwg.mxu0
        %1976 = vmatpush.msra.mxu0 0.0
        %1977 = vmatpush.msra.mxu0 0.0
        %1978 = vmatpush.msra.mxu0 0.0
        %1979 = vmatpush.msra.mxu0 0.0
        %1980 = vmatpush.msra.mxu0 %v1875
        %1981 = vmatpush.msra.mxu0 %v1873
        %1982 = vmatpush.msra.mxu0 %v1871
        %1983 = vmatpush.msra.mxu0 %v1869
        %1984 = vmatpush.msra.mxu0 %v1867
        %1985 = vmatpush.msra.mxu0 %v1865
        %1986 = vmatpush.msra.mxu0 %v1863
        %1987 = vmatpush.msra.mxu0 %v1861
        %1988 = vmatpush.msra.mxu0 %v1859
        %1989 = vmatpush.msra.mxu0 %v1857
        %1990 = vmatpush.msra.mxu0 %v1855
        %1991 = vmatpush.msra.mxu0 %v1853
        %1992 = vmatmul.f32.gmra.mxu0 %v1665
        %v1993 = vpop.f32.mrf.mxu0
        %v1994 = vadd.f32 %v1974, %v1993
        %1995 = vdwg.mxu0
        %v1996 = vmax.f32 %v1725, %v1934
        %v1997 = vmax.f32 %v1785, %v1994
        %v1998 = vmax.f32 %v1996, 0.0
        %v1999 = vmax.f32 %v1997, 0.0
        %v2000 = vld [vmem:[%s9] sm:$0xff]
        %v2001 = vld [vmem:[%s9 + $0x8] sm:$0xff]
        %v2002 = vld [vmem:[%s9 + $0x10] sm:$0xff]
        %v2003 = vld [vmem:[%s9 + $0x18] sm:$0xff]
        %v2004 = vld [vmem:[%s9 + $0x20] sm:$0xff]
        %v2005 = vld [vmem:[%s9 + $0x28] sm:$0xff]
        %v2006 = vld [vmem:[%s9 + $0x30] sm:$0xff]
        %v2007 = vld [vmem:[%s9 + $0x38] sm:$0xff]
        %v2008 = vld [vmem:[%s9 + $0x40] sm:$0xff]
        %v2009 = vld [vmem:[%s9 + $0x48] sm:$0xff]
        %v2010 = vld [vmem:[%s9 + $0x50] sm:$0xff]
        %v2011 = vld [vmem:[%s9 + $0x58] sm:$0xff]
        %v2012 = vld [vmem:[%s9 + $0x60] sm:$0xff]
        %v2013 = vld [vmem:[%s9 + $0x68] sm:$0xff]
        %v2014 = vld [vmem:[%s9 + $0x70] sm:$0xff]
        %v2015 = vld [vmem:[%s9 + $0x78] sm:$0xff]
        %v2016 = vld [vmem:[%s9 + $0x80] sm:$0xff]
        %v2017 = vld [vmem:[%s9 + $0x88] sm:$0xff]
        %v2018 = vld [vmem:[%s9 + $0x90] sm:$0xff]
        %v2019 = vld [vmem:[%s9 + $0x98] sm:$0xff]
        %v2020 = vld [vmem:[%s9 + $0xa0] sm:$0xff]
        %v2021 = vld [vmem:[%s9 + $0xa8] sm:$0xff]
        %v2022 = vld [vmem:[%s9 + $0xb0] sm:$0xff]
        %v2023 = vld [vmem:[%s9 + $0xb8] sm:$0xff]
        %v2024 = vld [vmem:[%s9 + $0xc0] sm:$0xff]
        %v2025 = vld [vmem:[%s9 + $0xc8] sm:$0xff]
        %v2026 = vld [vmem:[%s9 + $0xd0] sm:$0xff]
        %v2027 = vld [vmem:[%s9 + $0xd8] sm:$0xff]
        %v2028 = vld [vmem:[%s9 + $0xe0] sm:$0xff]
        %v2029 = vld [vmem:[%s9 + $0xe8] sm:$0xff]
        %v2030 = vld [vmem:[%s9 + $0xf0] sm:$0xff]
        %v2031 = vld [vmem:[%s9 + $0xf8] sm:$0xff]
        %v2032 = vld [vmem:[%s9 + $0x100] sm:$0xff]
        %v2033 = vld [vmem:[%s9 + $0x108] sm:$0xff]
        %v2034 = vld [vmem:[%s9 + $0x110] sm:$0xff]
        %v2035 = vld [vmem:[%s9 + $0x118] sm:$0xff]
        %v2036 = vld [vmem:[%s9 + $0x120] sm:$0xff]
        %v2037 = vld [vmem:[%s9 + $0x128] sm:$0xff]
        %v2038 = vld [vmem:[%s9 + $0x130] sm:$0xff]
        %v2039 = vld [vmem:[%s9 + $0x138] sm:$0xff]
        %v2040 = vld [vmem:[%s9 + $0x140] sm:$0xff]
        %v2041 = vld [vmem:[%s9 + $0x148] sm:$0xff]
        %v2042 = vld [vmem:[%s9 + $0x150] sm:$0xff]
        %v2043 = vld [vmem:[%s9 + $0x158] sm:$0xff]
        %v2044 = vld [vmem:[%s9 + $0x160] sm:$0xff]
        %v2045 = vld [vmem:[%s9 + $0x168] sm:$0xff]
        %v2046 = vld [vmem:[%s9 + $0x170] sm:$0xff]
        %v2047 = vld [vmem:[%s9 + $0x178] sm:$0xff]
        %v2048 = vld [vmem:[%s9 + $0x180] sm:$0xff]
        %v2049 = vld [vmem:[%s9 + $0x188] sm:$0xff]
        %v2050 = vld [vmem:[%s9 + $0x190] sm:$0xff]
        %v2051 = vld [vmem:[%s9 + $0x198] sm:$0xff]
        %v2052 = vld [vmem:[%s9 + $0x1a0] sm:$0xff]
        %v2053 = vld [vmem:[%s9 + $0x1a8] sm:$0xff]
        %v2054 = vld [vmem:[%s9 + $0x1b0] sm:$0xff]
        %v2055 = vld [vmem:[%s9 + $0x1b8] sm:$0xff]
        %v2056 = vld [vmem:[%s9 + $0x1c0] sm:$0xff]
        %v2057 = vld [vmem:[%s9 + $0x1c8] sm:$0xff]
        %v2058 = vld [vmem:[%s9 + $0x1d0] sm:$0xff]
        %v2059 = vld [vmem:[%s9 + $0x1d8] sm:$0xff]
        %s2060 = scalar_lea.vmem %s9, 480
        %v2061 = vld [vmem:[%s2060] sm:$0xff]
        %v2062 = vld [vmem:[%s2060 + $0x8] sm:$0xff]
        %v2063 = vld [vmem:[%s2060 + $0x10] sm:$0xff]
        %v2064 = vld [vmem:[%s2060 + $0x18] sm:$0xff]
        %v2065 = vld [vmem:[%s2060 + $0x20] sm:$0xff]
        %v2066 = vld [vmem:[%s2060 + $0x28] sm:$0xff]
        %v2067 = vld [vmem:[%s2060 + $0x30] sm:$0xff]
        %v2068 = vld [vmem:[%s2060 + $0x38] sm:$0xff]
        %v2069 = vld [vmem:[%s2060 + $0x40] sm:$0xff]
        %v2070 = vld [vmem:[%s2060 + $0x48] sm:$0xff]
        %v2071 = vld [vmem:[%s2060 + $0x50] sm:$0xff]
        %v2072 = vld [vmem:[%s2060 + $0x58] sm:$0xff]
        %v2073 = vld [vmem:[%s2060 + $0x60] sm:$0xff]
        %v2074 = vld [vmem:[%s2060 + $0x68] sm:$0xff]
        %v2075 = vld [vmem:[%s2060 + $0x70] sm:$0xff]
        %v2076 = vld [vmem:[%s2060 + $0x78] sm:$0xff]
        %v2077 = vld [vmem:[%s2060 + $0x80] sm:$0xff]
        %v2078 = vld [vmem:[%s2060 + $0x88] sm:$0xff]
        %v2079 = vld [vmem:[%s2060 + $0x90] sm:$0xff]
        %v2080 = vld [vmem:[%s2060 + $0x98] sm:$0xff]
        %v2081 = vld [vmem:[%s2060 + $0xa0] sm:$0xff]
        %v2082 = vld [vmem:[%s2060 + $0xa8] sm:$0xff]
        %v2083 = vld [vmem:[%s2060 + $0xb0] sm:$0xff]
        %v2084 = vld [vmem:[%s2060 + $0xb8] sm:$0xff]
        %v2085 = vld [vmem:[%s2060 + $0xc0] sm:$0xff]
        %v2086 = vld [vmem:[%s2060 + $0xc8] sm:$0xff]
        %v2087 = vld [vmem:[%s2060 + $0xd0] sm:$0xff]
        %v2088 = vld [vmem:[%s2060 + $0xd8] sm:$0xff]
        %v2089 = vld [vmem:[%s2060 + $0xe0] sm:$0xff]
        %v2090 = vld [vmem:[%s2060 + $0xe8] sm:$0xff]
        %v2091 = vld [vmem:[%s2060 + $0xf0] sm:$0xff]
        %v2092 = vld [vmem:[%s2060 + $0xf8] sm:$0xff]
        %v2093 = vld [vmem:[%s2060 + $0x100] sm:$0xff]
        %v2094 = vld [vmem:[%s2060 + $0x108] sm:$0xff]
        %v2095 = vld [vmem:[%s2060 + $0x110] sm:$0xff]
        %v2096 = vld [vmem:[%s2060 + $0x118] sm:$0xff]
        %v2097 = vld [vmem:[%s2060 + $0x120] sm:$0xff]
        %v2098 = vld [vmem:[%s2060 + $0x128] sm:$0xff]
        %v2099 = vld [vmem:[%s2060 + $0x130] sm:$0xff]
        %v2100 = vld [vmem:[%s2060 + $0x138] sm:$0xff]
        %v2101 = vld [vmem:[%s2060 + $0x140] sm:$0xff]
        %v2102 = vld [vmem:[%s2060 + $0x148] sm:$0xff]
        %v2103 = vld [vmem:[%s2060 + $0x150] sm:$0xff]
        %v2104 = vld [vmem:[%s2060 + $0x158] sm:$0xff]
        %v2105 = vld [vmem:[%s2060 + $0x160] sm:$0xff]
        %v2106 = vld [vmem:[%s2060 + $0x168] sm:$0xff]
        %v2107 = vld [vmem:[%s2060 + $0x170] sm:$0xff]
        %v2108 = vld [vmem:[%s2060 + $0x178] sm:$0xff]
        %v2109 = vld [vmem:[%s2060 + $0x180] sm:$0xff]
        %v2110 = vld [vmem:[%s2060 + $0x188] sm:$0xff]
        %v2111 = vld [vmem:[%s2060 + $0x190] sm:$0xff]
        %v2112 = vld [vmem:[%s2060 + $0x198] sm:$0xff]
        %v2113 = vld [vmem:[%s2060 + $0x1a0] sm:$0xff]
        %v2114 = vld [vmem:[%s2060 + $0x1a8] sm:$0xff]
        %v2115 = vld [vmem:[%s2060 + $0x1b0] sm:$0xff]
        %v2116 = vld [vmem:[%s2060 + $0x1b8] sm:$0xff]
        %v2117 = vld [vmem:[%s2060 + $0x1c0] sm:$0xff]
        %v2118 = vld [vmem:[%s2060 + $0x1c8] sm:$0xff]
        %v2119 = vld [vmem:[%s2060 + $0x1d0] sm:$0xff]
        %v2120 = vld [vmem:[%s2060 + $0x1d8] sm:$0xff]
        %v2123 = vrot.slane %v1998, 1
        %v2124 = vrot.slane %v1999, 1
        %vm2126 = vcmask 261120
        %v2127 = vsel %vm2126, %v2124, 0
        %2129 = vmatpush.msra.mxu0 %v2106
        %2130 = vmatpush.msra.mxu0 %v2103
        %2131 = vmatpush.msra.mxu0 %v2100
        %2132 = vmatpush.msra.mxu0 %v2097
        %2133 = vmatpush.msra.mxu0 %v2094
        %2134 = vmatpush.msra.mxu0 %v2091
        %2135 = vmatpush.msra.mxu0 %v2088
        %2136 = vmatpush.msra.mxu0 %v2085
        %2137 = vmatpush.msra.mxu0 %v2082
        %2138 = vmatpush.msra.mxu0 %v2079
        %2139 = vmatpush.msra.mxu0 %v2076
        %2140 = vmatpush.msra.mxu0 %v2073
        %2141 = vmatpush.msra.mxu0 %v2070
        %2142 = vmatpush.msra.mxu0 %v2067
        %2143 = vmatpush.msra.mxu0 %v2064
        %2144 = vmatpush.msra.mxu0 %v2061
        %2145 = vmatmul.f32.gmra.mxu0 %v2123
        %v2146 = vpop.f32.mrf.mxu0
        %v2147 = vadd.f32 0.0, %v2146
        %2148 = vdwg.mxu0
        %2149 = vmatpush.msra.mxu0 0.0
        %2150 = vmatpush.msra.mxu0 0.0
        %2151 = vmatpush.msra.mxu0 0.0
        %2152 = vmatpush.msra.mxu0 0.0
        %2153 = vmatpush.msra.mxu0 0.0
        %2154 = vmatpush.msra.mxu0 0.0
        %2155 = vmatpush.msra.mxu0 0.0
        %2156 = vmatpush.msra.mxu0 0.0
        %2157 = vmatpush.msra.mxu0 0.0
        %2158 = vmatpush.msra.mxu0 0.0
        %2159 = vmatpush.msra.mxu0 0.0
        %2160 = vmatpush.msra.mxu0 0.0
        %2161 = vmatpush.msra.mxu0 %v2118
        %2162 = vmatpush.msra.mxu0 %v2115
        %2163 = vmatpush.msra.mxu0 %v2112
        %2164 = vmatpush.msra.mxu0 %v2109
        %2165 = vmatmul.f32.gmra.mxu0 %v2127
        %v2166 = vpop.f32.mrf.mxu0
        %v2167 = vadd.f32 %v2147, %v2166
        %2168 = vdwg.mxu0
        %2169 = vmatpush.msra.mxu0 %v2107
        %2170 = vmatpush.msra.mxu0 %v2104
        %2171 = vmatpush.msra.mxu0 %v2101
        %2172 = vmatpush.msra.mxu0 %v2098
        %2173 = vmatpush.msra.mxu0 %v2095
        %2174 = vmatpush.msra.mxu0 %v2092
        %2175 = vmatpush.msra.mxu0 %v2089
        %2176 = vmatpush.msra.mxu0 %v2086
        %2177 = vmatpush.msra.mxu0 %v2083
        %2178 = vmatpush.msra.mxu0 %v2080
        %2179 = vmatpush.msra.mxu0 %v2077
        %2180 = vmatpush.msra.mxu0 %v2074
        %2181 = vmatpush.msra.mxu0 %v2071
        %2182 = vmatpush.msra.mxu0 %v2068
        %2183 = vmatpush.msra.mxu0 %v2065
        %2184 = vmatpush.msra.mxu0 %v2062
        %2185 = vmatmul.f32.gmra.mxu0 %v2123
        %v2186 = vpop.f32.mrf.mxu0
        %v2187 = vadd.f32 0.0, %v2186
        %2188 = vdwg.mxu0
        %2189 = vmatpush.msra.mxu0 0.0
        %2190 = vmatpush.msra.mxu0 0.0
        %2191 = vmatpush.msra.mxu0 0.0
        %2192 = vmatpush.msra.mxu0 0.0
        %2193 = vmatpush.msra.mxu0 0.0
        %2194 = vmatpush.msra.mxu0 0.0
        %2195 = vmatpush.msra.mxu0 0.0
        %2196 = vmatpush.msra.mxu0 0.0
        %2197 = vmatpush.msra.mxu0 0.0
        %2198 = vmatpush.msra.mxu0 0.0
        %2199 = vmatpush.msra.mxu0 0.0
        %2200 = vmatpush.msra.mxu0 0.0
        %2201 = vmatpush.msra.mxu0 %v2119
        %2202 = vmatpush.msra.mxu0 %v2116
        %2203 = vmatpush.msra.mxu0 %v2113
        %2204 = vmatpush.msra.mxu0 %v2110
        %2205 = vmatmul.f32.gmra.mxu0 %v2127
        %v2206 = vpop.f32.mrf.mxu0
        %v2207 = vadd.f32 %v2187, %v2206
        %2208 = vdwg.mxu0
        %2209 = vmatpush.msra.mxu0 %v2108
        %2210 = vmatpush.msra.mxu0 %v2105
        %2211 = vmatpush.msra.mxu0 %v2102
        %2212 = vmatpush.msra.mxu0 %v2099
        %2213 = vmatpush.msra.mxu0 %v2096
        %2214 = vmatpush.msra.mxu0 %v2093
        %2215 = vmatpush.msra.mxu0 %v2090
        %2216 = vmatpush.msra.mxu0 %v2087
        %2217 = vmatpush.msra.mxu0 %v2084
        %2218 = vmatpush.msra.mxu0 %v2081
        %2219 = vmatpush.msra.mxu0 %v2078
        %2220 = vmatpush.msra.mxu0 %v2075
        %2221 = vmatpush.msra.mxu0 %v2072
        %2222 = vmatpush.msra.mxu0 %v2069
        %2223 = vmatpush.msra.mxu0 %v2066
        %2224 = vmatpush.msra.mxu0 %v2063
        %2225 = vmatmul.f32.gmra.mxu0 %v2123
        %v2226 = vpop.f32.mrf.mxu0
        %v2227 = vadd.f32 0.0, %v2226
        %2228 = vdwg.mxu0
        %2229 = vmatpush.msra.mxu0 0.0
        %2230 = vmatpush.msra.mxu0 0.0
        %2231 = vmatpush.msra.mxu0 0.0
        %2232 = vmatpush.msra.mxu0 0.0
        %2233 = vmatpush.msra.mxu0 0.0
        %2234 = vmatpush.msra.mxu0 0.0
        %2235 = vmatpush.msra.mxu0 0.0
        %2236 = vmatpush.msra.mxu0 0.0
        %2237 = vmatpush.msra.mxu0 0.0
        %2238 = vmatpush.msra.mxu0 0.0
        %2239 = vmatpush.msra.mxu0 0.0
        %2240 = vmatpush.msra.mxu0 0.0
        %2241 = vmatpush.msra.mxu0 %v2120
        %2242 = vmatpush.msra.mxu0 %v2117
        %2243 = vmatpush.msra.mxu0 %v2114
        %2244 = vmatpush.msra.mxu0 %v2111
        %2245 = vmatmul.f32.gmra.mxu0 %v2127
        %v2246 = vpop.f32.mrf.mxu0
        %v2247 = vadd.f32 %v2227, %v2246
        %2248 = vdwg.mxu0
        %v2249 = vsel %vm2126, %v1999, 0
        %2251 = vmatpush.msra.mxu0 %v2045
        %2252 = vmatpush.msra.mxu0 %v2042
        %2253 = vmatpush.msra.mxu0 %v2039
        %2254 = vmatpush.msra.mxu0 %v2036
        %2255 = vmatpush.msra.mxu0 %v2033
        %2256 = vmatpush.msra.mxu0 %v2030
        %2257 = vmatpush.msra.mxu0 %v2027
        %2258 = vmatpush.msra.mxu0 %v2024
        %2259 = vmatpush.msra.mxu0 %v2021
        %2260 = vmatpush.msra.mxu0 %v2018
        %2261 = vmatpush.msra.mxu0 %v2015
        %2262 = vmatpush.msra.mxu0 %v2012
        %2263 = vmatpush.msra.mxu0 %v2009
        %2264 = vmatpush.msra.mxu0 %v2006
        %2265 = vmatpush.msra.mxu0 %v2003
        %2266 = vmatpush.msra.mxu0 %v2000
        %2267 = vmatmul.f32.gmra.mxu0 %v1998
        %v2268 = vpop.f32.mrf.mxu0
        %v2269 = vadd.f32 %v2167, %v2268
        %2270 = vdwg.mxu0
        %2271 = vmatpush.msra.mxu0 0.0
        %2272 = vmatpush.msra.mxu0 0.0
        %2273 = vmatpush.msra.mxu0 0.0
        %2274 = vmatpush.msra.mxu0 0.0
        %2275 = vmatpush.msra.mxu0 0.0
        %2276 = vmatpush.msra.mxu0 0.0
        %2277 = vmatpush.msra.mxu0 0.0
        %2278 = vmatpush.msra.mxu0 0.0
        %2279 = vmatpush.msra.mxu0 0.0
        %2280 = vmatpush.msra.mxu0 0.0
        %2281 = vmatpush.msra.mxu0 0.0
        %2282 = vmatpush.msra.mxu0 0.0
        %2283 = vmatpush.msra.mxu0 %v2057
        %2284 = vmatpush.msra.mxu0 %v2054
        %2285 = vmatpush.msra.mxu0 %v2051
        %2286 = vmatpush.msra.mxu0 %v2048
        %2287 = vmatmul.f32.gmra.mxu0 %v2249
        %v2288 = vpop.f32.mrf.mxu0
        %v2289 = vadd.f32 %v2269, %v2288
        %2290 = vdwg.mxu0
        %2291 = vmatpush.msra.mxu0 %v2046
        %2292 = vmatpush.msra.mxu0 %v2043
        %2293 = vmatpush.msra.mxu0 %v2040
        %2294 = vmatpush.msra.mxu0 %v2037
        %2295 = vmatpush.msra.mxu0 %v2034
        %2296 = vmatpush.msra.mxu0 %v2031
        %2297 = vmatpush.msra.mxu0 %v2028
        %2298 = vmatpush.msra.mxu0 %v2025
        %2299 = vmatpush.msra.mxu0 %v2022
        %2300 = vmatpush.msra.mxu0 %v2019
        %2301 = vmatpush.msra.mxu0 %v2016
        %2302 = vmatpush.msra.mxu0 %v2013
        %2303 = vmatpush.msra.mxu0 %v2010
        %2304 = vmatpush.msra.mxu0 %v2007
        %2305 = vmatpush.msra.mxu0 %v2004
        %2306 = vmatpush.msra.mxu0 %v2001
        %2307 = vmatmul.f32.gmra.mxu0 %v1998
        %v2308 = vpop.f32.mrf.mxu0
        %v2309 = vadd.f32 %v2207, %v2308
        %2310 = vdwg.mxu0
        %2311 = vmatpush.msra.mxu0 0.0
        %2312 = vmatpush.msra.mxu0 0.0
        %2313 = vmatpush.msra.mxu0 0.0
        %2314 = vmatpush.msra.mxu0 0.0
        %2315 = vmatpush.msra.mxu0 0.0
        %2316 = vmatpush.msra.mxu0 0.0
        %2317 = vmatpush.msra.mxu0 0.0
        %2318 = vmatpush.msra.mxu0 0.0
        %2319 = vmatpush.msra.mxu0 0.0
        %2320 = vmatpush.msra.mxu0 0.0
        %2321 = vmatpush.msra.mxu0 0.0
        %2322 = vmatpush.msra.mxu0 0.0
        %2323 = vmatpush.msra.mxu0 %v2058
        %2324 = vmatpush.msra.mxu0 %v2055
        %2325 = vmatpush.msra.mxu0 %v2052
        %2326 = vmatpush.msra.mxu0 %v2049
        %2327 = vmatmul.f32.gmra.mxu0 %v2249
        %v2328 = vpop.f32.mrf.mxu0
        %v2329 = vadd.f32 %v2309, %v2328
        %2330 = vdwg.mxu0
        %2331 = vmatpush.msra.mxu0 %v2047
        %2332 = vmatpush.msra.mxu0 %v2044
        %2333 = vmatpush.msra.mxu0 %v2041
        %2334 = vmatpush.msra.mxu0 %v2038
        %2335 = vmatpush.msra.mxu0 %v2035
        %2336 = vmatpush.msra.mxu0 %v2032
        %2337 = vmatpush.msra.mxu0 %v2029
        %2338 = vmatpush.msra.mxu0 %v2026
        %2339 = vmatpush.msra.mxu0 %v2023
        %2340 = vmatpush.msra.mxu0 %v2020
        %2341 = vmatpush.msra.mxu0 %v2017
        %2342 = vmatpush.msra.mxu0 %v2014
        %2343 = vmatpush.msra.mxu0 %v2011
        %2344 = vmatpush.msra.mxu0 %v2008
        %2345 = vmatpush.msra.mxu0 %v2005
        %2346 = vmatpush.msra.mxu0 %v2002
        %2347 = vmatmul.f32.gmra.mxu0 %v1998
        %v2348 = vpop.f32.mrf.mxu0
        %v2349 = vadd.f32 %v2247, %v2348
        %2350 = vdwg.mxu0
        %2351 = vmatpush.msra.mxu0 0.0
        %2352 = vmatpush.msra.mxu0 0.0
        %2353 = vmatpush.msra.mxu0 0.0
        %2354 = vmatpush.msra.mxu0 0.0
        %2355 = vmatpush.msra.mxu0 0.0
        %2356 = vmatpush.msra.mxu0 0.0
        %2357 = vmatpush.msra.mxu0 0.0
        %2358 = vmatpush.msra.mxu0 0.0
        %2359 = vmatpush.msra.mxu0 0.0
        %2360 = vmatpush.msra.mxu0 0.0
        %2361 = vmatpush.msra.mxu0 0.0
        %2362 = vmatpush.msra.mxu0 0.0
        %2363 = vmatpush.msra.mxu0 %v2059
        %2364 = vmatpush.msra.mxu0 %v2056
        %2365 = vmatpush.msra.mxu0 %v2053
        %2366 = vmatpush.msra.mxu0 %v2050
        %2367 = vmatmul.f32.gmra.mxu0 %v2249
        %v2368 = vpop.f32.mrf.mxu0
        %v2369 = vadd.f32 %v2349, %v2368
        %2370 = vdwg.mxu0
        %s2371 = scalar_lea.vmem %s9, 960
        %v2372 = vld [vmem:[%s2371] sm:$0xff]
        %v2373 = vld [vmem:[%s2371 + $0x8] sm:$0xff]
        %v2374 = vld [vmem:[%s2371 + $0x10] sm:$0xff]
        %v2375 = vld [vmem:[%s2371 + $0x18] sm:$0xff]
        %v2376 = vld [vmem:[%s2371 + $0x20] sm:$0xff]
        %v2377 = vld [vmem:[%s2371 + $0x28] sm:$0xff]
        %v2378 = vld [vmem:[%s2371 + $0x30] sm:$0xff]
        %v2379 = vld [vmem:[%s2371 + $0x38] sm:$0xff]
        %v2380 = vld [vmem:[%s2371 + $0x40] sm:$0xff]
        %v2381 = vld [vmem:[%s2371 + $0x48] sm:$0xff]
        %v2382 = vld [vmem:[%s2371 + $0x50] sm:$0xff]
        %v2383 = vld [vmem:[%s2371 + $0x58] sm:$0xff]
        %v2384 = vld [vmem:[%s2371 + $0x60] sm:$0xff]
        %v2385 = vld [vmem:[%s2371 + $0x68] sm:$0xff]
        %v2386 = vld [vmem:[%s2371 + $0x70] sm:$0xff]
        %v2387 = vld [vmem:[%s2371 + $0x78] sm:$0xff]
        %v2388 = vld [vmem:[%s2371 + $0x80] sm:$0xff]
        %v2389 = vld [vmem:[%s2371 + $0x88] sm:$0xff]
        %v2390 = vld [vmem:[%s2371 + $0x90] sm:$0xff]
        %v2391 = vld [vmem:[%s2371 + $0x98] sm:$0xff]
        %v2392 = vld [vmem:[%s2371 + $0xa0] sm:$0xff]
        %v2393 = vld [vmem:[%s2371 + $0xa8] sm:$0xff]
        %v2394 = vld [vmem:[%s2371 + $0xb0] sm:$0xff]
        %v2395 = vld [vmem:[%s2371 + $0xb8] sm:$0xff]
        %v2396 = vld [vmem:[%s2371 + $0xc0] sm:$0xff]
        %v2397 = vld [vmem:[%s2371 + $0xc8] sm:$0xff]
        %v2398 = vld [vmem:[%s2371 + $0xd0] sm:$0xff]
        %v2399 = vld [vmem:[%s2371 + $0xd8] sm:$0xff]
        %v2400 = vld [vmem:[%s2371 + $0xe0] sm:$0xff]
        %v2401 = vld [vmem:[%s2371 + $0xe8] sm:$0xff]
        %v2402 = vld [vmem:[%s2371 + $0xf0] sm:$0xff]
        %v2403 = vld [vmem:[%s2371 + $0xf8] sm:$0xff]
        %v2404 = vld [vmem:[%s2371 + $0x100] sm:$0xff]
        %v2405 = vld [vmem:[%s2371 + $0x108] sm:$0xff]
        %v2406 = vld [vmem:[%s2371 + $0x110] sm:$0xff]
        %v2407 = vld [vmem:[%s2371 + $0x118] sm:$0xff]
        %v2408 = vld [vmem:[%s2371 + $0x120] sm:$0xff]
        %v2409 = vld [vmem:[%s2371 + $0x128] sm:$0xff]
        %v2410 = vld [vmem:[%s2371 + $0x130] sm:$0xff]
        %v2411 = vld [vmem:[%s2371 + $0x138] sm:$0xff]
        %v2412 = vld [vmem:[%s2371 + $0x140] sm:$0xff]
        %v2413 = vld [vmem:[%s2371 + $0x148] sm:$0xff]
        %v2414 = vld [vmem:[%s2371 + $0x150] sm:$0xff]
        %v2415 = vld [vmem:[%s2371 + $0x158] sm:$0xff]
        %v2416 = vld [vmem:[%s2371 + $0x160] sm:$0xff]
        %v2417 = vld [vmem:[%s2371 + $0x168] sm:$0xff]
        %v2418 = vld [vmem:[%s2371 + $0x170] sm:$0xff]
        %v2419 = vld [vmem:[%s2371 + $0x178] sm:$0xff]
        %v2420 = vld [vmem:[%s2371 + $0x180] sm:$0xff]
        %v2421 = vld [vmem:[%s2371 + $0x188] sm:$0xff]
        %v2422 = vld [vmem:[%s2371 + $0x190] sm:$0xff]
        %v2423 = vld [vmem:[%s2371 + $0x198] sm:$0xff]
        %v2424 = vld [vmem:[%s2371 + $0x1a0] sm:$0xff]
        %v2425 = vld [vmem:[%s2371 + $0x1a8] sm:$0xff]
        %v2426 = vld [vmem:[%s2371 + $0x1b0] sm:$0xff]
        %v2427 = vld [vmem:[%s2371 + $0x1b8] sm:$0xff]
        %v2428 = vld [vmem:[%s2371 + $0x1c0] sm:$0xff]
        %v2429 = vld [vmem:[%s2371 + $0x1c8] sm:$0xff]
        %v2430 = vld [vmem:[%s2371 + $0x1d0] sm:$0xff]
        %v2431 = vld [vmem:[%s2371 + $0x1d8] sm:$0xff]
        %v2432 = vrot.slane %v1998, 2
        %v2433 = vrot.slane %v1999, 2
        %v2435 = vsel %vm2126, %v2433, 0
        %2437 = vmatpush.msra.mxu0 %v2417
        %2438 = vmatpush.msra.mxu0 %v2414
        %2439 = vmatpush.msra.mxu0 %v2411
        %2440 = vmatpush.msra.mxu0 %v2408
        %2441 = vmatpush.msra.mxu0 %v2405
        %2442 = vmatpush.msra.mxu0 %v2402
        %2443 = vmatpush.msra.mxu0 %v2399
        %2444 = vmatpush.msra.mxu0 %v2396
        %2445 = vmatpush.msra.mxu0 %v2393
        %2446 = vmatpush.msra.mxu0 %v2390
        %2447 = vmatpush.msra.mxu0 %v2387
        %2448 = vmatpush.msra.mxu0 %v2384
        %2449 = vmatpush.msra.mxu0 %v2381
        %2450 = vmatpush.msra.mxu0 %v2378
        %2451 = vmatpush.msra.mxu0 %v2375
        %2452 = vmatpush.msra.mxu0 %v2372
        %2453 = vmatmul.f32.gmra.mxu0 %v2432
        %v2454 = vpop.f32.mrf.mxu0
        %v2455 = vadd.f32 0.0, %v2454
        %2456 = vdwg.mxu0
        %2457 = vmatpush.msra.mxu0 0.0
        %2458 = vmatpush.msra.mxu0 0.0
        %2459 = vmatpush.msra.mxu0 0.0
        %2460 = vmatpush.msra.mxu0 0.0
        %2461 = vmatpush.msra.mxu0 0.0
        %2462 = vmatpush.msra.mxu0 0.0
        %2463 = vmatpush.msra.mxu0 0.0
        %2464 = vmatpush.msra.mxu0 0.0
        %2465 = vmatpush.msra.mxu0 0.0
        %2466 = vmatpush.msra.mxu0 0.0
        %2467 = vmatpush.msra.mxu0 0.0
        %2468 = vmatpush.msra.mxu0 0.0
        %2469 = vmatpush.msra.mxu0 %v2429
        %2470 = vmatpush.msra.mxu0 %v2426
        %2471 = vmatpush.msra.mxu0 %v2423
        %2472 = vmatpush.msra.mxu0 %v2420
        %2473 = vmatmul.f32.gmra.mxu0 %v2435
        %v2474 = vpop.f32.mrf.mxu0
        %v2475 = vadd.f32 %v2455, %v2474
        %2476 = vdwg.mxu0
        %2477 = vmatpush.msra.mxu0 %v2418
        %2478 = vmatpush.msra.mxu0 %v2415
        %2479 = vmatpush.msra.mxu0 %v2412
        %2480 = vmatpush.msra.mxu0 %v2409
        %2481 = vmatpush.msra.mxu0 %v2406
        %2482 = vmatpush.msra.mxu0 %v2403
        %2483 = vmatpush.msra.mxu0 %v2400
        %2484 = vmatpush.msra.mxu0 %v2397
        %2485 = vmatpush.msra.mxu0 %v2394
        %2486 = vmatpush.msra.mxu0 %v2391
        %2487 = vmatpush.msra.mxu0 %v2388
        %2488 = vmatpush.msra.mxu0 %v2385
        %2489 = vmatpush.msra.mxu0 %v2382
        %2490 = vmatpush.msra.mxu0 %v2379
        %2491 = vmatpush.msra.mxu0 %v2376
        %2492 = vmatpush.msra.mxu0 %v2373
        %2493 = vmatmul.f32.gmra.mxu0 %v2432
        %v2494 = vpop.f32.mrf.mxu0
        %v2495 = vadd.f32 0.0, %v2494
        %2496 = vdwg.mxu0
        %2497 = vmatpush.msra.mxu0 0.0
        %2498 = vmatpush.msra.mxu0 0.0
        %2499 = vmatpush.msra.mxu0 0.0
        %2500 = vmatpush.msra.mxu0 0.0
        %2501 = vmatpush.msra.mxu0 0.0
        %2502 = vmatpush.msra.mxu0 0.0
        %2503 = vmatpush.msra.mxu0 0.0
        %2504 = vmatpush.msra.mxu0 0.0
        %2505 = vmatpush.msra.mxu0 0.0
        %2506 = vmatpush.msra.mxu0 0.0
        %2507 = vmatpush.msra.mxu0 0.0
        %2508 = vmatpush.msra.mxu0 0.0
        %2509 = vmatpush.msra.mxu0 %v2430
        %2510 = vmatpush.msra.mxu0 %v2427
        %2511 = vmatpush.msra.mxu0 %v2424
        %2512 = vmatpush.msra.mxu0 %v2421
        %2513 = vmatmul.f32.gmra.mxu0 %v2435
        %v2514 = vpop.f32.mrf.mxu0
        %v2515 = vadd.f32 %v2495, %v2514
        %2516 = vdwg.mxu0
        %2517 = vmatpush.msra.mxu0 %v2419
        %2518 = vmatpush.msra.mxu0 %v2416
        %2519 = vmatpush.msra.mxu0 %v2413
        %2520 = vmatpush.msra.mxu0 %v2410
        %2521 = vmatpush.msra.mxu0 %v2407
        %2522 = vmatpush.msra.mxu0 %v2404
        %2523 = vmatpush.msra.mxu0 %v2401
        %2524 = vmatpush.msra.mxu0 %v2398
        %2525 = vmatpush.msra.mxu0 %v2395
        %2526 = vmatpush.msra.mxu0 %v2392
        %2527 = vmatpush.msra.mxu0 %v2389
        %2528 = vmatpush.msra.mxu0 %v2386
        %2529 = vmatpush.msra.mxu0 %v2383
        %2530 = vmatpush.msra.mxu0 %v2380
        %2531 = vmatpush.msra.mxu0 %v2377
        %2532 = vmatpush.msra.mxu0 %v2374
        %2533 = vmatmul.f32.gmra.mxu0 %v2432
        %v2534 = vpop.f32.mrf.mxu0
        %v2535 = vadd.f32 0.0, %v2534
        %2536 = vdwg.mxu0
        %2537 = vmatpush.msra.mxu0 0.0
        %2538 = vmatpush.msra.mxu0 0.0
        %2539 = vmatpush.msra.mxu0 0.0
        %2540 = vmatpush.msra.mxu0 0.0
        %2541 = vmatpush.msra.mxu0 0.0
        %2542 = vmatpush.msra.mxu0 0.0
        %2543 = vmatpush.msra.mxu0 0.0
        %2544 = vmatpush.msra.mxu0 0.0
        %2545 = vmatpush.msra.mxu0 0.0
        %2546 = vmatpush.msra.mxu0 0.0
        %2547 = vmatpush.msra.mxu0 0.0
        %2548 = vmatpush.msra.mxu0 0.0
        %2549 = vmatpush.msra.mxu0 %v2431
        %2550 = vmatpush.msra.mxu0 %v2428
        %2551 = vmatpush.msra.mxu0 %v2425
        %2552 = vmatpush.msra.mxu0 %v2422
        %2553 = vmatmul.f32.gmra.mxu0 %v2435
        %v2554 = vpop.f32.mrf.mxu0
        %v2555 = vadd.f32 %v2535, %v2554
        %2556 = vdwg.mxu0
        %v2557 = vadd.f32 %v2289, %v2475
        %v2558 = vadd.f32 %v2329, %v2515
        %v2559 = vadd.f32 %v2369, %v2555
        %v2560 = vld [vmem:[%s10] sm:$0x7]
        %v2562 = vperm.slane %v2560, 0
        %v2563 = vperm.slane %v2560, 1
        %v2564 = vperm.slane %v2560, 2
        %v2568 = vadd.f32 %v2557, %v2562
        %v2569 = vadd.f32 %v2558, %v2563
        %v2570 = vadd.f32 %v2559, %v2564
        %v2571 = vmax.f32 %v2568, 0.0
        %v2572 = vmax.f32 %v2569, 0.0
        %v2573 = vmax.f32 %v2570, 0.0
        %v2574 = vld [vmem:[%s11] sm:$0xff]
        %v2575 = vld [vmem:[%s11 + $0x8] sm:$0xff]
        %v2576 = vld [vmem:[%s11 + $0x10] sm:$0xff]
        %v2577 = vld [vmem:[%s11 + $0x18] sm:$0xff]
        %v2578 = vld [vmem:[%s11 + $0x20] sm:$0xff]
        %v2579 = vld [vmem:[%s11 + $0x28] sm:$0xff]
        %v2580 = vld [vmem:[%s11 + $0x30] sm:$0xff]
        %v2581 = vld [vmem:[%s11 + $0x38] sm:$0xff]
        %v2582 = vld [vmem:[%s11 + $0x40] sm:$0xff]
        %v2583 = vld [vmem:[%s11 + $0x48] sm:$0xff]
        %v2584 = vld [vmem:[%s11 + $0x50] sm:$0xff]
        %v2585 = vld [vmem:[%s11 + $0x58] sm:$0xff]
        %v2586 = vld [vmem:[%s11 + $0x60] sm:$0xff]
        %v2587 = vld [vmem:[%s11 + $0x68] sm:$0xff]
        %v2588 = vld [vmem:[%s11 + $0x70] sm:$0xff]
        %v2589 = vld [vmem:[%s11 + $0x78] sm:$0xff]
        %v2590 = vld [vmem:[%s11 + $0x80] sm:$0xff]
        %v2591 = vld [vmem:[%s11 + $0x88] sm:$0xff]
        %v2592 = vld [vmem:[%s11 + $0x90] sm:$0xff]
        %v2593 = vld [vmem:[%s11 + $0x98] sm:$0xff]
        %v2594 = vld [vmem:[%s11 + $0xa0] sm:$0xff]
        %v2595 = vld [vmem:[%s11 + $0xa8] sm:$0xff]
        %v2596 = vld [vmem:[%s11 + $0xb0] sm:$0xff]
        %v2597 = vld [vmem:[%s11 + $0xb8] sm:$0xff]
        %v2598 = vld [vmem:[%s11 + $0xc0] sm:$0xff]
        %v2599 = vld [vmem:[%s11 + $0xc8] sm:$0xff]
        %v2600 = vld [vmem:[%s11 + $0xd0] sm:$0xff]
        %v2601 = vld [vmem:[%s11 + $0xd8] sm:$0xff]
        %v2602 = vld [vmem:[%s11 + $0xe0] sm:$0xff]
        %v2603 = vld [vmem:[%s11 + $0xe8] sm:$0xff]
        %v2604 = vld [vmem:[%s11 + $0xf0] sm:$0xff]
        %v2605 = vld [vmem:[%s11 + $0xf8] sm:$0xff]
        %v2606 = vld [vmem:[%s11 + $0x100] sm:$0xff]
        %v2607 = vld [vmem:[%s11 + $0x108] sm:$0xff]
        %v2608 = vld [vmem:[%s11 + $0x110] sm:$0xff]
        %v2609 = vld [vmem:[%s11 + $0x118] sm:$0xff]
        %v2610 = vld [vmem:[%s11 + $0x120] sm:$0xff]
        %v2611 = vld [vmem:[%s11 + $0x128] sm:$0xff]
        %v2612 = vld [vmem:[%s11 + $0x130] sm:$0xff]
        %v2613 = vld [vmem:[%s11 + $0x138] sm:$0xff]
        %v2614 = vld [vmem:[%s11 + $0x140] sm:$0xff]
        %v2615 = vld [vmem:[%s11 + $0x148] sm:$0xff]
        %v2616 = vld [vmem:[%s11 + $0x150] sm:$0xff]
        %v2617 = vld [vmem:[%s11 + $0x158] sm:$0xff]
        %v2618 = vld [vmem:[%s11 + $0x160] sm:$0xff]
        %v2619 = vld [vmem:[%s11 + $0x168] sm:$0xff]
        %v2620 = vld [vmem:[%s11 + $0x170] sm:$0xff]
        %v2621 = vld [vmem:[%s11 + $0x178] sm:$0xff]
        %s2622 = scalar_lea.vmem %s11, 384
        %v2623 = vld [vmem:[%s2622] sm:$0xff]
        %v2624 = vld [vmem:[%s2622 + $0x8] sm:$0xff]
        %v2625 = vld [vmem:[%s2622 + $0x10] sm:$0xff]
        %v2626 = vld [vmem:[%s2622 + $0x18] sm:$0xff]
        %v2627 = vld [vmem:[%s2622 + $0x20] sm:$0xff]
        %v2628 = vld [vmem:[%s2622 + $0x28] sm:$0xff]
        %v2629 = vld [vmem:[%s2622 + $0x30] sm:$0xff]
        %v2630 = vld [vmem:[%s2622 + $0x38] sm:$0xff]
        %v2631 = vld [vmem:[%s2622 + $0x40] sm:$0xff]
        %v2632 = vld [vmem:[%s2622 + $0x48] sm:$0xff]
        %v2633 = vld [vmem:[%s2622 + $0x50] sm:$0xff]
        %v2634 = vld [vmem:[%s2622 + $0x58] sm:$0xff]
        %v2635 = vld [vmem:[%s2622 + $0x60] sm:$0xff]
        %v2636 = vld [vmem:[%s2622 + $0x68] sm:$0xff]
        %v2637 = vld [vmem:[%s2622 + $0x70] sm:$0xff]
        %v2638 = vld [vmem:[%s2622 + $0x78] sm:$0xff]
        %v2639 = vld [vmem:[%s2622 + $0x80] sm:$0xff]
        %v2640 = vld [vmem:[%s2622 + $0x88] sm:$0xff]
        %v2641 = vld [vmem:[%s2622 + $0x90] sm:$0xff]
        %v2642 = vld [vmem:[%s2622 + $0x98] sm:$0xff]
        %v2643 = vld [vmem:[%s2622 + $0xa0] sm:$0xff]
        %v2644 = vld [vmem:[%s2622 + $0xa8] sm:$0xff]
        %v2645 = vld [vmem:[%s2622 + $0xb0] sm:$0xff]
        %v2646 = vld [vmem:[%s2622 + $0xb8] sm:$0xff]
        %v2647 = vld [vmem:[%s2622 + $0xc0] sm:$0xff]
        %v2648 = vld [vmem:[%s2622 + $0xc8] sm:$0xff]
        %v2649 = vld [vmem:[%s2622 + $0xd0] sm:$0xff]
        %v2650 = vld [vmem:[%s2622 + $0xd8] sm:$0xff]
        %v2651 = vld [vmem:[%s2622 + $0xe0] sm:$0xff]
        %v2652 = vld [vmem:[%s2622 + $0xe8] sm:$0xff]
        %v2653 = vld [vmem:[%s2622 + $0xf0] sm:$0xff]
        %v2654 = vld [vmem:[%s2622 + $0xf8] sm:$0xff]
        %v2655 = vld [vmem:[%s2622 + $0x100] sm:$0xff]
        %v2656 = vld [vmem:[%s2622 + $0x108] sm:$0xff]
        %v2657 = vld [vmem:[%s2622 + $0x110] sm:$0xff]
        %v2658 = vld [vmem:[%s2622 + $0x118] sm:$0xff]
        %v2659 = vld [vmem:[%s2622 + $0x120] sm:$0xff]
        %v2660 = vld [vmem:[%s2622 + $0x128] sm:$0xff]
        %v2661 = vld [vmem:[%s2622 + $0x130] sm:$0xff]
        %v2662 = vld [vmem:[%s2622 + $0x138] sm:$0xff]
        %v2663 = vld [vmem:[%s2622 + $0x140] sm:$0xff]
        %v2664 = vld [vmem:[%s2622 + $0x148] sm:$0xff]
        %v2665 = vld [vmem:[%s2622 + $0x150] sm:$0xff]
        %v2666 = vld [vmem:[%s2622 + $0x158] sm:$0xff]
        %v2667 = vld [vmem:[%s2622 + $0x160] sm:$0xff]
        %v2668 = vld [vmem:[%s2622 + $0x168] sm:$0xff]
        %v2669 = vld [vmem:[%s2622 + $0x170] sm:$0xff]
        %v2670 = vld [vmem:[%s2622 + $0x178] sm:$0xff]
        %v2674 = vrot.slane %v2571, 1
        %v2675 = vrot.slane %v2572, 1
        %v2676 = vrot.slane %v2573, 1
        %2680 = vmatpush.msra.mxu0 %v2638
        %2681 = vmatpush.msra.mxu0 %v2637
        %2682 = vmatpush.msra.mxu0 %v2636
        %2683 = vmatpush.msra.mxu0 %v2635
        %2684 = vmatpush.msra.mxu0 %v2634
        %2685 = vmatpush.msra.mxu0 %v2633
        %2686 = vmatpush.msra.mxu0 %v2632
        %2687 = vmatpush.msra.mxu0 %v2631
        %2688 = vmatpush.msra.mxu0 %v2630
        %2689 = vmatpush.msra.mxu0 %v2629
        %2690 = vmatpush.msra.mxu0 %v2628
        %2691 = vmatpush.msra.mxu0 %v2627
        %2692 = vmatpush.msra.mxu0 %v2626
        %2693 = vmatpush.msra.mxu0 %v2625
        %2694 = vmatpush.msra.mxu0 %v2624
        %2695 = vmatpush.msra.mxu0 %v2623
        %2696 = vmatmul.f32.gmra.mxu0 %v2674
        %v2697 = vpop.f32.mrf.mxu0
        %v2698 = vadd.f32 0.0, %v2697
        %2699 = vdwg.mxu0
        %2700 = vmatpush.msra.mxu0 %v2654
        %2701 = vmatpush.msra.mxu0 %v2653
        %2702 = vmatpush.msra.mxu0 %v2652
        %2703 = vmatpush.msra.mxu0 %v2651
        %2704 = vmatpush.msra.mxu0 %v2650
        %2705 = vmatpush.msra.mxu0 %v2649
        %2706 = vmatpush.msra.mxu0 %v2648
        %2707 = vmatpush.msra.mxu0 %v2647
        %2708 = vmatpush.msra.mxu0 %v2646
        %2709 = vmatpush.msra.mxu0 %v2645
        %2710 = vmatpush.msra.mxu0 %v2644
        %2711 = vmatpush.msra.mxu0 %v2643
        %2712 = vmatpush.msra.mxu0 %v2642
        %2713 = vmatpush.msra.mxu0 %v2641
        %2714 = vmatpush.msra.mxu0 %v2640
        %2715 = vmatpush.msra.mxu0 %v2639
        %2716 = vmatmul.f32.gmra.mxu0 %v2675
        %v2717 = vpop.f32.mrf.mxu0
        %v2718 = vadd.f32 %v2698, %v2717
        %2719 = vdwg.mxu0
        %2720 = vmatpush.msra.mxu0 %v2670
        %2721 = vmatpush.msra.mxu0 %v2669
        %2722 = vmatpush.msra.mxu0 %v2668
        %2723 = vmatpush.msra.mxu0 %v2667
        %2724 = vmatpush.msra.mxu0 %v2666
        %2725 = vmatpush.msra.mxu0 %v2665
        %2726 = vmatpush.msra.mxu0 %v2664
        %2727 = vmatpush.msra.mxu0 %v2663
        %2728 = vmatpush.msra.mxu0 %v2662
        %2729 = vmatpush.msra.mxu0 %v2661
        %2730 = vmatpush.msra.mxu0 %v2660
        %2731 = vmatpush.msra.mxu0 %v2659
        %2732 = vmatpush.msra.mxu0 %v2658
        %2733 = vmatpush.msra.mxu0 %v2657
        %2734 = vmatpush.msra.mxu0 %v2656
        %2735 = vmatpush.msra.mxu0 %v2655
        %2736 = vmatmul.f32.gmra.mxu0 %v2676
        %v2737 = vpop.f32.mrf.mxu0
        %v2738 = vadd.f32 %v2718, %v2737
        %2739 = vdwg.mxu0
        %2740 = vmatpush.msra.mxu0 %v2589
        %2741 = vmatpush.msra.mxu0 %v2588
        %2742 = vmatpush.msra.mxu0 %v2587
        %2743 = vmatpush.msra.mxu0 %v2586
        %2744 = vmatpush.msra.mxu0 %v2585
        %2745 = vmatpush.msra.mxu0 %v2584
        %2746 = vmatpush.msra.mxu0 %v2583
        %2747 = vmatpush.msra.mxu0 %v2582
        %2748 = vmatpush.msra.mxu0 %v2581
        %2749 = vmatpush.msra.mxu0 %v2580
        %2750 = vmatpush.msra.mxu0 %v2579
        %2751 = vmatpush.msra.mxu0 %v2578
        %2752 = vmatpush.msra.mxu0 %v2577
        %2753 = vmatpush.msra.mxu0 %v2576
        %2754 = vmatpush.msra.mxu0 %v2575
        %2755 = vmatpush.msra.mxu0 %v2574
        %2756 = vmatmul.f32.gmra.mxu0 %v2571
        %v2757 = vpop.f32.mrf.mxu0
        %v2758 = vadd.f32 %v2738, %v2757
        %2759 = vdwg.mxu0
        %2760 = vmatpush.msra.mxu0 %v2605
        %2761 = vmatpush.msra.mxu0 %v2604
        %2762 = vmatpush.msra.mxu0 %v2603
        %2763 = vmatpush.msra.mxu0 %v2602
        %2764 = vmatpush.msra.mxu0 %v2601
        %2765 = vmatpush.msra.mxu0 %v2600
        %2766 = vmatpush.msra.mxu0 %v2599
        %2767 = vmatpush.msra.mxu0 %v2598
        %2768 = vmatpush.msra.mxu0 %v2597
        %2769 = vmatpush.msra.mxu0 %v2596
        %2770 = vmatpush.msra.mxu0 %v2595
        %2771 = vmatpush.msra.mxu0 %v2594
        %2772 = vmatpush.msra.mxu0 %v2593
        %2773 = vmatpush.msra.mxu0 %v2592
        %2774 = vmatpush.msra.mxu0 %v2591
        %2775 = vmatpush.msra.mxu0 %v2590
        %2776 = vmatmul.f32.gmra.mxu0 %v2572
        %v2777 = vpop.f32.mrf.mxu0
        %v2778 = vadd.f32 %v2758, %v2777
        %2779 = vdwg.mxu0
        %2780 = vmatpush.msra.mxu0 %v2621
        %2781 = vmatpush.msra.mxu0 %v2620
        %2782 = vmatpush.msra.mxu0 %v2619
        %2783 = vmatpush.msra.mxu0 %v2618
        %2784 = vmatpush.msra.mxu0 %v2617
        %2785 = vmatpush.msra.mxu0 %v2616
        %2786 = vmatpush.msra.mxu0 %v2615
        %2787 = vmatpush.msra.mxu0 %v2614
        %2788 = vmatpush.msra.mxu0 %v2613
        %2789 = vmatpush.msra.mxu0 %v2612
        %2790 = vmatpush.msra.mxu0 %v2611
        %2791 = vmatpush.msra.mxu0 %v2610
        %2792 = vmatpush.msra.mxu0 %v2609
        %2793 = vmatpush.msra.mxu0 %v2608
        %2794 = vmatpush.msra.mxu0 %v2607
        %2795 = vmatpush.msra.mxu0 %v2606
        %2796 = vmatmul.f32.gmra.mxu0 %v2573
        %v2797 = vpop.f32.mrf.mxu0
        %v2798 = vadd.f32 %v2778, %v2797
        %2799 = vdwg.mxu0
        %s2800 = scalar_lea.vmem %s11, 768
        %v2801 = vld [vmem:[%s2800] sm:$0xff]
        %v2802 = vld [vmem:[%s2800 + $0x8] sm:$0xff]
        %v2803 = vld [vmem:[%s2800 + $0x10] sm:$0xff]
        %v2804 = vld [vmem:[%s2800 + $0x18] sm:$0xff]
        %v2805 = vld [vmem:[%s2800 + $0x20] sm:$0xff]
        %v2806 = vld [vmem:[%s2800 + $0x28] sm:$0xff]
        %v2807 = vld [vmem:[%s2800 + $0x30] sm:$0xff]
        %v2808 = vld [vmem:[%s2800 + $0x38] sm:$0xff]
        %v2809 = vld [vmem:[%s2800 + $0x40] sm:$0xff]
        %v2810 = vld [vmem:[%s2800 + $0x48] sm:$0xff]
        %v2811 = vld [vmem:[%s2800 + $0x50] sm:$0xff]
        %v2812 = vld [vmem:[%s2800 + $0x58] sm:$0xff]
        %v2813 = vld [vmem:[%s2800 + $0x60] sm:$0xff]
        %v2814 = vld [vmem:[%s2800 + $0x68] sm:$0xff]
        %v2815 = vld [vmem:[%s2800 + $0x70] sm:$0xff]
        %v2816 = vld [vmem:[%s2800 + $0x78] sm:$0xff]
        %v2817 = vld [vmem:[%s2800 + $0x80] sm:$0xff]
        %v2818 = vld [vmem:[%s2800 + $0x88] sm:$0xff]
        %v2819 = vld [vmem:[%s2800 + $0x90] sm:$0xff]
        %v2820 = vld [vmem:[%s2800 + $0x98] sm:$0xff]
        %v2821 = vld [vmem:[%s2800 + $0xa0] sm:$0xff]
        %v2822 = vld [vmem:[%s2800 + $0xa8] sm:$0xff]
        %v2823 = vld [vmem:[%s2800 + $0xb0] sm:$0xff]
        %v2824 = vld [vmem:[%s2800 + $0xb8] sm:$0xff]
        %v2825 = vld [vmem:[%s2800 + $0xc0] sm:$0xff]
        %v2826 = vld [vmem:[%s2800 + $0xc8] sm:$0xff]
        %v2827 = vld [vmem:[%s2800 + $0xd0] sm:$0xff]
        %v2828 = vld [vmem:[%s2800 + $0xd8] sm:$0xff]
        %v2829 = vld [vmem:[%s2800 + $0xe0] sm:$0xff]
        %v2830 = vld [vmem:[%s2800 + $0xe8] sm:$0xff]
        %v2831 = vld [vmem:[%s2800 + $0xf0] sm:$0xff]
        %v2832 = vld [vmem:[%s2800 + $0xf8] sm:$0xff]
        %v2833 = vld [vmem:[%s2800 + $0x100] sm:$0xff]
        %v2834 = vld [vmem:[%s2800 + $0x108] sm:$0xff]
        %v2835 = vld [vmem:[%s2800 + $0x110] sm:$0xff]
        %v2836 = vld [vmem:[%s2800 + $0x118] sm:$0xff]
        %v2837 = vld [vmem:[%s2800 + $0x120] sm:$0xff]
        %v2838 = vld [vmem:[%s2800 + $0x128] sm:$0xff]
        %v2839 = vld [vmem:[%s2800 + $0x130] sm:$0xff]
        %v2840 = vld [vmem:[%s2800 + $0x138] sm:$0xff]
        %v2841 = vld [vmem:[%s2800 + $0x140] sm:$0xff]
        %v2842 = vld [vmem:[%s2800 + $0x148] sm:$0xff]
        %v2843 = vld [vmem:[%s2800 + $0x150] sm:$0xff]
        %v2844 = vld [vmem:[%s2800 + $0x158] sm:$0xff]
        %v2845 = vld [vmem:[%s2800 + $0x160] sm:$0xff]
        %v2846 = vld [vmem:[%s2800 + $0x168] sm:$0xff]
        %v2847 = vld [vmem:[%s2800 + $0x170] sm:$0xff]
        %v2848 = vld [vmem:[%s2800 + $0x178] sm:$0xff]
        %v2849 = vrot.slane %v2571, 2
        %v2850 = vrot.slane %v2572, 2
        %v2851 = vrot.slane %v2573, 2
        %2855 = vmatpush.msra.mxu0 %v2816
        %2856 = vmatpush.msra.mxu0 %v2815
        %2857 = vmatpush.msra.mxu0 %v2814
        %2858 = vmatpush.msra.mxu0 %v2813
        %2859 = vmatpush.msra.mxu0 %v2812
        %2860 = vmatpush.msra.mxu0 %v2811
        %2861 = vmatpush.msra.mxu0 %v2810
        %2862 = vmatpush.msra.mxu0 %v2809
        %2863 = vmatpush.msra.mxu0 %v2808
        %2864 = vmatpush.msra.mxu0 %v2807
        %2865 = vmatpush.msra.mxu0 %v2806
        %2866 = vmatpush.msra.mxu0 %v2805
        %2867 = vmatpush.msra.mxu0 %v2804
        %2868 = vmatpush.msra.mxu0 %v2803
        %2869 = vmatpush.msra.mxu0 %v2802
        %2870 = vmatpush.msra.mxu0 %v2801
        %2871 = vmatmul.f32.gmra.mxu0 %v2849
        %v2872 = vpop.f32.mrf.mxu0
        %v2873 = vadd.f32 0.0, %v2872
        %2874 = vdwg.mxu0
        %2875 = vmatpush.msra.mxu0 %v2832
        %2876 = vmatpush.msra.mxu0 %v2831
        %2877 = vmatpush.msra.mxu0 %v2830
        %2878 = vmatpush.msra.mxu0 %v2829
        %2879 = vmatpush.msra.mxu0 %v2828
        %2880 = vmatpush.msra.mxu0 %v2827
        %2881 = vmatpush.msra.mxu0 %v2826
        %2882 = vmatpush.msra.mxu0 %v2825
        %2883 = vmatpush.msra.mxu0 %v2824
        %2884 = vmatpush.msra.mxu0 %v2823
        %2885 = vmatpush.msra.mxu0 %v2822
        %2886 = vmatpush.msra.mxu0 %v2821
        %2887 = vmatpush.msra.mxu0 %v2820
        %2888 = vmatpush.msra.mxu0 %v2819
        %2889 = vmatpush.msra.mxu0 %v2818
        %2890 = vmatpush.msra.mxu0 %v2817
        %2891 = vmatmul.f32.gmra.mxu0 %v2850
        %v2892 = vpop.f32.mrf.mxu0
        %v2893 = vadd.f32 %v2873, %v2892
        %2894 = vdwg.mxu0
        %2895 = vmatpush.msra.mxu0 %v2848
        %2896 = vmatpush.msra.mxu0 %v2847
        %2897 = vmatpush.msra.mxu0 %v2846
        %2898 = vmatpush.msra.mxu0 %v2845
        %2899 = vmatpush.msra.mxu0 %v2844
        %2900 = vmatpush.msra.mxu0 %v2843
        %2901 = vmatpush.msra.mxu0 %v2842
        %2902 = vmatpush.msra.mxu0 %v2841
        %2903 = vmatpush.msra.mxu0 %v2840
        %2904 = vmatpush.msra.mxu0 %v2839
        %2905 = vmatpush.msra.mxu0 %v2838
        %2906 = vmatpush.msra.mxu0 %v2837
        %2907 = vmatpush.msra.mxu0 %v2836
        %2908 = vmatpush.msra.mxu0 %v2835
        %2909 = vmatpush.msra.mxu0 %v2834
        %2910 = vmatpush.msra.mxu0 %v2833
        %2911 = vmatmul.f32.gmra.mxu0 %v2851
        %v2912 = vpop.f32.mrf.mxu0
        %v2913 = vadd.f32 %v2893, %v2912
        %2914 = vdwg.mxu0
        %v2915 = vadd.f32 %v2798, %v2913
        %v2916 = vld [vmem:[%s12] sm:$0x1]
        %v2917 = vadd.f32 %v2915, %v2916
        %v2918 = vmax.f32 %v2917, 0.0
        %v2919 = vld [vmem:[%s13] sm:$0xff]
        %v2920 = vld [vmem:[%s13 + $0x8] sm:$0xff]
        %v2921 = vld [vmem:[%s13 + $0x10] sm:$0xff]
        %v2922 = vld [vmem:[%s13 + $0x18] sm:$0xff]
        %v2923 = vld [vmem:[%s13 + $0x20] sm:$0xff]
        %v2924 = vld [vmem:[%s13 + $0x28] sm:$0xff]
        %v2925 = vld [vmem:[%s13 + $0x30] sm:$0xff]
        %v2926 = vld [vmem:[%s13 + $0x38] sm:$0xff]
        %v2927 = vld [vmem:[%s14] sm:$0x1]
        %vm2928 = vcmask 523264
        %v2930 = vsel %vm2928, %v2918, 0
        %2932 = vmatpush.msra.mxu0 0.0
        %2933 = vmatpush.msra.mxu0 0.0
        %2934 = vmatpush.msra.mxu0 0.0
        %2935 = vmatpush.msra.mxu0 0.0
        %2936 = vmatpush.msra.mxu0 0.0
        %2937 = vmatpush.msra.mxu0 0.0
        %2938 = vmatpush.msra.mxu0 0.0
        %2939 = vmatpush.msra.mxu0 0.0
        %2940 = vmatpush.msra.mxu0 %v2926
        %2941 = vmatpush.msra.mxu0 %v2925
        %2942 = vmatpush.msra.mxu0 %v2924
        %2943 = vmatpush.msra.mxu0 %v2923
        %2944 = vmatpush.msra.mxu0 %v2922
        %2945 = vmatpush.msra.mxu0 %v2921
        %2946 = vmatpush.msra.mxu0 %v2920
        %2947 = vmatpush.msra.mxu0 %v2919
        %2948 = vmatmul.f32.gmra.mxu0 %v2930
        %v2949 = vpop.f32.mrf.mxu0
        %v2950 = vadd.f32 %v2927, %v2949
        %2951 = vdwg.mxu0
        %vm2952 = vcmask 73728
        %v2953 = vsel %vm2952, %v2950, -inf
        %2954 = vmax.xlane.f32.xlu0 %v2953
        %v2955 = vpop.xlane.xlu0 %2954
        %v2956 = vsub.f32 %v2950, %v2955
        %v2957 = vmul.f32 %v2956, 1.442695
        %v2958 = vpow.pop %v2957
        %v2959 = vsel %vm2952, %v2958, 0.0
        %2960 = vadd.xlane.f32.xlu0 %v2959
        %v2961 = vpop.xlane.xlu0 %2960
        %v2962 = vlog2.pop %v2961
        %v2963 = vmul.f32 %v2962, 0.6931472
        %v2964 = vsub.f32 %v2956, %v2963
        %2965 = vst.msk [vmem:[%s486] sm:$0x1] %vm2952, %v2964
        %s2966 = sand.u32 %s357, 1
        %s2967 = scalar_lea.sflag [#allocation3], %s2966
        %s2968 = sand.u32 %s357, 1
        %s2969 = scalar_lea.vmem [#allocation2], %s2968
        // Predicated region
        $region81: #{cnn_forward.1} parent=79 // pred_check
          %p2970 = pneg %p367
        $region82: #{cnn_forward.1} parent=79 // pred_check_branch
          %2972 = sbr.rel (%p2970) target = $region84
        $region83: #{cnn_forward.1} parent=79 // pred_region
          %2974 = vsyncadd %s2967, 0
          %s2975 = scalar_lea.hbm %s15, %s29
          %s2977 = sshll.u32 %s2969, 4
          %s2978 = int_to_ptr.vmem [resolvable:$true] %s2977
          %s2979 = sshll.u32 %s2975, 4
          %s2980 = int_to_ptr.hbm [resolvable:$true] %s2979
          %2982 = dma.vmem_to_hbm [thread:$0]  %s2978, 16, %s2980, %s2967
        $region84: #{cnn_forward.1} parent=79 // pred_fallthru
          _
      $region80: #{cnn_forward.1} parent=5 // pred_fallthru
        _
      %p2983 = scmp.le.s32.totalorder 2, %s24
      // Predicated region
      $region85: #{cnn_forward.1} parent=5 // pred_check
        %p2984 = pneg %p2983
      $region86: #{cnn_forward.1} parent=5 // pred_check_branch
        %2986 = sbr.rel (%p2984) target = $region88
      $region87: #{cnn_forward.1} parent=5 // pred_region
        %s2987 = ssub.s32 %s24, 2
        // Predicated region
        $region89: #{cnn_forward.1} parent=87 // pred_check
          %p2988 = pneg %p373
        $region90: #{cnn_forward.1} parent=87 // pred_check_branch
          %2990 = sbr.rel (%p2988) target = $region92
        $region91: #{cnn_forward.1} parent=87 // pred_region
          %s2991 = sand.u32 %s358, 1
          %s2992 = scalar_lea.sflag [#allocation3], %s2991
          %s2993 = sand.u32 %s358, 1
          %s2994 = scalar_lea.vmem [#allocation2], %s2993
          %2996 = dma.done %s2992, 16
        $region92: #{cnn_forward.1} parent=87 // pred_fallthru
          _
      $region88: #{cnn_forward.1} parent=5 // pred_fallthru
        _
    $region6: #{cnn_forward.1} parent=1 // loop_footer
      %s28 = sadd.s32 1, %s24
    $region7: #{cnn_forward.1} parent=1 // loop_footer_branch
      %23 = sbr.rel target = $region3
    $region8: #{cnn_forward.1} parent=1 // loop_exit
      _
    %2997 = vsyncpa [#allocation3], 1
    %s2998 = scalar_lea.sflag [#allocation3], 1
    %2999 = vsyncpa %s2998, 1

</llo_original>
